<compile_context>
chip_gen: v7x
topology: tpu7x:2x2x1
jax: 0.10.0
libtpu: 0.0.40
codegen_flags: <defaults>
</compile_context>

<pallas_src>
import functools

import jax
import jax.numpy as jnp
from jax import lax
from jax.experimental import pallas as pl
from jax.experimental.pallas import tpu as pltpu


MXU_DTYPE = jnp.bfloat16    # MXU operand dtype (accumulation is always f32)
TB_MAX = 128                # max images per grid step
TB_MIN = 16                 # bf16 (16,128) sublane alignment for row slices


def _round_up(x, m):
    return -(-x // m) * m


def _choose_tb(batch):
    """Images per grid step: big enough to fill MXU rows and amortize per-step
    overhead, small enough that large batches give >= 2 grid steps (so the
    'parallel' axis can shard across v7x's two TensorCores), and a multiple of
    16 so bf16 sublane packing of in-kernel row slices stays aligned."""
    tb = _round_up(-(-batch // 2), TB_MIN)      # ceil(batch/2), 16-aligned
    return max(TB_MIN, min(TB_MAX, tb))


# ----------------------------------------------------------------------------
# Fused kernel: the whole LeNet-5 forward for one block of `tb` images.
# ----------------------------------------------------------------------------
def _lenet5_kernel(xp_ref, rhs1_ref, rhs2_ref, w3_ref, w4_ref,
                   b1_ref, b2_ref, b3_ref, b4_ref, out_ref, *, tb):
    """Row/lane layouts (all slices are static, stride-1, 16-row aligned):

      xp_ref : (8*tb, 128)  row = q*tb + b,  lane = s*32 + w   (H_pad = 4*q + s)
      act1[P]: (7*tb, 84)   row = h*tb + b  (pooled row i1 = 2*h + P),
                            lane = j1*6 + c
      act2   : (5*tb, 80)   row = i2*tb + b, lane = j2*16 + c2
    """
    r1 = 7 * tb
    r2 = 5 * tb
    xp = xp_ref[...]                                            # (8*tb, 128)

    # ---------------- conv1 + bias + relu + 2x2 max-pool --------------------
    # Conv row I = 2*(2*h + P) + di reads x_pad rows H = 4*h + (2P + di + ki).
    # The phase s = H mod 4 lives in the lane dim, so for each (P, di) the five
    # height taps collapse into TWO K=128 matmuls (row offsets a = 0, 1)
    # against pre-built banded weights rhs1[(P*2 + di)*2 + a].
    def conv1_plane(P, di):
        acc = None
        for a in range(2):
            part = jnp.dot(xp[a * tb:a * tb + r1, :],
                           rhs1_ref[(P * 2 + di) * 2 + a],
                           preferred_element_type=jnp.float32)  # (r1, 168)
            acc = part if acc is None else acc + part
        return acc

    act1 = []
    for P in range(2):
        m = jnp.maximum(conv1_plane(P, 0), conv1_plane(P, 1))   # pool over H
        m = jnp.maximum(m[:, 0:84], m[:, 84:168])               # pool over W
        act1.append(jnp.maximum(m + b1_ref[...], 0.0).astype(MXU_DTYPE))

    # ---------------- conv2 + bias + relu + 2x2 max-pool --------------------
    # Needs act1 at i1 = 2*i2 + di + ki = 2*(i2 + a) + p  ->  plane p, offset a.
    def conv2_all(di):
        acc = None
        for ki in range(5):
            a, p = (di + ki) // 2, (di + ki) % 2
            part = jnp.dot(act1[p][a * tb:a * tb + r2, :], rhs2_ref[ki],
                           preferred_element_type=jnp.float32)  # (r2, 160)
            acc = part if acc is None else acc + part
        return acc

    m2 = jnp.maximum(conv2_all(0), conv2_all(1))                # pool over H
    m2 = jnp.maximum(m2[:, 0:80], m2[:, 80:160])                # pool over W
    act2 = jnp.maximum(m2 + b2_ref[...], 0.0).astype(MXU_DTYPE)  # (r2, 80)

    # ---------------- fc3 + relu (flatten == row-block accumulation) --------
    acc = None
    for i2 in range(5):
        part = jnp.dot(act2[i2 * tb:(i2 + 1) * tb, :], w3_ref[i2],
                       preferred_element_type=jnp.float32)      # (tb, 120)
        acc = part if acc is None else acc + part
    h3 = jnp.maximum(acc + b3_ref[...], 0.0).astype(MXU_DTYPE)

    # ---------------- fc4 + softmax ------------------------------------------
    y = jnp.dot(h3, w4_ref[...], preferred_element_type=jnp.float32) + b4_ref[...]
    y = y - jnp.max(y, axis=-1, keepdims=True)
    e = jnp.exp(y)
    out_ref[...] = e * pl.reciprocal(jnp.sum(e, axis=-1, keepdims=True),
                                     approx=True)


# ----------------------------------------------------------------------------
# Boundary / weight preparation (tiny, plain-XLA, runs inside the same jit).
# ----------------------------------------------------------------------------
def _prep_input(x, tb):
    """(B,1,28,28) -> (nblk*8*tb, 128): pad H/W to 32, lane = (H%4)*32 + W,
    row = (H//4)*tb + b within each block of tb images (batch-minor rows), so
    every in-kernel row slice is static, stride-1 and 16-row aligned."""
    b = x.shape[0]
    b_pad = _round_up(b, tb)
    nblk = b_pad // tb
    xp = jnp.pad(x[:, 0], ((0, b_pad - b), (2, 2), (2, 2)))          # (b_pad,32,32)
    xp = xp.reshape(nblk, tb, 8, 128).transpose(0, 2, 1, 3)          # (blk,q,b,128)
    return xp.reshape(nblk * 8 * tb, 128).astype(MXU_DTYPE), nblk, b_pad


def _prep_params(params):
    """Build the banded conv RHS matrices (width taps, channel dims, the W-pool
    pair and -- for conv1 -- the H-tap phase folded into lane-dense MXU
    operands), permute fc3 weights to the kernel's flatten order, and pre-tile
    biases to the packed (spatial, channel) lane layouts."""
    w1, b1 = params["w1"], params["b1"]          # (6,1,5,5),  (6,)
    w2, b2 = params["w2"], params["b2"]          # (16,6,5,5), (16,)
    w3, b3 = params["w3"], params["b3"]          # (120,400),  (120,)
    w4, b4 = params["w4"], params["b4"]          # (10,120),   (10,)
    f32 = jnp.float32

    # Width one-hot: oh_w[kw, dj, j1, w] = (w == 2*j1 + dj + kw)
    kw = jnp.arange(5).reshape(5, 1, 1, 1)
    djw = jnp.arange(2).reshape(1, 2, 1, 1)
    j1w = jnp.arange(14).reshape(1, 1, 14, 1)
    wv = jnp.arange(32).reshape(1, 1, 1, 32)
    oh_w = (wv == 2 * j1w + djw + kw).astype(f32)                    # (5,2,14,32)

    # Height-phase one-hot: oh_h[P, di, a, s, kh] = (4*a + s == 2*P + di + kh)
    Pv = jnp.arange(2).reshape(2, 1, 1, 1, 1)
    dv = jnp.arange(2).reshape(1, 2, 1, 1, 1)
    av = jnp.arange(2).reshape(1, 1, 2, 1, 1)
    sv = jnp.arange(4).reshape(1, 1, 1, 4, 1)
    khv = jnp.arange(5).reshape(1, 1, 1, 1, 5)
    oh_h = (4 * av + sv == 2 * Pv + dv + khv).astype(f32)            # (2,2,2,4,5)

    # rhs1[(P*2+di)*2+a][s*32 + w, dj*84 + j1*6 + c]
    #     = w1[c, 0, kh, w - (2*j1+dj)]  with  kh = 4*a + s - 2*P - di
    rhs1 = jnp.einsum("pdast,kzjw,ctk->pdaswzjc",
                      oh_h, oh_w, w1[:, 0].astype(f32))
    rhs1 = rhs1.reshape(8, 128, 168)

    # rhs2[ki][j1*6 + cin, dj*80 + j2*16 + c2] = w2[c2, cin, ki, j1 - (2*j2+dj)]
    kw2 = jnp.arange(5).reshape(5, 1, 1, 1)
    dj2 = jnp.arange(2).reshape(1, 2, 1, 1)
    j2v = jnp.arange(5).reshape(1, 1, 5, 1)
    j1v = jnp.arange(14).reshape(1, 1, 1, 14)
    oh2 = (j1v == 2 * j2v + dj2 + kw2).astype(f32)                   # (5,2,5,14)
    rhs2 = jnp.einsum("xdjJ,cnkx->kJndjc", oh2,
                      w2.astype(f32)).reshape(5, 84, 160)

    # fc3 weights permuted to the kernel flatten order (i2, j2*16 + c2).
    w3k = w3.reshape(120, 16, 5, 5).transpose(2, 3, 1, 0).reshape(5, 80, 120)
    w4k = w4.T                                                       # (120, 10)

    return (rhs1.astype(MXU_DTYPE), rhs2.astype(MXU_DTYPE),
            w3k.astype(MXU_DTYPE), w4k.astype(MXU_DTYPE),
            jnp.tile(b1, 14).reshape(1, 84).astype(f32),
            jnp.tile(b2, 5).reshape(1, 80).astype(f32),
            b3.reshape(1, 120).astype(f32),
            b4.reshape(1, 10).astype(f32))


# ----------------------------------------------------------------------------
# Forward pass
# ----------------------------------------------------------------------------
@jax.jit
def lenet5_forward(params, x):
    """x: (B, 1, 28, 28) float32 NCHW -> (B, 10) softmax probabilities."""
    b = x.shape[0]
    tb = _choose_tb(b)
    rhs1, rhs2, w3k, w4k, bias1, bias2, b3r, b4r = _prep_params(params)
    xp, nblk, b_pad = _prep_input(x, tb)

    c2 = lambda t: (0, 0)
    c3 = lambda t: (0, 0, 0)
    out = pl.pallas_call(
        functools.partial(_lenet5_kernel, tb=tb),
        out_shape=jax.ShapeDtypeStruct((b_pad, 10), jnp.float32),
        grid_spec=pltpu.PrefetchScalarGridSpec(
            num_scalar_prefetch=0,
            grid=(nblk,),
            in_specs=[
                pl.BlockSpec((8 * tb, 128), lambda t: (t, 0)),   # packed input
                pl.BlockSpec((8, 128, 168), c3),                 # conv1 banded W
                pl.BlockSpec((5, 84, 160), c3),                  # conv2 banded W
                pl.BlockSpec((5, 80, 120), c3),                  # fc3 W (permuted)
                pl.BlockSpec((120, 10), c2),                     # fc4 W^T
                pl.BlockSpec((1, 84), c2),                       # conv1 bias (tiled)
                pl.BlockSpec((1, 80), c2),                       # conv2 bias (tiled)
                pl.BlockSpec((1, 120), c2),                      # fc3 bias
                pl.BlockSpec((1, 10), c2),                       # fc4 bias
            ],
            out_specs=pl.BlockSpec((tb, 10), lambda t: (t, 0)),
        ),
        compiler_params=pltpu.CompilerParams(
            dimension_semantics=("parallel",),
            vmem_limit_bytes=48 * 1024 * 1024),
    )(xp, rhs1, rhs2, w3k, w4k, bias1, bias2, b3r, b4r)
    return out[:b]


# ----------------------------------------------------------------------------
# Params + pure-XLA reference (for the self-check only)
# ----------------------------------------------------------------------------
def init_params(key):
    ks = jax.random.split(key, 8)
    s = 0.1
    return {
        "w1": s * jax.random.normal(ks[0], (6, 1, 5, 5), jnp.float32),
        "b1": s * jax.random.normal(ks[1], (6,), jnp.float32),
        "w2": s * jax.random.normal(ks[2], (16, 6, 5, 5), jnp.float32),
        "b2": s * jax.random.normal(ks[3], (16,), jnp.float32),
        "w3": s * jax.random.normal(ks[4], (120, 400), jnp.float32),
        "b3": s * jax.random.normal(ks[5], (120,), jnp.float32),
        "w4": s * jax.random.normal(ks[6], (10, 120), jnp.float32),
        "b4": s * jax.random.normal(ks[7], (10,), jnp.float32),
    }


@jax.jit
def _reference_forward(params, x):
    dn = ("NCHW", "OIHW", "NCHW")
    y = lax.conv_general_dilated(x, params["w1"], (1, 1), ((2, 2), (2, 2)),
                                 dimension_numbers=dn)
    y = jax.nn.relu(y + params["b1"][None, :, None, None])
    y = lax.reduce_window(y, -jnp.inf, lax.max, (1, 1, 2, 2), (1, 1, 2, 2), "VALID")
    y = lax.conv_general_dilated(y, params["w2"], (1, 1), ((0, 0), (0, 0)),
                                 dimension_numbers=dn)
    y = jax.nn.relu(y + params["b2"][None, :, None, None])
    y = lax.reduce_window(y, -jnp.inf, lax.max, (1, 1, 2, 2), (1, 1, 2, 2), "VALID")
    y = y.reshape(y.shape[0], -1)
    y = jax.nn.relu(y @ params["w3"].T + params["b3"])
    y = y @ params["w4"].T + params["b4"]
    return jax.nn.softmax(y, axis=-1)


if __name__ == "__main__":
    key = jax.random.PRNGKey(0)
    k_params, k_x = jax.random.split(key)
    params = init_params(k_params)
    x = jax.random.normal(k_x, (2, 1, 28, 28), jnp.float32)

    out = jax.block_until_ready(lenet5_forward(params, x))
    ref = jax.block_until_ready(_reference_forward(params, x))

    assert out.shape == (2, 10)
    # softmax rows sum to ~1 (approx reciprocal in the kernel)
    assert jnp.allclose(jnp.sum(out, axis=-1), 1.0, atol=1e-2)
    # matches the pure-XLA f32 reference (kernel uses bf16 MXU operands)
    assert float(jnp.max(jnp.abs(out - ref))) < 3e-2
    print("KERNEL_OK")
</pallas_src>

<mosaic_0001>
module attributes {stable_mosaic.version = 11 : i64} {
  func.func @_lenet5_kernel(%arg0: i32, %arg1: memref<128x128xbf16, #tpu.memory_space<vmem>>, %arg2: memref<8x128x168xbf16, #tpu.memory_space<vmem>>, %arg3: memref<5x84x160xbf16, #tpu.memory_space<vmem>>, %arg4: memref<5x80x120xbf16, #tpu.memory_space<vmem>>, %arg5: memref<120x10xbf16, #tpu.memory_space<vmem>>, %arg6: memref<1x84xf32, #tpu.memory_space<vmem>>, %arg7: memref<1x80xf32, #tpu.memory_space<vmem>>, %arg8: memref<1x120xf32, #tpu.memory_space<vmem>>, %arg9: memref<1x10xf32, #tpu.memory_space<vmem>>, %arg10: memref<16x10xf32, #tpu.memory_space<vmem>>) attributes {dimension_semantics = [#tpu.dimension_semantics<parallel>], iteration_bounds = array<i64: 1>, scalar_prefetch = 0 : i64, scratch_operands = 0 : i64, tpu.core_type = #tpu.core_type<tc>, window_params = [{transform_indices = @transform_0, window_bounds = array<i64: 128, 128>}, {pipeline_mode = #tpu.pipeline_mode<synchronous>, transform_indices = @transform_1, window_bounds = array<i64: 8, 128, 168>}, {pipeline_mode = #tpu.pipeline_mode<synchronous>, transform_indices = @transform_2, window_bounds = array<i64: 5, 84, 160>}, {pipeline_mode = #tpu.pipeline_mode<synchronous>, transform_indices = @transform_3, window_bounds = array<i64: 5, 80, 120>}, {pipeline_mode = #tpu.pipeline_mode<synchronous>, transform_indices = @transform_4, window_bounds = array<i64: 120, 10>}, {pipeline_mode = #tpu.pipeline_mode<synchronous>, transform_indices = @transform_5, window_bounds = array<i64: 1, 84>}, {pipeline_mode = #tpu.pipeline_mode<synchronous>, transform_indices = @transform_6, window_bounds = array<i64: 1, 80>}, {pipeline_mode = #tpu.pipeline_mode<synchronous>, transform_indices = @transform_7, window_bounds = array<i64: 1, 120>}, {pipeline_mode = #tpu.pipeline_mode<synchronous>, transform_indices = @transform_8, window_bounds = array<i64: 1, 10>}, {transform_indices = @transform_9, window_bounds = array<i64: 16, 10>}]} {
    %c0 = arith.constant 0 : index
    %c0_0 = arith.constant 0 : index
    %0 = vector.load %arg1[%c0, %c0_0] : memref<128x128xbf16, #tpu.memory_space<vmem>>, vector<128x128xbf16>
    %1 = vector.extract_strided_slice %0 {offsets = [0, 0], sizes = [112, 128], strides = [1, 1]} : vector<128x128xbf16> to vector<112x128xbf16>
    %c0_1 = arith.constant 0 : index
    %c0_2 = arith.constant 0 : index
    %c0_3 = arith.constant 0 : index
    %2 = vector.load %arg2[%c0_1, %c0_2, %c0_3] : memref<8x128x168xbf16, #tpu.memory_space<vmem>>, vector<1x128x168xbf16>
    %3 = vector.shape_cast %2 : vector<1x128x168xbf16> to vector<128x168xbf16>
    %cst = arith.constant dense<0.000000e+00> : vector<112x168xf32>
    %4 = tpu.matmul %1, %3, %cst {dimension_numbers = #tpu.dot_dimension_numbers<[1], [0], [0], [1], [0, 0, 1, 1], [], []>} : vector<112x128xbf16>, vector<128x168xbf16>, vector<112x168xf32> -> vector<112x168xf32>
    %5 = vector.extract_strided_slice %0 {offsets = [16, 0], sizes = [112, 128], strides = [1, 1]} : vector<128x128xbf16> to vector<112x128xbf16>
    %c1 = arith.constant 1 : index
    %c0_4 = arith.constant 0 : index
    %c0_5 = arith.constant 0 : index
    %6 = vector.load %arg2[%c1, %c0_4, %c0_5] : memref<8x128x168xbf16, #tpu.memory_space<vmem>>, vector<1x128x168xbf16>
    %7 = vector.shape_cast %6 : vector<1x128x168xbf16> to vector<128x168xbf16>
    %cst_6 = arith.constant dense<0.000000e+00> : vector<112x168xf32>
    %8 = tpu.matmul %5, %7, %cst_6 {dimension_numbers = #tpu.dot_dimension_numbers<[1], [0], [0], [1], [0, 0, 1, 1], [], []>} : vector<112x128xbf16>, vector<128x168xbf16>, vector<112x168xf32> -> vector<112x168xf32>
    %9 = arith.addf %4, %8 : vector<112x168xf32>
    %10 = vector.extract_strided_slice %0 {offsets = [0, 0], sizes = [112, 128], strides = [1, 1]} : vector<128x128xbf16> to vector<112x128xbf16>
    %c2 = arith.constant 2 : index
    %c0_7 = arith.constant 0 : index
    %c0_8 = arith.constant 0 : index
    %11 = vector.load %arg2[%c2, %c0_7, %c0_8] : memref<8x128x168xbf16, #tpu.memory_space<vmem>>, vector<1x128x168xbf16>
    %12 = vector.shape_cast %11 : vector<1x128x168xbf16> to vector<128x168xbf16>
    %cst_9 = arith.constant dense<0.000000e+00> : vector<112x168xf32>
    %13 = tpu.matmul %10, %12, %cst_9 {dimension_numbers = #tpu.dot_dimension_numbers<[1], [0], [0], [1], [0, 0, 1, 1], [], []>} : vector<112x128xbf16>, vector<128x168xbf16>, vector<112x168xf32> -> vector<112x168xf32>
    %14 = vector.extract_strided_slice %0 {offsets = [16, 0], sizes = [112, 128], strides = [1, 1]} : vector<128x128xbf16> to vector<112x128xbf16>
    %c3 = arith.constant 3 : index
    %c0_10 = arith.constant 0 : index
    %c0_11 = arith.constant 0 : index
    %15 = vector.load %arg2[%c3, %c0_10, %c0_11] : memref<8x128x168xbf16, #tpu.memory_space<vmem>>, vector<1x128x168xbf16>
    %16 = vector.shape_cast %15 : vector<1x128x168xbf16> to vector<128x168xbf16>
    %cst_12 = arith.constant dense<0.000000e+00> : vector<112x168xf32>
    %17 = tpu.matmul %14, %16, %cst_12 {dimension_numbers = #tpu.dot_dimension_numbers<[1], [0], [0], [1], [0, 0, 1, 1], [], []>} : vector<112x128xbf16>, vector<128x168xbf16>, vector<112x168xf32> -> vector<112x168xf32>
    %18 = arith.addf %13, %17 : vector<112x168xf32>
    %19 = arith.maximumf %9, %18 : vector<112x168xf32>
    %20 = vector.extract_strided_slice %19 {offsets = [0, 0], sizes = [112, 84], strides = [1, 1]} : vector<112x168xf32> to vector<112x84xf32>
    %21 = vector.extract_strided_slice %19 {offsets = [0, 84], sizes = [112, 84], strides = [1, 1]} : vector<112x168xf32> to vector<112x84xf32>
    %22 = arith.maximumf %20, %21 : vector<112x84xf32>
    %c0_13 = arith.constant 0 : index
    %c0_14 = arith.constant 0 : index
    %23 = vector.load %arg6[%c0_13, %c0_14] : memref<1x84xf32, #tpu.memory_space<vmem>>, vector<1x84xf32>
    %24 = vector.broadcast %23 : vector<1x84xf32> to vector<112x84xf32>
    %25 = arith.addf %22, %24 : vector<112x84xf32>
    %cst_15 = arith.constant 0.000000e+00 : f32
    %26 = vector.broadcast %cst_15 : f32 to vector<112x84xf32>
    %27 = arith.maximumf %25, %26 : vector<112x84xf32>
    %28 = arith.truncf %27 : vector<112x84xf32> to vector<112x84xbf16>
    %29 = vector.extract_strided_slice %0 {offsets = [0, 0], sizes = [112, 128], strides = [1, 1]} : vector<128x128xbf16> to vector<112x128xbf16>
    %c4 = arith.constant 4 : index
    %c0_16 = arith.constant 0 : index
    %c0_17 = arith.constant 0 : index
    %30 = vector.load %arg2[%c4, %c0_16, %c0_17] : memref<8x128x168xbf16, #tpu.memory_space<vmem>>, vector<1x128x168xbf16>
    %31 = vector.shape_cast %30 : vector<1x128x168xbf16> to vector<128x168xbf16>
    %cst_18 = arith.constant dense<0.000000e+00> : vector<112x168xf32>
    %32 = tpu.matmul %29, %31, %cst_18 {dimension_numbers = #tpu.dot_dimension_numbers<[1], [0], [0], [1], [0, 0, 1, 1], [], []>} : vector<112x128xbf16>, vector<128x168xbf16>, vector<112x168xf32> -> vector<112x168xf32>
    %33 = vector.extract_strided_slice %0 {offsets = [16, 0], sizes = [112, 128], strides = [1, 1]} : vector<128x128xbf16> to vector<112x128xbf16>
    %c5 = arith.constant 5 : index
    %c0_19 = arith.constant 0 : index
    %c0_20 = arith.constant 0 : index
    %34 = vector.load %arg2[%c5, %c0_19, %c0_20] : memref<8x128x168xbf16, #tpu.memory_space<vmem>>, vector<1x128x168xbf16>
    %35 = vector.shape_cast %34 : vector<1x128x168xbf16> to vector<128x168xbf16>
    %cst_21 = arith.constant dense<0.000000e+00> : vector<112x168xf32>
    %36 = tpu.matmul %33, %35, %cst_21 {dimension_numbers = #tpu.dot_dimension_numbers<[1], [0], [0], [1], [0, 0, 1, 1], [], []>} : vector<112x128xbf16>, vector<128x168xbf16>, vector<112x168xf32> -> vector<112x168xf32>
    %37 = arith.addf %32, %36 : vector<112x168xf32>
    %38 = vector.extract_strided_slice %0 {offsets = [0, 0], sizes = [112, 128], strides = [1, 1]} : vector<128x128xbf16> to vector<112x128xbf16>
    %c6 = arith.constant 6 : index
    %c0_22 = arith.constant 0 : index
    %c0_23 = arith.constant 0 : index
    %39 = vector.load %arg2[%c6, %c0_22, %c0_23] : memref<8x128x168xbf16, #tpu.memory_space<vmem>>, vector<1x128x168xbf16>
    %40 = vector.shape_cast %39 : vector<1x128x168xbf16> to vector<128x168xbf16>
    %cst_24 = arith.constant dense<0.000000e+00> : vector<112x168xf32>
    %41 = tpu.matmul %38, %40, %cst_24 {dimension_numbers = #tpu.dot_dimension_numbers<[1], [0], [0], [1], [0, 0, 1, 1], [], []>} : vector<112x128xbf16>, vector<128x168xbf16>, vector<112x168xf32> -> vector<112x168xf32>
    %42 = vector.extract_strided_slice %0 {offsets = [16, 0], sizes = [112, 128], strides = [1, 1]} : vector<128x128xbf16> to vector<112x128xbf16>
    %c7 = arith.constant 7 : index
    %c0_25 = arith.constant 0 : index
    %c0_26 = arith.constant 0 : index
    %43 = vector.load %arg2[%c7, %c0_25, %c0_26] : memref<8x128x168xbf16, #tpu.memory_space<vmem>>, vector<1x128x168xbf16>
    %44 = vector.shape_cast %43 : vector<1x128x168xbf16> to vector<128x168xbf16>
    %cst_27 = arith.constant dense<0.000000e+00> : vector<112x168xf32>
    %45 = tpu.matmul %42, %44, %cst_27 {dimension_numbers = #tpu.dot_dimension_numbers<[1], [0], [0], [1], [0, 0, 1, 1], [], []>} : vector<112x128xbf16>, vector<128x168xbf16>, vector<112x168xf32> -> vector<112x168xf32>
    %46 = arith.addf %41, %45 : vector<112x168xf32>
    %47 = arith.maximumf %37, %46 : vector<112x168xf32>
    %48 = vector.extract_strided_slice %47 {offsets = [0, 0], sizes = [112, 84], strides = [1, 1]} : vector<112x168xf32> to vector<112x84xf32>
    %49 = vector.extract_strided_slice %47 {offsets = [0, 84], sizes = [112, 84], strides = [1, 1]} : vector<112x168xf32> to vector<112x84xf32>
    %50 = arith.maximumf %48, %49 : vector<112x84xf32>
    %c0_28 = arith.constant 0 : index
    %c0_29 = arith.constant 0 : index
    %51 = vector.load %arg6[%c0_28, %c0_29] : memref<1x84xf32, #tpu.memory_space<vmem>>, vector<1x84xf32>
    %52 = vector.broadcast %51 : vector<1x84xf32> to vector<112x84xf32>
    %53 = arith.addf %50, %52 : vector<112x84xf32>
    %cst_30 = arith.constant 0.000000e+00 : f32
    %54 = vector.broadcast %cst_30 : f32 to vector<112x84xf32>
    %55 = arith.maximumf %53, %54 : vector<112x84xf32>
    %56 = arith.truncf %55 : vector<112x84xf32> to vector<112x84xbf16>
    %57 = vector.extract_strided_slice %28 {offsets = [0, 0], sizes = [80, 84], strides = [1, 1]} : vector<112x84xbf16> to vector<80x84xbf16>
    %c0_31 = arith.constant 0 : index
    %c0_32 = arith.constant 0 : index
    %c0_33 = arith.constant 0 : index
    %58 = vector.load %arg3[%c0_31, %c0_32, %c0_33] : memref<5x84x160xbf16, #tpu.memory_space<vmem>>, vector<1x84x160xbf16>
    %59 = vector.shape_cast %58 : vector<1x84x160xbf16> to vector<84x160xbf16>
    %cst_34 = arith.constant dense<0.000000e+00> : vector<80x160xf32>
    %60 = tpu.matmul %57, %59, %cst_34 {dimension_numbers = #tpu.dot_dimension_numbers<[1], [0], [0], [1], [0, 0, 1, 1], [], []>} : vector<80x84xbf16>, vector<84x160xbf16>, vector<80x160xf32> -> vector<80x160xf32>
    %61 = vector.extract_strided_slice %56 {offsets = [0, 0], sizes = [80, 84], strides = [1, 1]} : vector<112x84xbf16> to vector<80x84xbf16>
    %c1_35 = arith.constant 1 : index
    %c0_36 = arith.constant 0 : index
    %c0_37 = arith.constant 0 : index
    %62 = vector.load %arg3[%c1_35, %c0_36, %c0_37] : memref<5x84x160xbf16, #tpu.memory_space<vmem>>, vector<1x84x160xbf16>
    %63 = vector.shape_cast %62 : vector<1x84x160xbf16> to vector<84x160xbf16>
    %cst_38 = arith.constant dense<0.000000e+00> : vector<80x160xf32>
    %64 = tpu.matmul %61, %63, %cst_38 {dimension_numbers = #tpu.dot_dimension_numbers<[1], [0], [0], [1], [0, 0, 1, 1], [], []>} : vector<80x84xbf16>, vector<84x160xbf16>, vector<80x160xf32> -> vector<80x160xf32>
    %65 = arith.addf %60, %64 : vector<80x160xf32>
    %66 = vector.extract_strided_slice %28 {offsets = [16, 0], sizes = [80, 84], strides = [1, 1]} : vector<112x84xbf16> to vector<80x84xbf16>
    %c2_39 = arith.constant 2 : index
    %c0_40 = arith.constant 0 : index
    %c0_41 = arith.constant 0 : index
    %67 = vector.load %arg3[%c2_39, %c0_40, %c0_41] : memref<5x84x160xbf16, #tpu.memory_space<vmem>>, vector<1x84x160xbf16>
    %68 = vector.shape_cast %67 : vector<1x84x160xbf16> to vector<84x160xbf16>
    %cst_42 = arith.constant dense<0.000000e+00> : vector<80x160xf32>
    %69 = tpu.matmul %66, %68, %cst_42 {dimension_numbers = #tpu.dot_dimension_numbers<[1], [0], [0], [1], [0, 0, 1, 1], [], []>} : vector<80x84xbf16>, vector<84x160xbf16>, vector<80x160xf32> -> vector<80x160xf32>
    %70 = arith.addf %65, %69 : vector<80x160xf32>
    %71 = vector.extract_strided_slice %56 {offsets = [16, 0], sizes = [80, 84], strides = [1, 1]} : vector<112x84xbf16> to vector<80x84xbf16>
    %c3_43 = arith.constant 3 : index
    %c0_44 = arith.constant 0 : index
    %c0_45 = arith.constant 0 : index
    %72 = vector.load %arg3[%c3_43, %c0_44, %c0_45] : memref<5x84x160xbf16, #tpu.memory_space<vmem>>, vector<1x84x160xbf16>
    %73 = vector.shape_cast %72 : vector<1x84x160xbf16> to vector<84x160xbf16>
    %cst_46 = arith.constant dense<0.000000e+00> : vector<80x160xf32>
    %74 = tpu.matmul %71, %73, %cst_46 {dimension_numbers = #tpu.dot_dimension_numbers<[1], [0], [0], [1], [0, 0, 1, 1], [], []>} : vector<80x84xbf16>, vector<84x160xbf16>, vector<80x160xf32> -> vector<80x160xf32>
    %75 = arith.addf %70, %74 : vector<80x160xf32>
    %76 = vector.extract_strided_slice %28 {offsets = [32, 0], sizes = [80, 84], strides = [1, 1]} : vector<112x84xbf16> to vector<80x84xbf16>
    %c4_47 = arith.constant 4 : index
    %c0_48 = arith.constant 0 : index
    %c0_49 = arith.constant 0 : index
    %77 = vector.load %arg3[%c4_47, %c0_48, %c0_49] : memref<5x84x160xbf16, #tpu.memory_space<vmem>>, vector<1x84x160xbf16>
    %78 = vector.shape_cast %77 : vector<1x84x160xbf16> to vector<84x160xbf16>
    %cst_50 = arith.constant dense<0.000000e+00> : vector<80x160xf32>
    %79 = tpu.matmul %76, %78, %cst_50 {dimension_numbers = #tpu.dot_dimension_numbers<[1], [0], [0], [1], [0, 0, 1, 1], [], []>} : vector<80x84xbf16>, vector<84x160xbf16>, vector<80x160xf32> -> vector<80x160xf32>
    %80 = arith.addf %75, %79 : vector<80x160xf32>
    %81 = vector.extract_strided_slice %56 {offsets = [0, 0], sizes = [80, 84], strides = [1, 1]} : vector<112x84xbf16> to vector<80x84xbf16>
    %c0_51 = arith.constant 0 : index
    %c0_52 = arith.constant 0 : index
    %c0_53 = arith.constant 0 : index
    %82 = vector.load %arg3[%c0_51, %c0_52, %c0_53] : memref<5x84x160xbf16, #tpu.memory_space<vmem>>, vector<1x84x160xbf16>
    %83 = vector.shape_cast %82 : vector<1x84x160xbf16> to vector<84x160xbf16>
    %cst_54 = arith.constant dense<0.000000e+00> : vector<80x160xf32>
    %84 = tpu.matmul %81, %83, %cst_54 {dimension_numbers = #tpu.dot_dimension_numbers<[1], [0], [0], [1], [0, 0, 1, 1], [], []>} : vector<80x84xbf16>, vector<84x160xbf16>, vector<80x160xf32> -> vector<80x160xf32>
    %85 = vector.extract_strided_slice %28 {offsets = [16, 0], sizes = [80, 84], strides = [1, 1]} : vector<112x84xbf16> to vector<80x84xbf16>
    %c1_55 = arith.constant 1 : index
    %c0_56 = arith.constant 0 : index
    %c0_57 = arith.constant 0 : index
    %86 = vector.load %arg3[%c1_55, %c0_56, %c0_57] : memref<5x84x160xbf16, #tpu.memory_space<vmem>>, vector<1x84x160xbf16>
    %87 = vector.shape_cast %86 : vector<1x84x160xbf16> to vector<84x160xbf16>
    %cst_58 = arith.constant dense<0.000000e+00> : vector<80x160xf32>
    %88 = tpu.matmul %85, %87, %cst_58 {dimension_numbers = #tpu.dot_dimension_numbers<[1], [0], [0], [1], [0, 0, 1, 1], [], []>} : vector<80x84xbf16>, vector<84x160xbf16>, vector<80x160xf32> -> vector<80x160xf32>
    %89 = arith.addf %84, %88 : vector<80x160xf32>
    %90 = vector.extract_strided_slice %56 {offsets = [16, 0], sizes = [80, 84], strides = [1, 1]} : vector<112x84xbf16> to vector<80x84xbf16>
    %c2_59 = arith.constant 2 : index
    %c0_60 = arith.constant 0 : index
    %c0_61 = arith.constant 0 : index
    %91 = vector.load %arg3[%c2_59, %c0_60, %c0_61] : memref<5x84x160xbf16, #tpu.memory_space<vmem>>, vector<1x84x160xbf16>
    %92 = vector.shape_cast %91 : vector<1x84x160xbf16> to vector<84x160xbf16>
    %cst_62 = arith.constant dense<0.000000e+00> : vector<80x160xf32>
    %93 = tpu.matmul %90, %92, %cst_62 {dimension_numbers = #tpu.dot_dimension_numbers<[1], [0], [0], [1], [0, 0, 1, 1], [], []>} : vector<80x84xbf16>, vector<84x160xbf16>, vector<80x160xf32> -> vector<80x160xf32>
    %94 = arith.addf %89, %93 : vector<80x160xf32>
    %95 = vector.extract_strided_slice %28 {offsets = [32, 0], sizes = [80, 84], strides = [1, 1]} : vector<112x84xbf16> to vector<80x84xbf16>
    %c3_63 = arith.constant 3 : index
    %c0_64 = arith.constant 0 : index
    %c0_65 = arith.constant 0 : index
    %96 = vector.load %arg3[%c3_63, %c0_64, %c0_65] : memref<5x84x160xbf16, #tpu.memory_space<vmem>>, vector<1x84x160xbf16>
    %97 = vector.shape_cast %96 : vector<1x84x160xbf16> to vector<84x160xbf16>
    %cst_66 = arith.constant dense<0.000000e+00> : vector<80x160xf32>
    %98 = tpu.matmul %95, %97, %cst_66 {dimension_numbers = #tpu.dot_dimension_numbers<[1], [0], [0], [1], [0, 0, 1, 1], [], []>} : vector<80x84xbf16>, vector<84x160xbf16>, vector<80x160xf32> -> vector<80x160xf32>
    %99 = arith.addf %94, %98 : vector<80x160xf32>
    %100 = vector.extract_strided_slice %56 {offsets = [32, 0], sizes = [80, 84], strides = [1, 1]} : vector<112x84xbf16> to vector<80x84xbf16>
    %c4_67 = arith.constant 4 : index
    %c0_68 = arith.constant 0 : index
    %c0_69 = arith.constant 0 : index
    %101 = vector.load %arg3[%c4_67, %c0_68, %c0_69] : memref<5x84x160xbf16, #tpu.memory_space<vmem>>, vector<1x84x160xbf16>
    %102 = vector.shape_cast %101 : vector<1x84x160xbf16> to vector<84x160xbf16>
    %cst_70 = arith.constant dense<0.000000e+00> : vector<80x160xf32>
    %103 = tpu.matmul %100, %102, %cst_70 {dimension_numbers = #tpu.dot_dimension_numbers<[1], [0], [0], [1], [0, 0, 1, 1], [], []>} : vector<80x84xbf16>, vector<84x160xbf16>, vector<80x160xf32> -> vector<80x160xf32>
    %104 = arith.addf %99, %103 : vector<80x160xf32>
    %105 = arith.maximumf %80, %104 : vector<80x160xf32>
    %106 = vector.extract_strided_slice %105 {offsets = [0, 0], sizes = [80, 80], strides = [1, 1]} : vector<80x160xf32> to vector<80x80xf32>
    %107 = vector.extract_strided_slice %105 {offsets = [0, 80], sizes = [80, 80], strides = [1, 1]} : vector<80x160xf32> to vector<80x80xf32>
    %108 = arith.maximumf %106, %107 : vector<80x80xf32>
    %c0_71 = arith.constant 0 : index
    %c0_72 = arith.constant 0 : index
    %109 = vector.load %arg7[%c0_71, %c0_72] : memref<1x80xf32, #tpu.memory_space<vmem>>, vector<1x80xf32>
    %110 = vector.broadcast %109 : vector<1x80xf32> to vector<80x80xf32>
    %111 = arith.addf %108, %110 : vector<80x80xf32>
    %cst_73 = arith.constant 0.000000e+00 : f32
    %112 = vector.broadcast %cst_73 : f32 to vector<80x80xf32>
    %113 = arith.maximumf %111, %112 : vector<80x80xf32>
    %114 = arith.truncf %113 : vector<80x80xf32> to vector<80x80xbf16>
    %115 = vector.extract_strided_slice %114 {offsets = [0, 0], sizes = [16, 80], strides = [1, 1]} : vector<80x80xbf16> to vector<16x80xbf16>
    %c0_74 = arith.constant 0 : index
    %c0_75 = arith.constant 0 : index
    %c0_76 = arith.constant 0 : index
    %116 = vector.load %arg4[%c0_74, %c0_75, %c0_76] : memref<5x80x120xbf16, #tpu.memory_space<vmem>>, vector<1x80x120xbf16>
    %117 = vector.shape_cast %116 : vector<1x80x120xbf16> to vector<80x120xbf16>
    %cst_77 = arith.constant dense<0.000000e+00> : vector<16x120xf32>
    %118 = tpu.matmul %115, %117, %cst_77 {dimension_numbers = #tpu.dot_dimension_numbers<[1], [0], [0], [1], [0, 0, 1, 1], [], []>} : vector<16x80xbf16>, vector<80x120xbf16>, vector<16x120xf32> -> vector<16x120xf32>
    %119 = vector.extract_strided_slice %114 {offsets = [16, 0], sizes = [16, 80], strides = [1, 1]} : vector<80x80xbf16> to vector<16x80xbf16>
    %c1_78 = arith.constant 1 : index
    %c0_79 = arith.constant 0 : index
    %c0_80 = arith.constant 0 : index
    %120 = vector.load %arg4[%c1_78, %c0_79, %c0_80] : memref<5x80x120xbf16, #tpu.memory_space<vmem>>, vector<1x80x120xbf16>
    %121 = vector.shape_cast %120 : vector<1x80x120xbf16> to vector<80x120xbf16>
    %cst_81 = arith.constant dense<0.000000e+00> : vector<16x120xf32>
    %122 = tpu.matmul %119, %121, %cst_81 {dimension_numbers = #tpu.dot_dimension_numbers<[1], [0], [0], [1], [0, 0, 1, 1], [], []>} : vector<16x80xbf16>, vector<80x120xbf16>, vector<16x120xf32> -> vector<16x120xf32>
    %123 = arith.addf %118, %122 : vector<16x120xf32>
    %124 = vector.extract_strided_slice %114 {offsets = [32, 0], sizes = [16, 80], strides = [1, 1]} : vector<80x80xbf16> to vector<16x80xbf16>
    %c2_82 = arith.constant 2 : index
    %c0_83 = arith.constant 0 : index
    %c0_84 = arith.constant 0 : index
    %125 = vector.load %arg4[%c2_82, %c0_83, %c0_84] : memref<5x80x120xbf16, #tpu.memory_space<vmem>>, vector<1x80x120xbf16>
    %126 = vector.shape_cast %125 : vector<1x80x120xbf16> to vector<80x120xbf16>
    %cst_85 = arith.constant dense<0.000000e+00> : vector<16x120xf32>
    %127 = tpu.matmul %124, %126, %cst_85 {dimension_numbers = #tpu.dot_dimension_numbers<[1], [0], [0], [1], [0, 0, 1, 1], [], []>} : vector<16x80xbf16>, vector<80x120xbf16>, vector<16x120xf32> -> vector<16x120xf32>
    %128 = arith.addf %123, %127 : vector<16x120xf32>
    %129 = vector.extract_strided_slice %114 {offsets = [48, 0], sizes = [16, 80], strides = [1, 1]} : vector<80x80xbf16> to vector<16x80xbf16>
    %c3_86 = arith.constant 3 : index
    %c0_87 = arith.constant 0 : index
    %c0_88 = arith.constant 0 : index
    %130 = vector.load %arg4[%c3_86, %c0_87, %c0_88] : memref<5x80x120xbf16, #tpu.memory_space<vmem>>, vector<1x80x120xbf16>
    %131 = vector.shape_cast %130 : vector<1x80x120xbf16> to vector<80x120xbf16>
    %cst_89 = arith.constant dense<0.000000e+00> : vector<16x120xf32>
    %132 = tpu.matmul %129, %131, %cst_89 {dimension_numbers = #tpu.dot_dimension_numbers<[1], [0], [0], [1], [0, 0, 1, 1], [], []>} : vector<16x80xbf16>, vector<80x120xbf16>, vector<16x120xf32> -> vector<16x120xf32>
    %133 = arith.addf %128, %132 : vector<16x120xf32>
    %134 = vector.extract_strided_slice %114 {offsets = [64, 0], sizes = [16, 80], strides = [1, 1]} : vector<80x80xbf16> to vector<16x80xbf16>
    %c4_90 = arith.constant 4 : index
    %c0_91 = arith.constant 0 : index
    %c0_92 = arith.constant 0 : index
    %135 = vector.load %arg4[%c4_90, %c0_91, %c0_92] : memref<5x80x120xbf16, #tpu.memory_space<vmem>>, vector<1x80x120xbf16>
    %136 = vector.shape_cast %135 : vector<1x80x120xbf16> to vector<80x120xbf16>
    %cst_93 = arith.constant dense<0.000000e+00> : vector<16x120xf32>
    %137 = tpu.matmul %134, %136, %cst_93 {dimension_numbers = #tpu.dot_dimension_numbers<[1], [0], [0], [1], [0, 0, 1, 1], [], []>} : vector<16x80xbf16>, vector<80x120xbf16>, vector<16x120xf32> -> vector<16x120xf32>
    %138 = arith.addf %133, %137 : vector<16x120xf32>
    %c0_94 = arith.constant 0 : index
    %c0_95 = arith.constant 0 : index
    %139 = vector.load %arg8[%c0_94, %c0_95] : memref<1x120xf32, #tpu.memory_space<vmem>>, vector<1x120xf32>
    %140 = vector.broadcast %139 : vector<1x120xf32> to vector<16x120xf32>
    %141 = arith.addf %138, %140 : vector<16x120xf32>
    %cst_96 = arith.constant 0.000000e+00 : f32
    %142 = vector.broadcast %cst_96 : f32 to vector<16x120xf32>
    %143 = arith.maximumf %141, %142 : vector<16x120xf32>
    %144 = arith.truncf %143 : vector<16x120xf32> to vector<16x120xbf16>
    %c0_97 = arith.constant 0 : index
    %c0_98 = arith.constant 0 : index
    %145 = vector.load %arg5[%c0_97, %c0_98] : memref<120x10xbf16, #tpu.memory_space<vmem>>, vector<120x10xbf16>
    %cst_99 = arith.constant dense<0.000000e+00> : vector<16x10xf32>
    %146 = tpu.matmul %144, %145, %cst_99 {dimension_numbers = #tpu.dot_dimension_numbers<[1], [0], [0], [1], [0, 0, 1, 1], [], []>} : vector<16x120xbf16>, vector<120x10xbf16>, vector<16x10xf32> -> vector<16x10xf32>
    %c0_100 = arith.constant 0 : index
    %c0_101 = arith.constant 0 : index
    %147 = vector.load %arg9[%c0_100, %c0_101] : memref<1x10xf32, #tpu.memory_space<vmem>>, vector<1x10xf32>
    %148 = vector.broadcast %147 : vector<1x10xf32> to vector<16x10xf32>
    %149 = arith.addf %146, %148 : vector<16x10xf32>
    %cst_102 = arith.constant dense<0xFF800000> : vector<16xf32>
    %150 = vector.multi_reduction <maximumf>, %149, %cst_102 [1] : vector<16x10xf32> to vector<16xf32>
    %151 = vector.shape_cast %150 : vector<16xf32> to vector<16x1xf32>
    %152 = vector.broadcast %151 : vector<16x1xf32> to vector<16x10xf32>
    %153 = arith.subf %149, %152 : vector<16x10xf32>
    %154 = math.exp %153 : vector<16x10xf32>
    %cst_103 = arith.constant dense<0.000000e+00> : vector<16xf32>
    %155 = vector.multi_reduction <add>, %154, %cst_103 [1] : vector<16x10xf32> to vector<16xf32>
    %156 = vector.shape_cast %155 : vector<16xf32> to vector<16x1xf32>
    %157 = tpu.reciprocal %156 {approx = true} : vector<16x1xf32> -> vector<16x1xf32>
    %158 = vector.broadcast %157 : vector<16x1xf32> to vector<16x10xf32>
    %159 = arith.mulf %154, %158 : vector<16x10xf32>
    %c0_104 = arith.constant 0 : index
    %c0_105 = arith.constant 0 : index
    %160 = vector.load %arg10[%c0_104, %c0_105] : memref<16x10xf32, #tpu.memory_space<vmem>>, vector<16x10xf32>
    tpu.vector_store %arg10[%c0_104, %c0_105], %159 {strides = array<i32>} : memref<16x10xf32, #tpu.memory_space<vmem>>, vector<16x10xf32>,
    return
  }
  func.func @transform_0(%arg0: i32) -> (i32, i32) {
    %c0_i32 = arith.constant 0 : i32
    %c0_i32_0 = arith.constant 0 : i32
    return %arg0, %c0_i32 : i32, i32
  }
  func.func @transform_1(%arg0: i32) -> (i32, i32, i32) {
    %c0_i32 = arith.constant 0 : i32
    %c0_i32_0 = arith.constant 0 : i32
    %c0_i32_1 = arith.constant 0 : i32
    %c0_i32_2 = arith.constant 0 : i32
    return %c0_i32, %c0_i32_0, %c0_i32_1 : i32, i32, i32
  }
  func.func @transform_2(%arg0: i32) -> (i32, i32, i32) {
    %c0_i32 = arith.constant 0 : i32
    %c0_i32_0 = arith.constant 0 : i32
    %c0_i32_1 = arith.constant 0 : i32
    %c0_i32_2 = arith.constant 0 : i32
    return %c0_i32, %c0_i32_0, %c0_i32_1 : i32, i32, i32
  }
  func.func @transform_3(%arg0: i32) -> (i32, i32, i32) {
    %c0_i32 = arith.constant 0 : i32
    %c0_i32_0 = arith.constant 0 : i32
    %c0_i32_1 = arith.constant 0 : i32
    %c0_i32_2 = arith.constant 0 : i32
    return %c0_i32, %c0_i32_0, %c0_i32_1 : i32, i32, i32
  }
  func.func @transform_4(%arg0: i32) -> (i32, i32) {
    %c0_i32 = arith.constant 0 : i32
    %c0_i32_0 = arith.constant 0 : i32
    %c0_i32_1 = arith.constant 0 : i32
    return %c0_i32, %c0_i32_0 : i32, i32
  }
  func.func @transform_5(%arg0: i32) -> (i32, i32) {
    %c0_i32 = arith.constant 0 : i32
    %c0_i32_0 = arith.constant 0 : i32
    %c0_i32_1 = arith.constant 0 : i32
    return %c0_i32, %c0_i32_0 : i32, i32
  }
  func.func @transform_6(%arg0: i32) -> (i32, i32) {
    %c0_i32 = arith.constant 0 : i32
    %c0_i32_0 = arith.constant 0 : i32
    %c0_i32_1 = arith.constant 0 : i32
    return %c0_i32, %c0_i32_0 : i32, i32
  }
  func.func @transform_7(%arg0: i32) -> (i32, i32) {
    %c0_i32 = arith.constant 0 : i32
    %c0_i32_0 = arith.constant 0 : i32
    %c0_i32_1 = arith.constant 0 : i32
    return %c0_i32, %c0_i32_0 : i32, i32
  }
  func.func @transform_8(%arg0: i32) -> (i32, i32) {
    %c0_i32 = arith.constant 0 : i32
    %c0_i32_0 = arith.constant 0 : i32
    %c0_i32_1 = arith.constant 0 : i32
    return %c0_i32, %c0_i32_0 : i32, i32
  }
  func.func @transform_9(%arg0: i32) -> (i32, i32) {
    %c0_i32 = arith.constant 0 : i32
    %c0_i32_0 = arith.constant 0 : i32
    return %arg0, %c0_i32 : i32, i32
  }
}

</mosaic_0001>

<llo_original>
// kernel: tile.13
$region0: #{tile.13}
  #allocation0 [shape = 's32[1]{0}', space=sflag, size = 0x4, scoped, tag = 'scoped memory for tile.13']
  %s0 = inlined_call_operand.vmem [shape: f32[6], index: 0, kind: input, shape index: {}]
  %s1 = inlined_call_operand.vmem [shape: f32[14,6], index: 1, kind: output, shape index: {}]
  // Predicated region
  $region2: #{tile.13} parent=0 // pred_check
    _
  $region3: #{tile.13} parent=0 // pred_check_branch
    %3 = sbr.rel (0) target = $region5
  $region4: #{tile.13} parent=0 // pred_region
    _
  $region5: #{tile.13} parent=0 // pred_fallthru
    _
  %v4 = vld [vmem:[%s0] ss:$0 sm:$0xff]
  %5 = vst [vmem:[%s1] sm:$0xff] %v4
  %s6 = scalar_lea.vmem %s1, 8
  %7 = vst [vmem:[%s6] sm:$0xff] %v4

// kernel: tile.14
$region0: #{tile.14}
  %s0 = inlined_call_operand.vmem [shape: f32[14,6], index: 0, kind: input, shape index: {}]
  %s1 = inlined_call_operand.vmem [shape: f32[1,84], index: 1, kind: output, shape index: {}]
  $region1: #{tile.14} parent=0
    #allocation0 [shape = 'u8[4096]{0}', space=vmem, size = 0x1000, scoped, tag = 'scoped mem for output reshape']
    %v2 = vld [vmem:[%s0] sm:$0x1]
    %vm3 = vcmask 48128
    %4 = vst.msk [vmem:[#allocation0] sm:$0x1] %vm3, %v2
    %s5 = scalar_lea.vmem %s0, 13
    %v6 = vld [vmem:[%s5] sm:$0x1]
    %7 = vrot.lane.b32.xlu0 %v6, 78
    %v8 = vpop.permute.xlu0 %7
    %vm9 = vcmask 687728
    %10 = vst.msk [vmem:[#allocation0] sm:$0x1] %vm9, %v8
    %s11 = scalar_lea.vmem %s0, 12
    %v12 = vld [vmem:[%s11] sm:$0x1]
    %13 = vrot.lane.b32.xlu0 %v12, 72
    %v14 = vpop.permute.xlu0 %13
    %vm15 = vcmask 638528
    %16 = vst.msk [vmem:[#allocation0] sm:$0x1] %vm15, %v14
    %s17 = scalar_lea.vmem %s0, 11
    %v18 = vld [vmem:[%s17] sm:$0x1]
    %19 = vrot.lane.b32.xlu0 %v18, 66
    %v20 = vpop.permute.xlu0 %19
    %vm21 = vcmask 589328
    %22 = vst.msk [vmem:[#allocation0] sm:$0x1] %vm21, %v20
    %s23 = scalar_lea.vmem %s0, 10
    %v24 = vld [vmem:[%s23] sm:$0x1]
    %25 = vrot.lane.b32.xlu0 %v24, 60
    %v26 = vpop.permute.xlu0 %25
    %vm27 = vcmask 540128
    %28 = vst.msk [vmem:[#allocation0] sm:$0x1] %vm27, %v26
    %s29 = scalar_lea.vmem %s0, 9
    %v30 = vld [vmem:[%s29] sm:$0x1]
    %31 = vrot.lane.b32.xlu0 %v30, 54
    %v32 = vpop.permute.xlu0 %31
    %vm33 = vcmask 490928
    %34 = vst.msk [vmem:[#allocation0] sm:$0x1] %vm33, %v32
    %s35 = scalar_lea.vmem %s0, 8
    %v36 = vld [vmem:[%s35] sm:$0x1]
    %37 = vrot.lane.b32.xlu0 %v36, 48
    %v38 = vpop.permute.xlu0 %37
    %vm39 = vcmask 441728
    %40 = vst.msk [vmem:[#allocation0] sm:$0x1] %vm39, %v38
    %s41 = scalar_lea.vmem %s0, 7
    %v42 = vld [vmem:[%s41] sm:$0x1]
    %43 = vrot.lane.b32.xlu0 %v42, 42
    %v44 = vpop.permute.xlu0 %43
    %vm45 = vcmask 392528
    %46 = vst.msk [vmem:[#allocation0] sm:$0x1] %vm45, %v44
    %s47 = scalar_lea.vmem %s0, 6
    %v48 = vld [vmem:[%s47] sm:$0x1]
    %49 = vrot.lane.b32.xlu0 %v48, 36
    %v50 = vpop.permute.xlu0 %49
    %vm51 = vcmask 343328
    %52 = vst.msk [vmem:[#allocation0] sm:$0x1] %vm51, %v50
    %s53 = scalar_lea.vmem %s0, 5
    %v54 = vld [vmem:[%s53] sm:$0x1]
    %55 = vrot.lane.b32.xlu0 %v54, 30
    %v56 = vpop.permute.xlu0 %55
    %vm57 = vcmask 294128
    %58 = vst.msk [vmem:[#allocation0] sm:$0x1] %vm57, %v56
    %s59 = scalar_lea.vmem %s0, 4
    %v60 = vld [vmem:[%s59] sm:$0x1]
    %61 = vrot.lane.b32.xlu0 %v60, 24
    %v62 = vpop.permute.xlu0 %61
    %vm63 = vcmask 244928
    %64 = vst.msk [vmem:[#allocation0] sm:$0x1] %vm63, %v62
    %s65 = scalar_lea.vmem %s0, 3
    %v66 = vld [vmem:[%s65] sm:$0x1]
    %67 = vrot.lane.b32.xlu0 %v66, 18
    %v68 = vpop.permute.xlu0 %67
    %vm69 = vcmask 195728
    %70 = vst.msk [vmem:[#allocation0] sm:$0x1] %vm69, %v68
    %s71 = scalar_lea.vmem %s0, 2
    %v72 = vld [vmem:[%s71] sm:$0x1]
    %73 = vrot.lane.b32.xlu0 %v72, 12
    %v74 = vpop.permute.xlu0 %73
    %vm75 = vcmask 146528
    %76 = vst.msk [vmem:[#allocation0] sm:$0x1] %vm75, %v74
    %s77 = scalar_lea.vmem %s0, 1
    %v78 = vld [vmem:[%s77] sm:$0x1]
    %79 = vrot.lane.b32.xlu0 %v78, 6
    %v80 = vpop.permute.xlu0 %79
    %vm81 = vcmask 97328
    %82 = vst.msk [vmem:[#allocation0] sm:$0x1] %vm81, %v80
    %s84 = sshllo.u32 0, 1
    %v86 = vld [vmem:[#allocation0] sm:%s84]
    %s87 = sshllo.u32 0, 1
    %88 = vst [vmem:[%s1] sm:%s87] %v86

// kernel: tile.18
$region0: #{tile.18}
  #allocation0 [shape = 's32[1]{0}', space=sflag, size = 0x4, scoped, tag = 'scoped memory for tile.18']
  %s0 = inlined_call_operand.vmem [shape: f32[16], index: 0, kind: input, shape index: {}]
  %s1 = inlined_call_operand.vmem [shape: f32[5,16], index: 1, kind: output, shape index: {}]
  // Predicated region
  $region2: #{tile.18} parent=0 // pred_check
    _
  $region3: #{tile.18} parent=0 // pred_check_branch
    %3 = sbr.rel (0) target = $region5
  $region4: #{tile.18} parent=0 // pred_region
    _
  $region5: #{tile.18} parent=0 // pred_fallthru
    _
  %v4 = vld [vmem:[%s0] ss:$0 sm:$0xff]
  %5 = vst [vmem:[%s1] sm:$0xff] %v4

// kernel: tile.19
$region0: #{tile.19}
  %s0 = inlined_call_operand.vmem [shape: f32[5,16], index: 0, kind: input, shape index: {}]
  %s1 = inlined_call_operand.vmem [shape: f32[1,80], index: 1, kind: output, shape index: {}]
  $region1: #{tile.19} parent=0
    #allocation0 [shape = 'u8[4096]{0}', space=vmem, size = 0x1000, scoped, tag = 'scoped mem for output reshape']
    %v2 = vld [vmem:[%s0] sm:$0x1]
    %vm3 = vcmask 130048
    %4 = vst.msk [vmem:[#allocation0] sm:$0x1] %vm3, %v2
    %s5 = scalar_lea.vmem %s0, 4
    %v6 = vld [vmem:[%s5] sm:$0x1]
    %7 = vrot.lane.b32.xlu0 %v6, 64
    %v8 = vpop.permute.xlu0 %7
    %vm9 = vcmask 654848
    %10 = vst.msk [vmem:[#allocation0] sm:$0x1] %vm9, %v8
    %s11 = scalar_lea.vmem %s0, 3
    %v12 = vld [vmem:[%s11] sm:$0x1]
    %13 = vrot.lane.b32.xlu0 %v12, 48
    %v14 = vpop.permute.xlu0 %13
    %vm15 = vcmask 523648
    %16 = vst.msk [vmem:[#allocation0] sm:$0x1] %vm15, %v14
    %s17 = scalar_lea.vmem %s0, 2
    %v18 = vld [vmem:[%s17] sm:$0x1]
    %19 = vrot.lane.b32.xlu0 %v18, 32
    %v20 = vpop.permute.xlu0 %19
    %vm21 = vcmask 392448
    %22 = vst.msk [vmem:[#allocation0] sm:$0x1] %vm21, %v20
    %s23 = scalar_lea.vmem %s0, 1
    %v24 = vld [vmem:[%s23] sm:$0x1]
    %25 = vrot.lane.b32.xlu0 %v24, 16
    %v26 = vpop.permute.xlu0 %25
    %vm27 = vcmask 261248
    %28 = vst.msk [vmem:[#allocation0] sm:$0x1] %vm27, %v26
    %s30 = sshllo.u32 0, 1
    %v32 = vld [vmem:[#allocation0] sm:%s30]
    %s33 = sshllo.u32 0, 1
    %34 = vst [vmem:[%s1] sm:%s33] %v32

// kernel: lenet5_forward.1
$region0: #{lenet5_forward.1}
  #allocation0 [shape = 'u32[]', space=smem, size = 0x4, offset = 0x4, fixed_abs, tag = 'smem constant byte address 0x4 - core index']
  #allocation1 [shape = 'u32[144,128]{1,0:T(1,128)}', space=vmem, size = 0x12000, scoped, tag = 'internal scratch']
  %s0 = inlined_call_operand.vmem [shape: bf16[128,128], index: 0, kind: input, shape index: {}]
  %s1 = inlined_call_operand.vmem [shape: bf16[8,128,168], index: 1, kind: input, shape index: {}]
  %s2 = inlined_call_operand.vmem [shape: bf16[5,84,160], index: 2, kind: input, shape index: {}]
  %s3 = inlined_call_operand.vmem [shape: bf16[5,80,120], index: 3, kind: input, shape index: {}]
  %s4 = inlined_call_operand.vmem [shape: bf16[120,10], index: 4, kind: input, shape index: {}]
  %s5 = inlined_call_operand.vmem [shape: f32[1,84], index: 5, kind: input, shape index: {}]
  %s6 = inlined_call_operand.vmem [shape: f32[1,80], index: 6, kind: input, shape index: {}]
  %s7 = inlined_call_operand.vmem [shape: f32[1,120], index: 7, kind: input, shape index: {}]
  %s8 = inlined_call_operand.vmem [shape: f32[1,10], index: 8, kind: input, shape index: {}]
  %s9 = inlined_call_operand.vmem [shape: f32[16,10], index: 9, kind: output, shape index: {}]
  %s10 = sld [smem:[#allocation0]]
  $region46: #{lenet5_forward.1} parent=0
    _
  %s12 = ssub.s32 1, %s10
  %s13 = scalar_select 0, %s12, %s10
  // Predicated region
  $region2: #{lenet5_forward.1} parent=0 // pred_check
    _
  $region3: #{lenet5_forward.1} parent=0 // pred_check_branch
    %15 = sbr.rel (0) target = $region5
  $region4: #{lenet5_forward.1} parent=0 // pred_region
    _
  $region5: #{lenet5_forward.1} parent=0 // pred_fallthru
    _
  // Predicated region
  $region6: #{lenet5_forward.1} parent=0 // pred_check
    _
  $region7: #{lenet5_forward.1} parent=0 // pred_check_branch
    %17 = sbr.rel (0) target = $region9
  $region8: #{lenet5_forward.1} parent=0 // pred_region
    _
  $region9: #{lenet5_forward.1} parent=0 // pred_fallthru
    _
  // Predicated region
  $region10: #{lenet5_forward.1} parent=0 // pred_check
    _
  $region11: #{lenet5_forward.1} parent=0 // pred_check_branch
    %19 = sbr.rel (0) target = $region13
  $region12: #{lenet5_forward.1} parent=0 // pred_region
    _
  $region13: #{lenet5_forward.1} parent=0 // pred_fallthru
    _
  // Predicated region
  $region14: #{lenet5_forward.1} parent=0 // pred_check
    _
  $region15: #{lenet5_forward.1} parent=0 // pred_check_branch
    %21 = sbr.rel (0) target = $region17
  $region16: #{lenet5_forward.1} parent=0 // pred_region
    _
  $region17: #{lenet5_forward.1} parent=0 // pred_fallthru
    _
  // Predicated region
  $region18: #{lenet5_forward.1} parent=0 // pred_check
    _
  $region19: #{lenet5_forward.1} parent=0 // pred_check_branch
    %23 = sbr.rel (0) target = $region21
  $region20: #{lenet5_forward.1} parent=0 // pred_region
    _
  $region21: #{lenet5_forward.1} parent=0 // pred_fallthru
    _
  // Predicated region
  $region22: #{lenet5_forward.1} parent=0 // pred_check
    _
  $region23: #{lenet5_forward.1} parent=0 // pred_check_branch
    %25 = sbr.rel (0) target = $region25
  $region24: #{lenet5_forward.1} parent=0 // pred_region
    _
  $region25: #{lenet5_forward.1} parent=0 // pred_fallthru
    _
  // Predicated region
  $region26: #{lenet5_forward.1} parent=0 // pred_check
    _
  $region27: #{lenet5_forward.1} parent=0 // pred_check_branch
    %27 = sbr.rel (0) target = $region29
  $region28: #{lenet5_forward.1} parent=0 // pred_region
    _
  $region29: #{lenet5_forward.1} parent=0 // pred_fallthru
    _
  // Predicated region
  $region30: #{lenet5_forward.1} parent=0 // pred_check
    _
  $region31: #{lenet5_forward.1} parent=0 // pred_check_branch
    %29 = sbr.rel (0) target = $region33
  $region32: #{lenet5_forward.1} parent=0 // pred_region
    _
  $region33: #{lenet5_forward.1} parent=0 // pred_fallthru
    _
  // Predicated region
  $region34: #{lenet5_forward.1} parent=0 // pred_check
    _
  $region35: #{lenet5_forward.1} parent=0 // pred_check_branch
    %31 = sbr.rel (0) target = $region37
  $region36: #{lenet5_forward.1} parent=0 // pred_region
    _
  $region37: #{lenet5_forward.1} parent=0 // pred_fallthru
    _
  %v33 = vld [vmem:[%s0] sm:$0xf]
  %v34 = vld [vmem:[%s0 + $0x4] sm:$0xf]
  %v35 = vld [vmem:[%s0 + $0x8] sm:$0xf]
  %v36 = vld [vmem:[%s0 + $0xc] sm:$0xf]
  %v37 = vld [vmem:[%s0 + $0x10] sm:$0xf]
  %v38 = vld [vmem:[%s0 + $0x14] sm:$0xf]
  %v39 = vld [vmem:[%s0 + $0x18] sm:$0xf]
  %v40 = vld [vmem:[%s0 + $0x1c] sm:$0xf]
  %v41 = vld [vmem:[%s0 + $0x20] sm:$0xf]
  %v42 = vld [vmem:[%s0 + $0x24] sm:$0xf]
  %v43 = vld [vmem:[%s0 + $0x28] sm:$0xf]
  %v44 = vld [vmem:[%s0 + $0x2c] sm:$0xf]
  %v45 = vld [vmem:[%s0 + $0x30] sm:$0xf]
  %v46 = vld [vmem:[%s0 + $0x34] sm:$0xf]
  %v47 = vld [vmem:[%s0 + $0x38] sm:$0xf]
  %v48 = vld [vmem:[%s0 + $0x3c] sm:$0xf]
  %v49 = vld [vmem:[%s1] sm:$0xff]
  %v50 = vld [vmem:[%s1 + $0x8] sm:$0xff]
  %v51 = vld [vmem:[%s1 + $0x10] sm:$0xff]
  %v52 = vld [vmem:[%s1 + $0x18] sm:$0xff]
  %v53 = vld [vmem:[%s1 + $0x20] sm:$0xff]
  %v54 = vld [vmem:[%s1 + $0x28] sm:$0xff]
  %v55 = vld [vmem:[%s1 + $0x30] sm:$0xff]
  %v56 = vld [vmem:[%s1 + $0x38] sm:$0xff]
  %v57 = vld [vmem:[%s1 + $0x40] sm:$0xff]
  %v58 = vld [vmem:[%s1 + $0x48] sm:$0xff]
  %v59 = vld [vmem:[%s1 + $0x50] sm:$0xff]
  %v60 = vld [vmem:[%s1 + $0x58] sm:$0xff]
  %v61 = vld [vmem:[%s1 + $0x60] sm:$0xff]
  %v62 = vld [vmem:[%s1 + $0x68] sm:$0xff]
  %v63 = vld [vmem:[%s1 + $0x70] sm:$0xff]
  %v64 = vld [vmem:[%s1 + $0x78] sm:$0xff]
  %s65 = scalar_lea.vmem %s1, 128
  %v66 = vld [vmem:[%s65] sm:$0xff]
  %v67 = vld [vmem:[%s65 + $0x8] sm:$0xff]
  %v68 = vld [vmem:[%s65 + $0x10] sm:$0xff]
  %v69 = vld [vmem:[%s65 + $0x18] sm:$0xff]
  %v70 = vld [vmem:[%s65 + $0x20] sm:$0xff]
  %v71 = vld [vmem:[%s65 + $0x28] sm:$0xff]
  %v72 = vld [vmem:[%s65 + $0x30] sm:$0xff]
  %v73 = vld [vmem:[%s65 + $0x38] sm:$0xff]
  %v74 = vld [vmem:[%s65 + $0x40] sm:$0xff]
  %v75 = vld [vmem:[%s65 + $0x48] sm:$0xff]
  %v76 = vld [vmem:[%s65 + $0x50] sm:$0xff]
  %v77 = vld [vmem:[%s65 + $0x58] sm:$0xff]
  %v78 = vld [vmem:[%s65 + $0x60] sm:$0xff]
  %v79 = vld [vmem:[%s65 + $0x68] sm:$0xff]
  %v80 = vld [vmem:[%s65 + $0x70] sm:$0xff]
  %v81 = vld [vmem:[%s65 + $0x78] sm:$0xff]
  %v96 = vunpack.c.l.b16 %v35
  %v97 = vunpack.c.l.b16 %v36
  %v98 = vunpack.c.l.b16 %v37
  %v99 = vunpack.c.l.b16 %v38
  %v100 = vunpack.c.l.b16 %v39
  %v101 = vunpack.c.l.b16 %v40
  %v102 = vunpack.c.l.b16 %v41
  %v103 = vunpack.c.l.b16 %v42
  %v104 = vunpack.c.l.b16 %v43
  %v105 = vunpack.c.l.b16 %v44
  %v106 = vunpack.c.l.b16 %v45
  %v107 = vunpack.c.l.b16 %v46
  %v108 = vunpack.c.l.b16 %v47
  %v109 = vunpack.c.l.b16 %v48
  %v110 = vpack.c.b16 %v97, %v96
  %v111 = vpack.c.b16 %v99, %v98
  %v112 = vpack.c.b16 %v101, %v100
  %v113 = vpack.c.b16 %v103, %v102
  %v114 = vpack.c.b16 %v105, %v104
  %v115 = vpack.c.b16 %v107, %v106
  %v116 = vpack.c.b16 %v109, %v108
  %v140 = vunpack.c.l.b16 %v66
  %v141 = vunpack.c.h.b16 %v66
  %v142 = vunpack.c.l.b16 %v67
  %v143 = vunpack.c.h.b16 %v67
  %v144 = vunpack.c.l.b16 %v68
  %v145 = vunpack.c.h.b16 %v68
  %v146 = vunpack.c.l.b16 %v69
  %v147 = vunpack.c.h.b16 %v69
  %v148 = vunpack.c.l.b16 %v70
  %v149 = vunpack.c.h.b16 %v70
  %v150 = vunpack.c.l.b16 %v71
  %v151 = vunpack.c.h.b16 %v71
  %v152 = vunpack.c.l.b16 %v72
  %v153 = vunpack.c.h.b16 %v72
  %v154 = vunpack.c.l.b16 %v73
  %v155 = vunpack.c.h.b16 %v73
  %v156 = vunpack.c.l.b16 %v74
  %v157 = vunpack.c.h.b16 %v74
  %v158 = vunpack.c.l.b16 %v75
  %v159 = vunpack.c.h.b16 %v75
  %v160 = vunpack.c.l.b16 %v76
  %v161 = vunpack.c.h.b16 %v76
  %v162 = vunpack.c.l.b16 %v77
  %v163 = vunpack.c.h.b16 %v77
  %v164 = vunpack.c.l.b16 %v78
  %v165 = vunpack.c.h.b16 %v78
  %v166 = vunpack.c.l.b16 %v79
  %v167 = vunpack.c.h.b16 %v79
  %v168 = vunpack.c.l.b16 %v80
  %v169 = vunpack.c.h.b16 %v80
  %v170 = vunpack.c.l.b16 %v81
  %v171 = vunpack.c.h.b16 %v81
  %v172 = vpack.c.b16 %v142, %v140
  %v173 = vpack.c.b16 %v143, %v141
  %v174 = vpack.c.b16 %v146, %v144
  %v175 = vpack.c.b16 %v147, %v145
  %v176 = vpack.c.b16 %v150, %v148
  %v177 = vpack.c.b16 %v151, %v149
  %v178 = vpack.c.b16 %v154, %v152
  %v179 = vpack.c.b16 %v155, %v153
  %v180 = vpack.c.b16 %v158, %v156
  %v181 = vpack.c.b16 %v159, %v157
  %v182 = vpack.c.b16 %v162, %v160
  %v183 = vpack.c.b16 %v163, %v161
  %v184 = vpack.c.b16 %v166, %v164
  %v185 = vpack.c.b16 %v167, %v165
  %v186 = vpack.c.b16 %v170, %v168
  %v187 = vpack.c.b16 %v171, %v169
  %204 = vmatprep.subr.bf16.mxu0 %v173
  %205 = vmatpush1.bf16.msra.mxu0 %v172
  %206 = vmatprep.subr.bf16.mxu0 %v175
  %207 = vmatpush1.bf16.msra.mxu0 %v174
  %208 = vmatprep.subr.bf16.mxu0 %v177
  %209 = vmatpush1.bf16.msra.mxu0 %v176
  %210 = vmatprep.subr.bf16.mxu0 %v179
  %211 = vmatpush1.bf16.msra.mxu0 %v178
  %212 = vmatprep.subr.bf16.mxu0 %v181
  %213 = vmatpush1.bf16.msra.mxu0 %v180
  %214 = vmatprep.subr.bf16.mxu0 %v183
  %215 = vmatpush1.bf16.msra.mxu0 %v182
  %216 = vmatprep.subr.bf16.mxu0 %v185
  %217 = vmatpush1.bf16.msra.mxu0 %v184
  %218 = vmatprep.subr.bf16.mxu0 %v187
  %219 = vmatpush1.bf16.msra.mxu0 %v186
  %220 = vmatprep.subr.bf16.mxu0 0
  %221 = vmatpush1.bf16.msra.mxu0 0
  %222 = vmatprep.subr.bf16.mxu0 0
  %223 = vmatpush1.bf16.msra.mxu0 0
  %224 = vmatprep.subr.bf16.mxu0 0
  %225 = vmatpush1.bf16.msra.mxu0 0
  %226 = vmatprep.subr.bf16.mxu0 0
  %227 = vmatpush1.bf16.msra.mxu0 0
  %228 = vmatprep.subr.bf16.mxu0 0
  %229 = vmatpush1.bf16.msra.mxu0 0
  %230 = vmatprep.subr.bf16.mxu0 0
  %231 = vmatpush1.bf16.msra.mxu0 0
  %232 = vmatprep.subr.bf16.mxu0 0
  %233 = vmatpush1.bf16.msra.mxu0 0
  %234 = vmatprep.subr.bf16.mxu0 0
  %235 = vmatpush1.bf16.msra.mxu0 0
  %236 = vmatprep.mubr.bf16.mxu0 0
  %237 = vmatmul.mubr.bf16.gmra.mrb[0].mxu0 %v110
  %v238 = vpop.f32.mrb[0].mxu0
  %v239 = vadd.f32 0.0, %v238
  %v240 = vpop.f32.mrb[0].mxu0
  %v241 = vadd.f32 0.0, %v240
  %v242 = vpop.f32.mrb[0].mxu0
  %v243 = vadd.f32 0.0, %v242
  %v244 = vpop.f32.mrb[0].mxu0
  %v245 = vadd.f32 0.0, %v244
  %246 = vmatprep.mubr.bf16.mxu0 0
  %247 = vmatmul.mubr.bf16.gmra.mrb[0].mxu0 %v111
  %v248 = vpop.f32.mrb[0].mxu0
  %v249 = vadd.f32 0.0, %v248
  %v250 = vpop.f32.mrb[0].mxu0
  %v251 = vadd.f32 0.0, %v250
  %v252 = vpop.f32.mrb[0].mxu0
  %v253 = vadd.f32 0.0, %v252
  %v254 = vpop.f32.mrb[0].mxu0
  %v255 = vadd.f32 0.0, %v254
  %256 = vmatprep.mubr.bf16.mxu0 0
  %257 = vmatmul.mubr.bf16.gmra.mrb[0].mxu0 %v112
  %v258 = vpop.f32.mrb[0].mxu0
  %v259 = vadd.f32 0.0, %v258
  %v260 = vpop.f32.mrb[0].mxu0
  %v261 = vadd.f32 0.0, %v260
  %v262 = vpop.f32.mrb[0].mxu0
  %v263 = vadd.f32 0.0, %v262
  %v264 = vpop.f32.mrb[0].mxu0
  %v265 = vadd.f32 0.0, %v264
  %266 = vmatprep.mubr.bf16.mxu0 0
  %267 = vmatmul.mubr.bf16.gmra.mrb[0].mxu0 %v113
  %v268 = vpop.f32.mrb[0].mxu0
  %v269 = vadd.f32 0.0, %v268
  %v270 = vpop.f32.mrb[0].mxu0
  %v271 = vadd.f32 0.0, %v270
  %v272 = vpop.f32.mrb[0].mxu0
  %v273 = vadd.f32 0.0, %v272
  %v274 = vpop.f32.mrb[0].mxu0
  %v275 = vadd.f32 0.0, %v274
  %276 = vmatprep.mubr.bf16.mxu0 0
  %277 = vmatmul.mubr.bf16.gmra.mrb[0].mxu0 %v114
  %v278 = vpop.f32.mrb[0].mxu0
  %v279 = vadd.f32 0.0, %v278
  %v280 = vpop.f32.mrb[0].mxu0
  %v281 = vadd.f32 0.0, %v280
  %v282 = vpop.f32.mrb[0].mxu0
  %v283 = vadd.f32 0.0, %v282
  %v284 = vpop.f32.mrb[0].mxu0
  %v285 = vadd.f32 0.0, %v284
  %286 = vmatprep.mubr.bf16.mxu0 0
  %287 = vmatmul.mubr.bf16.gmra.mrb[0].mxu0 %v115
  %v288 = vpop.f32.mrb[0].mxu0
  %v289 = vadd.f32 0.0, %v288
  %v290 = vpop.f32.mrb[0].mxu0
  %v291 = vadd.f32 0.0, %v290
  %v292 = vpop.f32.mrb[0].mxu0
  %v293 = vadd.f32 0.0, %v292
  %v294 = vpop.f32.mrb[0].mxu0
  %v295 = vadd.f32 0.0, %v294
  %296 = vmatprep.mubr.bf16.mxu0 0
  %297 = vmatmul.mubr.bf16.gmra.mrb[0].mxu0 %v116
  %v298 = vpop.f32.mrb[0].mxu0
  %v299 = vadd.f32 0.0, %v298
  %v300 = vpop.f32.mrb[0].mxu0
  %v301 = vadd.f32 0.0, %v300
  %v302 = vpop.f32.mrb[0].mxu0
  %v303 = vadd.f32 0.0, %v302
  %v304 = vpop.f32.mrb[0].mxu0
  %v305 = vadd.f32 0.0, %v304
  %306 = vdwg.mxu0
  %v309 = vunpack.c.l.b16 %v33
  %v310 = vunpack.c.l.b16 %v34
  %v311 = vpack.c.b16 %v310, %v309
  %v329 = vunpack.c.l.b16 %v49
  %v330 = vunpack.c.h.b16 %v49
  %v331 = vunpack.c.l.b16 %v50
  %v332 = vunpack.c.h.b16 %v50
  %v333 = vunpack.c.l.b16 %v51
  %v334 = vunpack.c.h.b16 %v51
  %v335 = vunpack.c.l.b16 %v52
  %v336 = vunpack.c.h.b16 %v52
  %v337 = vunpack.c.l.b16 %v53
  %v338 = vunpack.c.h.b16 %v53
  %v339 = vunpack.c.l.b16 %v54
  %v340 = vunpack.c.h.b16 %v54
  %v341 = vunpack.c.l.b16 %v55
  %v342 = vunpack.c.h.b16 %v55
  %v343 = vunpack.c.l.b16 %v56
  %v344 = vunpack.c.h.b16 %v56
  %v345 = vunpack.c.l.b16 %v57
  %v346 = vunpack.c.h.b16 %v57
  %v347 = vunpack.c.l.b16 %v58
  %v348 = vunpack.c.h.b16 %v58
  %v349 = vunpack.c.l.b16 %v59
  %v350 = vunpack.c.h.b16 %v59
  %v351 = vunpack.c.l.b16 %v60
  %v352 = vunpack.c.h.b16 %v60
  %v353 = vunpack.c.l.b16 %v61
  %v354 = vunpack.c.h.b16 %v61
  %v355 = vunpack.c.l.b16 %v62
  %v356 = vunpack.c.h.b16 %v62
  %v357 = vunpack.c.l.b16 %v63
  %v358 = vunpack.c.h.b16 %v63
  %v359 = vunpack.c.l.b16 %v64
  %v360 = vunpack.c.h.b16 %v64
  %v361 = vpack.c.b16 %v331, %v329
  %v362 = vpack.c.b16 %v332, %v330
  %v363 = vpack.c.b16 %v335, %v333
  %v364 = vpack.c.b16 %v336, %v334
  %v365 = vpack.c.b16 %v339, %v337
  %v366 = vpack.c.b16 %v340, %v338
  %v367 = vpack.c.b16 %v343, %v341
  %v368 = vpack.c.b16 %v344, %v342
  %v369 = vpack.c.b16 %v347, %v345
  %v370 = vpack.c.b16 %v348, %v346
  %v371 = vpack.c.b16 %v351, %v349
  %v372 = vpack.c.b16 %v352, %v350
  %v373 = vpack.c.b16 %v355, %v353
  %v374 = vpack.c.b16 %v356, %v354
  %v375 = vpack.c.b16 %v359, %v357
  %v376 = vpack.c.b16 %v360, %v358
  %393 = vmatprep.subr.bf16.mxu0 %v362
  %394 = vmatpush1.bf16.msra.mxu0 %v361
  %395 = vmatprep.subr.bf16.mxu0 %v364
  %396 = vmatpush1.bf16.msra.mxu0 %v363
  %397 = vmatprep.subr.bf16.mxu0 %v366
  %398 = vmatpush1.bf16.msra.mxu0 %v365
  %399 = vmatprep.subr.bf16.mxu0 %v368
  %400 = vmatpush1.bf16.msra.mxu0 %v367
  %401 = vmatprep.subr.bf16.mxu0 %v370
  %402 = vmatpush1.bf16.msra.mxu0 %v369
  %403 = vmatprep.subr.bf16.mxu0 %v372
  %404 = vmatpush1.bf16.msra.mxu0 %v371
  %405 = vmatprep.subr.bf16.mxu0 %v374
  %406 = vmatpush1.bf16.msra.mxu0 %v373
  %407 = vmatprep.subr.bf16.mxu0 %v376
  %408 = vmatpush1.bf16.msra.mxu0 %v375
  %409 = vmatprep.subr.bf16.mxu0 0
  %410 = vmatpush1.bf16.msra.mxu0 0
  %411 = vmatprep.subr.bf16.mxu0 0
  %412 = vmatpush1.bf16.msra.mxu0 0
  %413 = vmatprep.subr.bf16.mxu0 0
  %414 = vmatpush1.bf16.msra.mxu0 0
  %415 = vmatprep.subr.bf16.mxu0 0
  %416 = vmatpush1.bf16.msra.mxu0 0
  %417 = vmatprep.subr.bf16.mxu0 0
  %418 = vmatpush1.bf16.msra.mxu0 0
  %419 = vmatprep.subr.bf16.mxu0 0
  %420 = vmatpush1.bf16.msra.mxu0 0
  %421 = vmatprep.subr.bf16.mxu0 0
  %422 = vmatpush1.bf16.msra.mxu0 0
  %423 = vmatprep.subr.bf16.mxu0 0
  %424 = vmatpush1.bf16.msra.mxu0 0
  %425 = vmatprep.mubr.bf16.mxu0 0
  %426 = vmatmul.mubr.bf16.gmra.mrb[0].mxu0 %v311
  %v427 = vpop.f32.mrb[0].mxu0
  %v428 = vadd.f32 %v239, %v427
  %v429 = vpop.f32.mrb[0].mxu0
  %v430 = vadd.f32 %v241, %v429
  %v431 = vpop.f32.mrb[0].mxu0
  %v432 = vadd.f32 %v243, %v431
  %v433 = vpop.f32.mrb[0].mxu0
  %v434 = vadd.f32 %v245, %v433
  %435 = vmatprep.mubr.bf16.mxu0 0
  %436 = vmatmul.mubr.bf16.gmra.mrb[0].mxu0 %v110
  %v437 = vpop.f32.mrb[0].mxu0
  %v438 = vadd.f32 %v249, %v437
  %v439 = vpop.f32.mrb[0].mxu0
  %v440 = vadd.f32 %v251, %v439
  %v441 = vpop.f32.mrb[0].mxu0
  %v442 = vadd.f32 %v253, %v441
  %v443 = vpop.f32.mrb[0].mxu0
  %v444 = vadd.f32 %v255, %v443
  %445 = vmatprep.mubr.bf16.mxu0 0
  %446 = vmatmul.mubr.bf16.gmra.mrb[0].mxu0 %v111
  %v447 = vpop.f32.mrb[0].mxu0
  %v448 = vadd.f32 %v259, %v447
  %v449 = vpop.f32.mrb[0].mxu0
  %v450 = vadd.f32 %v261, %v449
  %v451 = vpop.f32.mrb[0].mxu0
  %v452 = vadd.f32 %v263, %v451
  %v453 = vpop.f32.mrb[0].mxu0
  %v454 = vadd.f32 %v265, %v453
  %455 = vmatprep.mubr.bf16.mxu0 0
  %456 = vmatmul.mubr.bf16.gmra.mrb[0].mxu0 %v112
  %v457 = vpop.f32.mrb[0].mxu0
  %v458 = vadd.f32 %v269, %v457
  %v459 = vpop.f32.mrb[0].mxu0
  %v460 = vadd.f32 %v271, %v459
  %v461 = vpop.f32.mrb[0].mxu0
  %v462 = vadd.f32 %v273, %v461
  %v463 = vpop.f32.mrb[0].mxu0
  %v464 = vadd.f32 %v275, %v463
  %465 = vmatprep.mubr.bf16.mxu0 0
  %466 = vmatmul.mubr.bf16.gmra.mrb[0].mxu0 %v113
  %v467 = vpop.f32.mrb[0].mxu0
  %v468 = vadd.f32 %v279, %v467
  %v469 = vpop.f32.mrb[0].mxu0
  %v470 = vadd.f32 %v281, %v469
  %v471 = vpop.f32.mrb[0].mxu0
  %v472 = vadd.f32 %v283, %v471
  %v473 = vpop.f32.mrb[0].mxu0
  %v474 = vadd.f32 %v285, %v473
  %475 = vmatprep.mubr.bf16.mxu0 0
  %476 = vmatmul.mubr.bf16.gmra.mrb[0].mxu0 %v114
  %v477 = vpop.f32.mrb[0].mxu0
  %v478 = vadd.f32 %v289, %v477
  %v479 = vpop.f32.mrb[0].mxu0
  %v480 = vadd.f32 %v291, %v479
  %v481 = vpop.f32.mrb[0].mxu0
  %v482 = vadd.f32 %v293, %v481
  %v483 = vpop.f32.mrb[0].mxu0
  %v484 = vadd.f32 %v295, %v483
  %485 = vmatprep.mubr.bf16.mxu0 0
  %486 = vmatmul.mubr.bf16.gmra.mrb[0].mxu0 %v115
  %v487 = vpop.f32.mrb[0].mxu0
  %v488 = vadd.f32 %v299, %v487
  %v489 = vpop.f32.mrb[0].mxu0
  %v490 = vadd.f32 %v301, %v489
  %v491 = vpop.f32.mrb[0].mxu0
  %v492 = vadd.f32 %v303, %v491
  %v493 = vpop.f32.mrb[0].mxu0
  %v494 = vadd.f32 %v305, %v493
  %495 = vdwg.mxu0
  %s496 = scalar_lea.vmem %s1, 256
  %v497 = vld [vmem:[%s496] sm:$0xff]
  %v498 = vld [vmem:[%s496 + $0x8] sm:$0xff]
  %v499 = vld [vmem:[%s496 + $0x10] sm:$0xff]
  %v500 = vld [vmem:[%s496 + $0x18] sm:$0xff]
  %v501 = vld [vmem:[%s496 + $0x20] sm:$0xff]
  %v502 = vld [vmem:[%s496 + $0x28] sm:$0xff]
  %v503 = vld [vmem:[%s496 + $0x30] sm:$0xff]
  %v504 = vld [vmem:[%s496 + $0x38] sm:$0xff]
  %v505 = vld [vmem:[%s496 + $0x40] sm:$0xff]
  %v506 = vld [vmem:[%s496 + $0x48] sm:$0xff]
  %v507 = vld [vmem:[%s496 + $0x50] sm:$0xff]
  %v508 = vld [vmem:[%s496 + $0x58] sm:$0xff]
  %v509 = vld [vmem:[%s496 + $0x60] sm:$0xff]
  %v510 = vld [vmem:[%s496 + $0x68] sm:$0xff]
  %v511 = vld [vmem:[%s496 + $0x70] sm:$0xff]
  %v512 = vld [vmem:[%s496 + $0x78] sm:$0xff]
  %s513 = scalar_lea.vmem %s1, 384
  %v514 = vld [vmem:[%s513] sm:$0xff]
  %v515 = vld [vmem:[%s513 + $0x8] sm:$0xff]
  %v516 = vld [vmem:[%s513 + $0x10] sm:$0xff]
  %v517 = vld [vmem:[%s513 + $0x18] sm:$0xff]
  %v518 = vld [vmem:[%s513 + $0x20] sm:$0xff]
  %v519 = vld [vmem:[%s513 + $0x28] sm:$0xff]
  %v520 = vld [vmem:[%s513 + $0x30] sm:$0xff]
  %v521 = vld [vmem:[%s513 + $0x38] sm:$0xff]
  %v522 = vld [vmem:[%s513 + $0x40] sm:$0xff]
  %v523 = vld [vmem:[%s513 + $0x48] sm:$0xff]
  %v524 = vld [vmem:[%s513 + $0x50] sm:$0xff]
  %v525 = vld [vmem:[%s513 + $0x58] sm:$0xff]
  %v526 = vld [vmem:[%s513 + $0x60] sm:$0xff]
  %v527 = vld [vmem:[%s513 + $0x68] sm:$0xff]
  %v528 = vld [vmem:[%s513 + $0x70] sm:$0xff]
  %v529 = vld [vmem:[%s513 + $0x78] sm:$0xff]
  %v546 = vunpack.c.l.b16 %v514
  %v547 = vunpack.c.h.b16 %v514
  %v548 = vunpack.c.l.b16 %v515
  %v549 = vunpack.c.h.b16 %v515
  %v550 = vunpack.c.l.b16 %v516
  %v551 = vunpack.c.h.b16 %v516
  %v552 = vunpack.c.l.b16 %v517
  %v553 = vunpack.c.h.b16 %v517
  %v554 = vunpack.c.l.b16 %v518
  %v555 = vunpack.c.h.b16 %v518
  %v556 = vunpack.c.l.b16 %v519
  %v557 = vunpack.c.h.b16 %v519
  %v558 = vunpack.c.l.b16 %v520
  %v559 = vunpack.c.h.b16 %v520
  %v560 = vunpack.c.l.b16 %v521
  %v561 = vunpack.c.h.b16 %v521
  %v562 = vunpack.c.l.b16 %v522
  %v563 = vunpack.c.h.b16 %v522
  %v564 = vunpack.c.l.b16 %v523
  %v565 = vunpack.c.h.b16 %v523
  %v566 = vunpack.c.l.b16 %v524
  %v567 = vunpack.c.h.b16 %v524
  %v568 = vunpack.c.l.b16 %v525
  %v569 = vunpack.c.h.b16 %v525
  %v570 = vunpack.c.l.b16 %v526
  %v571 = vunpack.c.h.b16 %v526
  %v572 = vunpack.c.l.b16 %v527
  %v573 = vunpack.c.h.b16 %v527
  %v574 = vunpack.c.l.b16 %v528
  %v575 = vunpack.c.h.b16 %v528
  %v576 = vunpack.c.l.b16 %v529
  %v577 = vunpack.c.h.b16 %v529
  %v578 = vpack.c.b16 %v548, %v546
  %v579 = vpack.c.b16 %v549, %v547
  %v580 = vpack.c.b16 %v552, %v550
  %v581 = vpack.c.b16 %v553, %v551
  %v582 = vpack.c.b16 %v556, %v554
  %v583 = vpack.c.b16 %v557, %v555
  %v584 = vpack.c.b16 %v560, %v558
  %v585 = vpack.c.b16 %v561, %v559
  %v586 = vpack.c.b16 %v564, %v562
  %v587 = vpack.c.b16 %v565, %v563
  %v588 = vpack.c.b16 %v568, %v566
  %v589 = vpack.c.b16 %v569, %v567
  %v590 = vpack.c.b16 %v572, %v570
  %v591 = vpack.c.b16 %v573, %v571
  %v592 = vpack.c.b16 %v576, %v574
  %v593 = vpack.c.b16 %v577, %v575
  %610 = vmatprep.subr.bf16.mxu0 %v579
  %611 = vmatpush1.bf16.msra.mxu0 %v578
  %612 = vmatprep.subr.bf16.mxu0 %v581
  %613 = vmatpush1.bf16.msra.mxu0 %v580
  %614 = vmatprep.subr.bf16.mxu0 %v583
  %615 = vmatpush1.bf16.msra.mxu0 %v582
  %616 = vmatprep.subr.bf16.mxu0 %v585
  %617 = vmatpush1.bf16.msra.mxu0 %v584
  %618 = vmatprep.subr.bf16.mxu0 %v587
  %619 = vmatpush1.bf16.msra.mxu0 %v586
  %620 = vmatprep.subr.bf16.mxu0 %v589
  %621 = vmatpush1.bf16.msra.mxu0 %v588
  %622 = vmatprep.subr.bf16.mxu0 %v591
  %623 = vmatpush1.bf16.msra.mxu0 %v590
  %624 = vmatprep.subr.bf16.mxu0 %v593
  %625 = vmatpush1.bf16.msra.mxu0 %v592
  %626 = vmatprep.subr.bf16.mxu0 0
  %627 = vmatpush1.bf16.msra.mxu0 0
  %628 = vmatprep.subr.bf16.mxu0 0
  %629 = vmatpush1.bf16.msra.mxu0 0
  %630 = vmatprep.subr.bf16.mxu0 0
  %631 = vmatpush1.bf16.msra.mxu0 0
  %632 = vmatprep.subr.bf16.mxu0 0
  %633 = vmatpush1.bf16.msra.mxu0 0
  %634 = vmatprep.subr.bf16.mxu0 0
  %635 = vmatpush1.bf16.msra.mxu0 0
  %636 = vmatprep.subr.bf16.mxu0 0
  %637 = vmatpush1.bf16.msra.mxu0 0
  %638 = vmatprep.subr.bf16.mxu0 0
  %639 = vmatpush1.bf16.msra.mxu0 0
  %640 = vmatprep.subr.bf16.mxu0 0
  %641 = vmatpush1.bf16.msra.mxu0 0
  %642 = vmatprep.mubr.bf16.mxu0 0
  %643 = vmatmul.mubr.bf16.gmra.mrb[0].mxu0 %v110
  %v644 = vpop.f32.mrb[0].mxu0
  %v645 = vadd.f32 0.0, %v644
  %v646 = vpop.f32.mrb[0].mxu0
  %v647 = vadd.f32 0.0, %v646
  %v648 = vpop.f32.mrb[0].mxu0
  %v649 = vadd.f32 0.0, %v648
  %v650 = vpop.f32.mrb[0].mxu0
  %v651 = vadd.f32 0.0, %v650
  %652 = vmatprep.mubr.bf16.mxu0 0
  %653 = vmatmul.mubr.bf16.gmra.mrb[0].mxu0 %v111
  %v654 = vpop.f32.mrb[0].mxu0
  %v655 = vadd.f32 0.0, %v654
  %v656 = vpop.f32.mrb[0].mxu0
  %v657 = vadd.f32 0.0, %v656
  %v658 = vpop.f32.mrb[0].mxu0
  %v659 = vadd.f32 0.0, %v658
  %v660 = vpop.f32.mrb[0].mxu0
  %v661 = vadd.f32 0.0, %v660
  %662 = vmatprep.mubr.bf16.mxu0 0
  %663 = vmatmul.mubr.bf16.gmra.mrb[0].mxu0 %v112
  %v664 = vpop.f32.mrb[0].mxu0
  %v665 = vadd.f32 0.0, %v664
  %v666 = vpop.f32.mrb[0].mxu0
  %v667 = vadd.f32 0.0, %v666
  %v668 = vpop.f32.mrb[0].mxu0
  %v669 = vadd.f32 0.0, %v668
  %v670 = vpop.f32.mrb[0].mxu0
  %v671 = vadd.f32 0.0, %v670
  %672 = vmatprep.mubr.bf16.mxu0 0
  %673 = vmatmul.mubr.bf16.gmra.mrb[0].mxu0 %v113
  %v674 = vpop.f32.mrb[0].mxu0
  %v675 = vadd.f32 0.0, %v674
  %v676 = vpop.f32.mrb[0].mxu0
  %v677 = vadd.f32 0.0, %v676
  %v678 = vpop.f32.mrb[0].mxu0
  %v679 = vadd.f32 0.0, %v678
  %v680 = vpop.f32.mrb[0].mxu0
  %v681 = vadd.f32 0.0, %v680
  %682 = vmatprep.mubr.bf16.mxu0 0
  %683 = vmatmul.mubr.bf16.gmra.mrb[0].mxu0 %v114
  %v684 = vpop.f32.mrb[0].mxu0
  %v685 = vadd.f32 0.0, %v684
  %v686 = vpop.f32.mrb[0].mxu0
  %v687 = vadd.f32 0.0, %v686
  %v688 = vpop.f32.mrb[0].mxu0
  %v689 = vadd.f32 0.0, %v688
  %v690 = vpop.f32.mrb[0].mxu0
  %v691 = vadd.f32 0.0, %v690
  %692 = vmatprep.mubr.bf16.mxu0 0
  %693 = vmatmul.mubr.bf16.gmra.mrb[0].mxu0 %v115
  %v694 = vpop.f32.mrb[0].mxu0
  %v695 = vadd.f32 0.0, %v694
  %v696 = vpop.f32.mrb[0].mxu0
  %v697 = vadd.f32 0.0, %v696
  %v698 = vpop.f32.mrb[0].mxu0
  %v699 = vadd.f32 0.0, %v698
  %v700 = vpop.f32.mrb[0].mxu0
  %v701 = vadd.f32 0.0, %v700
  %702 = vmatprep.mubr.bf16.mxu0 0
  %703 = vmatmul.mubr.bf16.gmra.mrb[0].mxu0 %v116
  %v704 = vpop.f32.mrb[0].mxu0
  %v705 = vadd.f32 0.0, %v704
  %v706 = vpop.f32.mrb[0].mxu0
  %v707 = vadd.f32 0.0, %v706
  %v708 = vpop.f32.mrb[0].mxu0
  %v709 = vadd.f32 0.0, %v708
  %v710 = vpop.f32.mrb[0].mxu0
  %v711 = vadd.f32 0.0, %v710
  %712 = vdwg.mxu0
  %v729 = vunpack.c.l.b16 %v497
  %v730 = vunpack.c.h.b16 %v497
  %v731 = vunpack.c.l.b16 %v498
  %v732 = vunpack.c.h.b16 %v498
  %v733 = vunpack.c.l.b16 %v499
  %v734 = vunpack.c.h.b16 %v499
  %v735 = vunpack.c.l.b16 %v500
  %v736 = vunpack.c.h.b16 %v500
  %v737 = vunpack.c.l.b16 %v501
  %v738 = vunpack.c.h.b16 %v501
  %v739 = vunpack.c.l.b16 %v502
  %v740 = vunpack.c.h.b16 %v502
  %v741 = vunpack.c.l.b16 %v503
  %v742 = vunpack.c.h.b16 %v503
  %v743 = vunpack.c.l.b16 %v504
  %v744 = vunpack.c.h.b16 %v504
  %v745 = vunpack.c.l.b16 %v505
  %v746 = vunpack.c.h.b16 %v505
  %v747 = vunpack.c.l.b16 %v506
  %v748 = vunpack.c.h.b16 %v506
  %v749 = vunpack.c.l.b16 %v507
  %v750 = vunpack.c.h.b16 %v507
  %v751 = vunpack.c.l.b16 %v508
  %v752 = vunpack.c.h.b16 %v508
  %v753 = vunpack.c.l.b16 %v509
  %v754 = vunpack.c.h.b16 %v509
  %v755 = vunpack.c.l.b16 %v510
  %v756 = vunpack.c.h.b16 %v510
  %v757 = vunpack.c.l.b16 %v511
  %v758 = vunpack.c.h.b16 %v511
  %v759 = vunpack.c.l.b16 %v512
  %v760 = vunpack.c.h.b16 %v512
  %v761 = vpack.c.b16 %v731, %v729
  %v762 = vpack.c.b16 %v732, %v730
  %v763 = vpack.c.b16 %v735, %v733
  %v764 = vpack.c.b16 %v736, %v734
  %v765 = vpack.c.b16 %v739, %v737
  %v766 = vpack.c.b16 %v740, %v738
  %v767 = vpack.c.b16 %v743, %v741
  %v768 = vpack.c.b16 %v744, %v742
  %v769 = vpack.c.b16 %v747, %v745
  %v770 = vpack.c.b16 %v748, %v746
  %v771 = vpack.c.b16 %v751, %v749
  %v772 = vpack.c.b16 %v752, %v750
  %v773 = vpack.c.b16 %v755, %v753
  %v774 = vpack.c.b16 %v756, %v754
  %v775 = vpack.c.b16 %v759, %v757
  %v776 = vpack.c.b16 %v760, %v758
  %793 = vmatprep.subr.bf16.mxu0 %v762
  %794 = vmatpush1.bf16.msra.mxu0 %v761
  %795 = vmatprep.subr.bf16.mxu0 %v764
  %796 = vmatpush1.bf16.msra.mxu0 %v763
  %797 = vmatprep.subr.bf16.mxu0 %v766
  %798 = vmatpush1.bf16.msra.mxu0 %v765
  %799 = vmatprep.subr.bf16.mxu0 %v768
  %800 = vmatpush1.bf16.msra.mxu0 %v767
  %801 = vmatprep.subr.bf16.mxu0 %v770
  %802 = vmatpush1.bf16.msra.mxu0 %v769
  %803 = vmatprep.subr.bf16.mxu0 %v772
  %804 = vmatpush1.bf16.msra.mxu0 %v771
  %805 = vmatprep.subr.bf16.mxu0 %v774
  %806 = vmatpush1.bf16.msra.mxu0 %v773
  %807 = vmatprep.subr.bf16.mxu0 %v776
  %808 = vmatpush1.bf16.msra.mxu0 %v775
  %809 = vmatprep.subr.bf16.mxu0 0
  %810 = vmatpush1.bf16.msra.mxu0 0
  %811 = vmatprep.subr.bf16.mxu0 0
  %812 = vmatpush1.bf16.msra.mxu0 0
  %813 = vmatprep.subr.bf16.mxu0 0
  %814 = vmatpush1.bf16.msra.mxu0 0
  %815 = vmatprep.subr.bf16.mxu0 0
  %816 = vmatpush1.bf16.msra.mxu0 0
  %817 = vmatprep.subr.bf16.mxu0 0
  %818 = vmatpush1.bf16.msra.mxu0 0
  %819 = vmatprep.subr.bf16.mxu0 0
  %820 = vmatpush1.bf16.msra.mxu0 0
  %821 = vmatprep.subr.bf16.mxu0 0
  %822 = vmatpush1.bf16.msra.mxu0 0
  %823 = vmatprep.subr.bf16.mxu0 0
  %824 = vmatpush1.bf16.msra.mxu0 0
  %825 = vmatprep.mubr.bf16.mxu0 0
  %826 = vmatmul.mubr.bf16.gmra.mrb[0].mxu0 %v311
  %v827 = vpop.f32.mrb[0].mxu0
  %v828 = vadd.f32 %v645, %v827
  %v829 = vpop.f32.mrb[0].mxu0
  %v830 = vadd.f32 %v647, %v829
  %v831 = vpop.f32.mrb[0].mxu0
  %v832 = vadd.f32 %v649, %v831
  %v833 = vpop.f32.mrb[0].mxu0
  %v834 = vadd.f32 %v651, %v833
  %835 = vmatprep.mubr.bf16.mxu0 0
  %836 = vmatmul.mubr.bf16.gmra.mrb[0].mxu0 %v110
  %v837 = vpop.f32.mrb[0].mxu0
  %v838 = vadd.f32 %v655, %v837
  %v839 = vpop.f32.mrb[0].mxu0
  %v840 = vadd.f32 %v657, %v839
  %v841 = vpop.f32.mrb[0].mxu0
  %v842 = vadd.f32 %v659, %v841
  %v843 = vpop.f32.mrb[0].mxu0
  %v844 = vadd.f32 %v661, %v843
  %845 = vmatprep.mubr.bf16.mxu0 0
  %846 = vmatmul.mubr.bf16.gmra.mrb[0].mxu0 %v111
  %v847 = vpop.f32.mrb[0].mxu0
  %v848 = vadd.f32 %v665, %v847
  %v849 = vpop.f32.mrb[0].mxu0
  %v850 = vadd.f32 %v667, %v849
  %v851 = vpop.f32.mrb[0].mxu0
  %v852 = vadd.f32 %v669, %v851
  %v853 = vpop.f32.mrb[0].mxu0
  %v854 = vadd.f32 %v671, %v853
  %855 = vmatprep.mubr.bf16.mxu0 0
  %856 = vmatmul.mubr.bf16.gmra.mrb[0].mxu0 %v112
  %v857 = vpop.f32.mrb[0].mxu0
  %v858 = vadd.f32 %v675, %v857
  %v859 = vpop.f32.mrb[0].mxu0
  %v860 = vadd.f32 %v677, %v859
  %v861 = vpop.f32.mrb[0].mxu0
  %v862 = vadd.f32 %v679, %v861
  %v863 = vpop.f32.mrb[0].mxu0
  %v864 = vadd.f32 %v681, %v863
  %865 = vmatprep.mubr.bf16.mxu0 0
  %866 = vmatmul.mubr.bf16.gmra.mrb[0].mxu0 %v113
  %v867 = vpop.f32.mrb[0].mxu0
  %v868 = vadd.f32 %v685, %v867
  %v869 = vpop.f32.mrb[0].mxu0
  %v870 = vadd.f32 %v687, %v869
  %v871 = vpop.f32.mrb[0].mxu0
  %v872 = vadd.f32 %v689, %v871
  %v873 = vpop.f32.mrb[0].mxu0
  %v874 = vadd.f32 %v691, %v873
  %875 = vmatprep.mubr.bf16.mxu0 0
  %876 = vmatmul.mubr.bf16.gmra.mrb[0].mxu0 %v114
  %v877 = vpop.f32.mrb[0].mxu0
  %v878 = vadd.f32 %v695, %v877
  %v879 = vpop.f32.mrb[0].mxu0
  %v880 = vadd.f32 %v697, %v879
  %v881 = vpop.f32.mrb[0].mxu0
  %v882 = vadd.f32 %v699, %v881
  %v883 = vpop.f32.mrb[0].mxu0
  %v884 = vadd.f32 %v701, %v883
  %885 = vmatprep.mubr.bf16.mxu0 0
  %886 = vmatmul.mubr.bf16.gmra.mrb[0].mxu0 %v115
  %v887 = vpop.f32.mrb[0].mxu0
  %v888 = vadd.f32 %v705, %v887
  %v889 = vpop.f32.mrb[0].mxu0
  %v890 = vadd.f32 %v707, %v889
  %v891 = vpop.f32.mrb[0].mxu0
  %v892 = vadd.f32 %v709, %v891
  %v893 = vpop.f32.mrb[0].mxu0
  %v894 = vadd.f32 %v711, %v893
  %895 = vdwg.mxu0
  %v896 = vmax.f32 %v428, %v828
  %v897 = vmax.f32 %v430, %v830
  %v898 = vmax.f32 %v432, %v832
  %v899 = vmax.f32 %v434, %v834
  %v900 = vmax.f32 %v438, %v838
  %v901 = vmax.f32 %v440, %v840
  %v902 = vmax.f32 %v442, %v842
  %v903 = vmax.f32 %v444, %v844
  %v904 = vmax.f32 %v448, %v848
  %v905 = vmax.f32 %v450, %v850
  %v906 = vmax.f32 %v452, %v852
  %v907 = vmax.f32 %v454, %v854
  %v908 = vmax.f32 %v458, %v858
  %v909 = vmax.f32 %v460, %v860
  %v910 = vmax.f32 %v462, %v862
  %v911 = vmax.f32 %v464, %v864
  %v912 = vmax.f32 %v468, %v868
  %v913 = vmax.f32 %v470, %v870
  %v914 = vmax.f32 %v472, %v872
  %v915 = vmax.f32 %v474, %v874
  %v916 = vmax.f32 %v478, %v878
  %v917 = vmax.f32 %v480, %v880
  %v918 = vmax.f32 %v482, %v882
  %v919 = vmax.f32 %v484, %v884
  %v920 = vmax.f32 %v488, %v888
  %v921 = vmax.f32 %v490, %v890
  %v922 = vmax.f32 %v492, %v892
  %v923 = vmax.f32 %v494, %v894
  %952 = vrot.lane.b32.xlu0 %v896, 44
  %v953 = vpop.permute.xlu0 %952
  %954 = vrot.lane.b32.xlu0 %v897, 44
  %v955 = vpop.permute.xlu0 %954
  %956 = vrot.lane.b32.xlu0 %v898, 44
  %v957 = vpop.permute.xlu0 %956
  %958 = vrot.lane.b32.xlu0 %v899, 44
  %v959 = vpop.permute.xlu0 %958
  %960 = vrot.lane.b32.xlu0 %v900, 44
  %v961 = vpop.permute.xlu0 %960
  %962 = vrot.lane.b32.xlu0 %v901, 44
  %v963 = vpop.permute.xlu0 %962
  %964 = vrot.lane.b32.xlu0 %v902, 44
  %v965 = vpop.permute.xlu0 %964
  %966 = vrot.lane.b32.xlu0 %v903, 44
  %v967 = vpop.permute.xlu0 %966
  %968 = vrot.lane.b32.xlu0 %v904, 44
  %v969 = vpop.permute.xlu0 %968
  %970 = vrot.lane.b32.xlu0 %v905, 44
  %v971 = vpop.permute.xlu0 %970
  %972 = vrot.lane.b32.xlu0 %v906, 44
  %v973 = vpop.permute.xlu0 %972
  %974 = vrot.lane.b32.xlu0 %v907, 44
  %v975 = vpop.permute.xlu0 %974
  %976 = vrot.lane.b32.xlu0 %v908, 44
  %v977 = vpop.permute.xlu0 %976
  %978 = vrot.lane.b32.xlu0 %v909, 44
  %v979 = vpop.permute.xlu0 %978
  %980 = vrot.lane.b32.xlu0 %v910, 44
  %v981 = vpop.permute.xlu0 %980
  %982 = vrot.lane.b32.xlu0 %v911, 44
  %v983 = vpop.permute.xlu0 %982
  %984 = vrot.lane.b32.xlu0 %v912, 44
  %v985 = vpop.permute.xlu0 %984
  %986 = vrot.lane.b32.xlu0 %v913, 44
  %v987 = vpop.permute.xlu0 %986
  %988 = vrot.lane.b32.xlu0 %v914, 44
  %v989 = vpop.permute.xlu0 %988
  %990 = vrot.lane.b32.xlu0 %v915, 44
  %v991 = vpop.permute.xlu0 %990
  %992 = vrot.lane.b32.xlu0 %v916, 44
  %v993 = vpop.permute.xlu0 %992
  %994 = vrot.lane.b32.xlu0 %v917, 44
  %v995 = vpop.permute.xlu0 %994
  %996 = vrot.lane.b32.xlu0 %v918, 44
  %v997 = vpop.permute.xlu0 %996
  %998 = vrot.lane.b32.xlu0 %v919, 44
  %v999 = vpop.permute.xlu0 %998
  %1000 = vrot.lane.b32.xlu0 %v920, 44
  %v1001 = vpop.permute.xlu0 %1000
  %1002 = vrot.lane.b32.xlu0 %v921, 44
  %v1003 = vpop.permute.xlu0 %1002
  %1004 = vrot.lane.b32.xlu0 %v922, 44
  %v1005 = vpop.permute.xlu0 %1004
  %1006 = vrot.lane.b32.xlu0 %v923, 44
  %v1007 = vpop.permute.xlu0 %1006
  %vm1008 = vcmask 359424
  %v1009 = vsel %vm1008, %v953, %v955
  %v1010 = vsel %vm1008, %v957, %v959
  %v1011 = vsel %vm1008, %v961, %v963
  %v1012 = vsel %vm1008, %v965, %v967
  %v1013 = vsel %vm1008, %v969, %v971
  %v1014 = vsel %vm1008, %v973, %v975
  %v1015 = vsel %vm1008, %v977, %v979
  %v1016 = vsel %vm1008, %v981, %v983
  %v1017 = vsel %vm1008, %v985, %v987
  %v1018 = vsel %vm1008, %v989, %v991
  %v1019 = vsel %vm1008, %v993, %v995
  %v1020 = vsel %vm1008, %v997, %v999
  %v1021 = vsel %vm1008, %v1001, %v1003
  %v1022 = vsel %vm1008, %v1005, %v1007
  %v1037 = vmax.f32 %v896, %v1009
  %v1038 = vmax.f32 %v898, %v1010
  %v1039 = vmax.f32 %v900, %v1011
  %v1040 = vmax.f32 %v902, %v1012
  %v1041 = vmax.f32 %v904, %v1013
  %v1042 = vmax.f32 %v906, %v1014
  %v1043 = vmax.f32 %v908, %v1015
  %v1044 = vmax.f32 %v910, %v1016
  %v1045 = vmax.f32 %v912, %v1017
  %v1046 = vmax.f32 %v914, %v1018
  %v1047 = vmax.f32 %v916, %v1019
  %v1048 = vmax.f32 %v918, %v1020
  %v1049 = vmax.f32 %v920, %v1021
  %v1050 = vmax.f32 %v922, %v1022
  %v1051 = vld [vmem:[%s5] sm:$0x1]
  %v1053 = vlaneseq
  %v1054 = vshrl.u32 %v1053, 7
  %v1055 = vsub.s32 0, %v1054
  %v1056 = vrot.slane %v1051, %v1055
  %v1058 = vadd.f32 %v1037, %v1056
  %v1059 = vadd.f32 %v1038, %v1056
  %v1060 = vadd.f32 %v1039, %v1056
  %v1061 = vadd.f32 %v1040, %v1056
  %v1062 = vadd.f32 %v1041, %v1056
  %v1063 = vadd.f32 %v1042, %v1056
  %v1064 = vadd.f32 %v1043, %v1056
  %v1065 = vadd.f32 %v1044, %v1056
  %v1066 = vadd.f32 %v1045, %v1056
  %v1067 = vadd.f32 %v1046, %v1056
  %v1068 = vadd.f32 %v1047, %v1056
  %v1069 = vadd.f32 %v1048, %v1056
  %v1070 = vadd.f32 %v1049, %v1056
  %v1071 = vadd.f32 %v1050, %v1056
  %v1072 = vmax.f32 %v1058, 0.0
  %v1073 = vmax.f32 %v1059, 0.0
  %v1074 = vmax.f32 %v1060, 0.0
  %v1075 = vmax.f32 %v1061, 0.0
  %v1076 = vmax.f32 %v1062, 0.0
  %v1077 = vmax.f32 %v1063, 0.0
  %v1078 = vmax.f32 %v1064, 0.0
  %v1079 = vmax.f32 %v1065, 0.0
  %v1080 = vmax.f32 %v1066, 0.0
  %v1081 = vmax.f32 %v1067, 0.0
  %v1082 = vmax.f32 %v1068, 0.0
  %v1083 = vmax.f32 %v1069, 0.0
  %v1084 = vmax.f32 %v1070, 0.0
  %v1085 = vmax.f32 %v1071, 0.0
  %v1086 = vpack.c.bf16 %v1073, %v1072
  %v1087 = vpack.c.bf16 %v1075, %v1074
  %v1088 = vpack.c.bf16 %v1077, %v1076
  %v1089 = vpack.c.bf16 %v1079, %v1078
  %v1090 = vpack.c.bf16 %v1081, %v1080
  %v1091 = vpack.c.bf16 %v1083, %v1082
  %v1092 = vpack.c.bf16 %v1085, %v1084
  %s1093 = scalar_lea.vmem %s1, 512
  %v1094 = vld [vmem:[%s1093] sm:$0xff]
  %v1095 = vld [vmem:[%s1093 + $0x8] sm:$0xff]
  %v1096 = vld [vmem:[%s1093 + $0x10] sm:$0xff]
  %v1097 = vld [vmem:[%s1093 + $0x18] sm:$0xff]
  %v1098 = vld [vmem:[%s1093 + $0x20] sm:$0xff]
  %v1099 = vld [vmem:[%s1093 + $0x28] sm:$0xff]
  %v1100 = vld [vmem:[%s1093 + $0x30] sm:$0xff]
  %v1101 = vld [vmem:[%s1093 + $0x38] sm:$0xff]
  %v1102 = vld [vmem:[%s1093 + $0x40] sm:$0xff]
  %v1103 = vld [vmem:[%s1093 + $0x48] sm:$0xff]
  %v1104 = vld [vmem:[%s1093 + $0x50] sm:$0xff]
  %v1105 = vld [vmem:[%s1093 + $0x58] sm:$0xff]
  %v1106 = vld [vmem:[%s1093 + $0x60] sm:$0xff]
  %v1107 = vld [vmem:[%s1093 + $0x68] sm:$0xff]
  %v1108 = vld [vmem:[%s1093 + $0x70] sm:$0xff]
  %v1109 = vld [vmem:[%s1093 + $0x78] sm:$0xff]
  %s1110 = scalar_lea.vmem %s1, 640
  %v1111 = vld [vmem:[%s1110] sm:$0xff]
  %v1112 = vld [vmem:[%s1110 + $0x8] sm:$0xff]
  %v1113 = vld [vmem:[%s1110 + $0x10] sm:$0xff]
  %v1114 = vld [vmem:[%s1110 + $0x18] sm:$0xff]
  %v1115 = vld [vmem:[%s1110 + $0x20] sm:$0xff]
  %v1116 = vld [vmem:[%s1110 + $0x28] sm:$0xff]
  %v1117 = vld [vmem:[%s1110 + $0x30] sm:$0xff]
  %v1118 = vld [vmem:[%s1110 + $0x38] sm:$0xff]
  %v1119 = vld [vmem:[%s1110 + $0x40] sm:$0xff]
  %v1120 = vld [vmem:[%s1110 + $0x48] sm:$0xff]
  %v1121 = vld [vmem:[%s1110 + $0x50] sm:$0xff]
  %v1122 = vld [vmem:[%s1110 + $0x58] sm:$0xff]
  %v1123 = vld [vmem:[%s1110 + $0x60] sm:$0xff]
  %v1124 = vld [vmem:[%s1110 + $0x68] sm:$0xff]
  %v1125 = vld [vmem:[%s1110 + $0x70] sm:$0xff]
  %v1126 = vld [vmem:[%s1110 + $0x78] sm:$0xff]
  %v1143 = vunpack.c.l.b16 %v1111
  %v1144 = vunpack.c.h.b16 %v1111
  %v1145 = vunpack.c.l.b16 %v1112
  %v1146 = vunpack.c.h.b16 %v1112
  %v1147 = vunpack.c.l.b16 %v1113
  %v1148 = vunpack.c.h.b16 %v1113
  %v1149 = vunpack.c.l.b16 %v1114
  %v1150 = vunpack.c.h.b16 %v1114
  %v1151 = vunpack.c.l.b16 %v1115
  %v1152 = vunpack.c.h.b16 %v1115
  %v1153 = vunpack.c.l.b16 %v1116
  %v1154 = vunpack.c.h.b16 %v1116
  %v1155 = vunpack.c.l.b16 %v1117
  %v1156 = vunpack.c.h.b16 %v1117
  %v1157 = vunpack.c.l.b16 %v1118
  %v1158 = vunpack.c.h.b16 %v1118
  %v1159 = vunpack.c.l.b16 %v1119
  %v1160 = vunpack.c.h.b16 %v1119
  %v1161 = vunpack.c.l.b16 %v1120
  %v1162 = vunpack.c.h.b16 %v1120
  %v1163 = vunpack.c.l.b16 %v1121
  %v1164 = vunpack.c.h.b16 %v1121
  %v1165 = vunpack.c.l.b16 %v1122
  %v1166 = vunpack.c.h.b16 %v1122
  %v1167 = vunpack.c.l.b16 %v1123
  %v1168 = vunpack.c.h.b16 %v1123
  %v1169 = vunpack.c.l.b16 %v1124
  %v1170 = vunpack.c.h.b16 %v1124
  %v1171 = vunpack.c.l.b16 %v1125
  %v1172 = vunpack.c.h.b16 %v1125
  %v1173 = vunpack.c.l.b16 %v1126
  %v1174 = vunpack.c.h.b16 %v1126
  %v1175 = vpack.c.b16 %v1145, %v1143
  %v1176 = vpack.c.b16 %v1146, %v1144
  %v1177 = vpack.c.b16 %v1149, %v1147
  %v1178 = vpack.c.b16 %v1150, %v1148
  %v1179 = vpack.c.b16 %v1153, %v1151
  %v1180 = vpack.c.b16 %v1154, %v1152
  %v1181 = vpack.c.b16 %v1157, %v1155
  %v1182 = vpack.c.b16 %v1158, %v1156
  %v1183 = vpack.c.b16 %v1161, %v1159
  %v1184 = vpack.c.b16 %v1162, %v1160
  %v1185 = vpack.c.b16 %v1165, %v1163
  %v1186 = vpack.c.b16 %v1166, %v1164
  %v1187 = vpack.c.b16 %v1169, %v1167
  %v1188 = vpack.c.b16 %v1170, %v1168
  %v1189 = vpack.c.b16 %v1173, %v1171
  %v1190 = vpack.c.b16 %v1174, %v1172
  %1207 = vmatprep.subr.bf16.mxu0 %v1176
  %1208 = vmatpush1.bf16.msra.mxu0 %v1175
  %1209 = vmatprep.subr.bf16.mxu0 %v1178
  %1210 = vmatpush1.bf16.msra.mxu0 %v1177
  %1211 = vmatprep.subr.bf16.mxu0 %v1180
  %1212 = vmatpush1.bf16.msra.mxu0 %v1179
  %1213 = vmatprep.subr.bf16.mxu0 %v1182
  %1214 = vmatpush1.bf16.msra.mxu0 %v1181
  %1215 = vmatprep.subr.bf16.mxu0 %v1184
  %1216 = vmatpush1.bf16.msra.mxu0 %v1183
  %1217 = vmatprep.subr.bf16.mxu0 %v1186
  %1218 = vmatpush1.bf16.msra.mxu0 %v1185
  %1219 = vmatprep.subr.bf16.mxu0 %v1188
  %1220 = vmatpush1.bf16.msra.mxu0 %v1187
  %1221 = vmatprep.subr.bf16.mxu0 %v1190
  %1222 = vmatpush1.bf16.msra.mxu0 %v1189
  %1223 = vmatprep.subr.bf16.mxu0 0
  %1224 = vmatpush1.bf16.msra.mxu0 0
  %1225 = vmatprep.subr.bf16.mxu0 0
  %1226 = vmatpush1.bf16.msra.mxu0 0
  %1227 = vmatprep.subr.bf16.mxu0 0
  %1228 = vmatpush1.bf16.msra.mxu0 0
  %1229 = vmatprep.subr.bf16.mxu0 0
  %1230 = vmatpush1.bf16.msra.mxu0 0
  %1231 = vmatprep.subr.bf16.mxu0 0
  %1232 = vmatpush1.bf16.msra.mxu0 0
  %1233 = vmatprep.subr.bf16.mxu0 0
  %1234 = vmatpush1.bf16.msra.mxu0 0
  %1235 = vmatprep.subr.bf16.mxu0 0
  %1236 = vmatpush1.bf16.msra.mxu0 0
  %1237 = vmatprep.subr.bf16.mxu0 0
  %1238 = vmatpush1.bf16.msra.mxu0 0
  %1239 = vmatprep.mubr.bf16.mxu0 0
  %1240 = vmatmul.mubr.bf16.gmra.mrb[0].mxu0 %v110
  %v1241 = vpop.f32.mrb[0].mxu0
  %v1242 = vadd.f32 0.0, %v1241
  %v1243 = vpop.f32.mrb[0].mxu0
  %v1244 = vadd.f32 0.0, %v1243
  %v1245 = vpop.f32.mrb[0].mxu0
  %v1246 = vadd.f32 0.0, %v1245
  %v1247 = vpop.f32.mrb[0].mxu0
  %v1248 = vadd.f32 0.0, %v1247
  %1249 = vmatprep.mubr.bf16.mxu0 0
  %1250 = vmatmul.mubr.bf16.gmra.mrb[0].mxu0 %v111
  %v1251 = vpop.f32.mrb[0].mxu0
  %v1252 = vadd.f32 0.0, %v1251
  %v1253 = vpop.f32.mrb[0].mxu0
  %v1254 = vadd.f32 0.0, %v1253
  %v1255 = vpop.f32.mrb[0].mxu0
  %v1256 = vadd.f32 0.0, %v1255
  %v1257 = vpop.f32.mrb[0].mxu0
  %v1258 = vadd.f32 0.0, %v1257
  %1259 = vmatprep.mubr.bf16.mxu0 0
  %1260 = vmatmul.mubr.bf16.gmra.mrb[0].mxu0 %v112
  %v1261 = vpop.f32.mrb[0].mxu0
  %v1262 = vadd.f32 0.0, %v1261
  %v1263 = vpop.f32.mrb[0].mxu0
  %v1264 = vadd.f32 0.0, %v1263
  %v1265 = vpop.f32.mrb[0].mxu0
  %v1266 = vadd.f32 0.0, %v1265
  %v1267 = vpop.f32.mrb[0].mxu0
  %v1268 = vadd.f32 0.0, %v1267
  %1269 = vmatprep.mubr.bf16.mxu0 0
  %1270 = vmatmul.mubr.bf16.gmra.mrb[0].mxu0 %v113
  %v1271 = vpop.f32.mrb[0].mxu0
  %v1272 = vadd.f32 0.0, %v1271
  %v1273 = vpop.f32.mrb[0].mxu0
  %v1274 = vadd.f32 0.0, %v1273
  %v1275 = vpop.f32.mrb[0].mxu0
  %v1276 = vadd.f32 0.0, %v1275
  %v1277 = vpop.f32.mrb[0].mxu0
  %v1278 = vadd.f32 0.0, %v1277
  %1279 = vmatprep.mubr.bf16.mxu0 0
  %1280 = vmatmul.mubr.bf16.gmra.mrb[0].mxu0 %v114
  %v1281 = vpop.f32.mrb[0].mxu0
  %v1282 = vadd.f32 0.0, %v1281
  %v1283 = vpop.f32.mrb[0].mxu0
  %v1284 = vadd.f32 0.0, %v1283
  %v1285 = vpop.f32.mrb[0].mxu0
  %v1286 = vadd.f32 0.0, %v1285
  %v1287 = vpop.f32.mrb[0].mxu0
  %v1288 = vadd.f32 0.0, %v1287
  %1289 = vmatprep.mubr.bf16.mxu0 0
  %1290 = vmatmul.mubr.bf16.gmra.mrb[0].mxu0 %v115
  %v1291 = vpop.f32.mrb[0].mxu0
  %v1292 = vadd.f32 0.0, %v1291
  %v1293 = vpop.f32.mrb[0].mxu0
  %v1294 = vadd.f32 0.0, %v1293
  %v1295 = vpop.f32.mrb[0].mxu0
  %v1296 = vadd.f32 0.0, %v1295
  %v1297 = vpop.f32.mrb[0].mxu0
  %v1298 = vadd.f32 0.0, %v1297
  %1299 = vmatprep.mubr.bf16.mxu0 0
  %1300 = vmatmul.mubr.bf16.gmra.mrb[0].mxu0 %v116
  %v1301 = vpop.f32.mrb[0].mxu0
  %v1302 = vadd.f32 0.0, %v1301
  %v1303 = vpop.f32.mrb[0].mxu0
  %v1304 = vadd.f32 0.0, %v1303
  %v1305 = vpop.f32.mrb[0].mxu0
  %v1306 = vadd.f32 0.0, %v1305
  %v1307 = vpop.f32.mrb[0].mxu0
  %v1308 = vadd.f32 0.0, %v1307
  %1309 = vdwg.mxu0
  %v1326 = vunpack.c.l.b16 %v1094
  %v1327 = vunpack.c.h.b16 %v1094
  %v1328 = vunpack.c.l.b16 %v1095
  %v1329 = vunpack.c.h.b16 %v1095
  %v1330 = vunpack.c.l.b16 %v1096
  %v1331 = vunpack.c.h.b16 %v1096
  %v1332 = vunpack.c.l.b16 %v1097
  %v1333 = vunpack.c.h.b16 %v1097
  %v1334 = vunpack.c.l.b16 %v1098
  %v1335 = vunpack.c.h.b16 %v1098
  %v1336 = vunpack.c.l.b16 %v1099
  %v1337 = vunpack.c.h.b16 %v1099
  %v1338 = vunpack.c.l.b16 %v1100
  %v1339 = vunpack.c.h.b16 %v1100
  %v1340 = vunpack.c.l.b16 %v1101
  %v1341 = vunpack.c.h.b16 %v1101
  %v1342 = vunpack.c.l.b16 %v1102
  %v1343 = vunpack.c.h.b16 %v1102
  %v1344 = vunpack.c.l.b16 %v1103
  %v1345 = vunpack.c.h.b16 %v1103
  %v1346 = vunpack.c.l.b16 %v1104
  %v1347 = vunpack.c.h.b16 %v1104
  %v1348 = vunpack.c.l.b16 %v1105
  %v1349 = vunpack.c.h.b16 %v1105
  %v1350 = vunpack.c.l.b16 %v1106
  %v1351 = vunpack.c.h.b16 %v1106
  %v1352 = vunpack.c.l.b16 %v1107
  %v1353 = vunpack.c.h.b16 %v1107
  %v1354 = vunpack.c.l.b16 %v1108
  %v1355 = vunpack.c.h.b16 %v1108
  %v1356 = vunpack.c.l.b16 %v1109
  %v1357 = vunpack.c.h.b16 %v1109
  %v1358 = vpack.c.b16 %v1328, %v1326
  %v1359 = vpack.c.b16 %v1329, %v1327
  %v1360 = vpack.c.b16 %v1332, %v1330
  %v1361 = vpack.c.b16 %v1333, %v1331
  %v1362 = vpack.c.b16 %v1336, %v1334
  %v1363 = vpack.c.b16 %v1337, %v1335
  %v1364 = vpack.c.b16 %v1340, %v1338
  %v1365 = vpack.c.b16 %v1341, %v1339
  %v1366 = vpack.c.b16 %v1344, %v1342
  %v1367 = vpack.c.b16 %v1345, %v1343
  %v1368 = vpack.c.b16 %v1348, %v1346
  %v1369 = vpack.c.b16 %v1349, %v1347
  %v1370 = vpack.c.b16 %v1352, %v1350
  %v1371 = vpack.c.b16 %v1353, %v1351
  %v1372 = vpack.c.b16 %v1356, %v1354
  %v1373 = vpack.c.b16 %v1357, %v1355
  %1390 = vmatprep.subr.bf16.mxu0 %v1359
  %1391 = vmatpush1.bf16.msra.mxu0 %v1358
  %1392 = vmatprep.subr.bf16.mxu0 %v1361
  %1393 = vmatpush1.bf16.msra.mxu0 %v1360
  %1394 = vmatprep.subr.bf16.mxu0 %v1363
  %1395 = vmatpush1.bf16.msra.mxu0 %v1362
  %1396 = vmatprep.subr.bf16.mxu0 %v1365
  %1397 = vmatpush1.bf16.msra.mxu0 %v1364
  %1398 = vmatprep.subr.bf16.mxu0 %v1367
  %1399 = vmatpush1.bf16.msra.mxu0 %v1366
  %1400 = vmatprep.subr.bf16.mxu0 %v1369
  %1401 = vmatpush1.bf16.msra.mxu0 %v1368
  %1402 = vmatprep.subr.bf16.mxu0 %v1371
  %1403 = vmatpush1.bf16.msra.mxu0 %v1370
  %1404 = vmatprep.subr.bf16.mxu0 %v1373
  %1405 = vmatpush1.bf16.msra.mxu0 %v1372
  %1406 = vmatprep.subr.bf16.mxu0 0
  %1407 = vmatpush1.bf16.msra.mxu0 0
  %1408 = vmatprep.subr.bf16.mxu0 0
  %1409 = vmatpush1.bf16.msra.mxu0 0
  %1410 = vmatprep.subr.bf16.mxu0 0
  %1411 = vmatpush1.bf16.msra.mxu0 0
  %1412 = vmatprep.subr.bf16.mxu0 0
  %1413 = vmatpush1.bf16.msra.mxu0 0
  %1414 = vmatprep.subr.bf16.mxu0 0
  %1415 = vmatpush1.bf16.msra.mxu0 0
  %1416 = vmatprep.subr.bf16.mxu0 0
  %1417 = vmatpush1.bf16.msra.mxu0 0
  %1418 = vmatprep.subr.bf16.mxu0 0
  %1419 = vmatpush1.bf16.msra.mxu0 0
  %1420 = vmatprep.subr.bf16.mxu0 0
  %1421 = vmatpush1.bf16.msra.mxu0 0
  %1422 = vmatprep.mubr.bf16.mxu0 0
  %1423 = vmatmul.mubr.bf16.gmra.mrb[0].mxu0 %v311
  %v1424 = vpop.f32.mrb[0].mxu0
  %v1425 = vadd.f32 %v1242, %v1424
  %v1426 = vpop.f32.mrb[0].mxu0
  %v1427 = vadd.f32 %v1244, %v1426
  %v1428 = vpop.f32.mrb[0].mxu0
  %v1429 = vadd.f32 %v1246, %v1428
  %v1430 = vpop.f32.mrb[0].mxu0
  %v1431 = vadd.f32 %v1248, %v1430
  %1432 = vmatprep.mubr.bf16.mxu0 0
  %1433 = vmatmul.mubr.bf16.gmra.mrb[0].mxu0 %v110
  %v1434 = vpop.f32.mrb[0].mxu0
  %v1435 = vadd.f32 %v1252, %v1434
  %v1436 = vpop.f32.mrb[0].mxu0
  %v1437 = vadd.f32 %v1254, %v1436
  %v1438 = vpop.f32.mrb[0].mxu0
  %v1439 = vadd.f32 %v1256, %v1438
  %v1440 = vpop.f32.mrb[0].mxu0
  %v1441 = vadd.f32 %v1258, %v1440
  %1442 = vmatprep.mubr.bf16.mxu0 0
  %1443 = vmatmul.mubr.bf16.gmra.mrb[0].mxu0 %v111
  %v1444 = vpop.f32.mrb[0].mxu0
  %v1445 = vadd.f32 %v1262, %v1444
  %v1446 = vpop.f32.mrb[0].mxu0
  %v1447 = vadd.f32 %v1264, %v1446
  %v1448 = vpop.f32.mrb[0].mxu0
  %v1449 = vadd.f32 %v1266, %v1448
  %v1450 = vpop.f32.mrb[0].mxu0
  %v1451 = vadd.f32 %v1268, %v1450
  %1452 = vmatprep.mubr.bf16.mxu0 0
  %1453 = vmatmul.mubr.bf16.gmra.mrb[0].mxu0 %v112
  %v1454 = vpop.f32.mrb[0].mxu0
  %v1455 = vadd.f32 %v1272, %v1454
  %v1456 = vpop.f32.mrb[0].mxu0
  %v1457 = vadd.f32 %v1274, %v1456
  %v1458 = vpop.f32.mrb[0].mxu0
  %v1459 = vadd.f32 %v1276, %v1458
  %v1460 = vpop.f32.mrb[0].mxu0
  %v1461 = vadd.f32 %v1278, %v1460
  %1462 = vmatprep.mubr.bf16.mxu0 0
  %1463 = vmatmul.mubr.bf16.gmra.mrb[0].mxu0 %v113
  %v1464 = vpop.f32.mrb[0].mxu0
  %v1465 = vadd.f32 %v1282, %v1464
  %v1466 = vpop.f32.mrb[0].mxu0
  %v1467 = vadd.f32 %v1284, %v1466
  %v1468 = vpop.f32.mrb[0].mxu0
  %v1469 = vadd.f32 %v1286, %v1468
  %v1470 = vpop.f32.mrb[0].mxu0
  %v1471 = vadd.f32 %v1288, %v1470
  %1472 = vmatprep.mubr.bf16.mxu0 0
  %1473 = vmatmul.mubr.bf16.gmra.mrb[0].mxu0 %v114
  %v1474 = vpop.f32.mrb[0].mxu0
  %v1475 = vadd.f32 %v1292, %v1474
  %v1476 = vpop.f32.mrb[0].mxu0
  %v1477 = vadd.f32 %v1294, %v1476
  %v1478 = vpop.f32.mrb[0].mxu0
  %v1479 = vadd.f32 %v1296, %v1478
  %v1480 = vpop.f32.mrb[0].mxu0
  %v1481 = vadd.f32 %v1298, %v1480
  %1482 = vmatprep.mubr.bf16.mxu0 0
  %1483 = vmatmul.mubr.bf16.gmra.mrb[0].mxu0 %v115
  %v1484 = vpop.f32.mrb[0].mxu0
  %v1485 = vadd.f32 %v1302, %v1484
  %v1486 = vpop.f32.mrb[0].mxu0
  %v1487 = vadd.f32 %v1304, %v1486
  %v1488 = vpop.f32.mrb[0].mxu0
  %v1489 = vadd.f32 %v1306, %v1488
  %v1490 = vpop.f32.mrb[0].mxu0
  %v1491 = vadd.f32 %v1308, %v1490
  %1492 = vdwg.mxu0
  %s1493 = scalar_lea.vmem %s1, 768
  %v1494 = vld [vmem:[%s1493] sm:$0xff]
  %v1495 = vld [vmem:[%s1493 + $0x8] sm:$0xff]
  %v1496 = vld [vmem:[%s1493 + $0x10] sm:$0xff]
  %v1497 = vld [vmem:[%s1493 + $0x18] sm:$0xff]
  %v1498 = vld [vmem:[%s1493 + $0x20] sm:$0xff]
  %v1499 = vld [vmem:[%s1493 + $0x28] sm:$0xff]
  %v1500 = vld [vmem:[%s1493 + $0x30] sm:$0xff]
  %v1501 = vld [vmem:[%s1493 + $0x38] sm:$0xff]
  %v1502 = vld [vmem:[%s1493 + $0x40] sm:$0xff]
  %v1503 = vld [vmem:[%s1493 + $0x48] sm:$0xff]
  %v1504 = vld [vmem:[%s1493 + $0x50] sm:$0xff]
  %v1505 = vld [vmem:[%s1493 + $0x58] sm:$0xff]
  %v1506 = vld [vmem:[%s1493 + $0x60] sm:$0xff]
  %v1507 = vld [vmem:[%s1493 + $0x68] sm:$0xff]
  %v1508 = vld [vmem:[%s1493 + $0x70] sm:$0xff]
  %v1509 = vld [vmem:[%s1493 + $0x78] sm:$0xff]
  %s1510 = scalar_lea.vmem %s1, 896
  %v1511 = vld [vmem:[%s1510] sm:$0xff]
  %v1512 = vld [vmem:[%s1510 + $0x8] sm:$0xff]
  %v1513 = vld [vmem:[%s1510 + $0x10] sm:$0xff]
  %v1514 = vld [vmem:[%s1510 + $0x18] sm:$0xff]
  %v1515 = vld [vmem:[%s1510 + $0x20] sm:$0xff]
  %v1516 = vld [vmem:[%s1510 + $0x28] sm:$0xff]
  %v1517 = vld [vmem:[%s1510 + $0x30] sm:$0xff]
  %v1518 = vld [vmem:[%s1510 + $0x38] sm:$0xff]
  %v1519 = vld [vmem:[%s1510 + $0x40] sm:$0xff]
  %v1520 = vld [vmem:[%s1510 + $0x48] sm:$0xff]
  %v1521 = vld [vmem:[%s1510 + $0x50] sm:$0xff]
  %v1522 = vld [vmem:[%s1510 + $0x58] sm:$0xff]
  %v1523 = vld [vmem:[%s1510 + $0x60] sm:$0xff]
  %v1524 = vld [vmem:[%s1510 + $0x68] sm:$0xff]
  %v1525 = vld [vmem:[%s1510 + $0x70] sm:$0xff]
  %v1526 = vld [vmem:[%s1510 + $0x78] sm:$0xff]
  %v1543 = vunpack.c.l.b16 %v1511
  %v1544 = vunpack.c.h.b16 %v1511
  %v1545 = vunpack.c.l.b16 %v1512
  %v1546 = vunpack.c.h.b16 %v1512
  %v1547 = vunpack.c.l.b16 %v1513
  %v1548 = vunpack.c.h.b16 %v1513
  %v1549 = vunpack.c.l.b16 %v1514
  %v1550 = vunpack.c.h.b16 %v1514
  %v1551 = vunpack.c.l.b16 %v1515
  %v1552 = vunpack.c.h.b16 %v1515
  %v1553 = vunpack.c.l.b16 %v1516
  %v1554 = vunpack.c.h.b16 %v1516
  %v1555 = vunpack.c.l.b16 %v1517
  %v1556 = vunpack.c.h.b16 %v1517
  %v1557 = vunpack.c.l.b16 %v1518
  %v1558 = vunpack.c.h.b16 %v1518
  %v1559 = vunpack.c.l.b16 %v1519
  %v1560 = vunpack.c.h.b16 %v1519
  %v1561 = vunpack.c.l.b16 %v1520
  %v1562 = vunpack.c.h.b16 %v1520
  %v1563 = vunpack.c.l.b16 %v1521
  %v1564 = vunpack.c.h.b16 %v1521
  %v1565 = vunpack.c.l.b16 %v1522
  %v1566 = vunpack.c.h.b16 %v1522
  %v1567 = vunpack.c.l.b16 %v1523
  %v1568 = vunpack.c.h.b16 %v1523
  %v1569 = vunpack.c.l.b16 %v1524
  %v1570 = vunpack.c.h.b16 %v1524
  %v1571 = vunpack.c.l.b16 %v1525
  %v1572 = vunpack.c.h.b16 %v1525
  %v1573 = vunpack.c.l.b16 %v1526
  %v1574 = vunpack.c.h.b16 %v1526
  %v1575 = vpack.c.b16 %v1545, %v1543
  %v1576 = vpack.c.b16 %v1546, %v1544
  %v1577 = vpack.c.b16 %v1549, %v1547
  %v1578 = vpack.c.b16 %v1550, %v1548
  %v1579 = vpack.c.b16 %v1553, %v1551
  %v1580 = vpack.c.b16 %v1554, %v1552
  %v1581 = vpack.c.b16 %v1557, %v1555
  %v1582 = vpack.c.b16 %v1558, %v1556
  %v1583 = vpack.c.b16 %v1561, %v1559
  %v1584 = vpack.c.b16 %v1562, %v1560
  %v1585 = vpack.c.b16 %v1565, %v1563
  %v1586 = vpack.c.b16 %v1566, %v1564
  %v1587 = vpack.c.b16 %v1569, %v1567
  %v1588 = vpack.c.b16 %v1570, %v1568
  %v1589 = vpack.c.b16 %v1573, %v1571
  %v1590 = vpack.c.b16 %v1574, %v1572
  %1607 = vmatprep.subr.bf16.mxu0 %v1576
  %1608 = vmatpush1.bf16.msra.mxu0 %v1575
  %1609 = vmatprep.subr.bf16.mxu0 %v1578
  %1610 = vmatpush1.bf16.msra.mxu0 %v1577
  %1611 = vmatprep.subr.bf16.mxu0 %v1580
  %1612 = vmatpush1.bf16.msra.mxu0 %v1579
  %1613 = vmatprep.subr.bf16.mxu0 %v1582
  %1614 = vmatpush1.bf16.msra.mxu0 %v1581
  %1615 = vmatprep.subr.bf16.mxu0 %v1584
  %1616 = vmatpush1.bf16.msra.mxu0 %v1583
  %1617 = vmatprep.subr.bf16.mxu0 %v1586
  %1618 = vmatpush1.bf16.msra.mxu0 %v1585
  %1619 = vmatprep.subr.bf16.mxu0 %v1588
  %1620 = vmatpush1.bf16.msra.mxu0 %v1587
  %1621 = vmatprep.subr.bf16.mxu0 %v1590
  %1622 = vmatpush1.bf16.msra.mxu0 %v1589
  %1623 = vmatprep.subr.bf16.mxu0 0
  %1624 = vmatpush1.bf16.msra.mxu0 0
  %1625 = vmatprep.subr.bf16.mxu0 0
  %1626 = vmatpush1.bf16.msra.mxu0 0
  %1627 = vmatprep.subr.bf16.mxu0 0
  %1628 = vmatpush1.bf16.msra.mxu0 0
  %1629 = vmatprep.subr.bf16.mxu0 0
  %1630 = vmatpush1.bf16.msra.mxu0 0
  %1631 = vmatprep.subr.bf16.mxu0 0
  %1632 = vmatpush1.bf16.msra.mxu0 0
  %1633 = vmatprep.subr.bf16.mxu0 0
  %1634 = vmatpush1.bf16.msra.mxu0 0
  %1635 = vmatprep.subr.bf16.mxu0 0
  %1636 = vmatpush1.bf16.msra.mxu0 0
  %1637 = vmatprep.subr.bf16.mxu0 0
  %1638 = vmatpush1.bf16.msra.mxu0 0
  %1639 = vmatprep.mubr.bf16.mxu0 0
  %1640 = vmatmul.mubr.bf16.gmra.mrb[0].mxu0 %v110
  %v1641 = vpop.f32.mrb[0].mxu0
  %v1642 = vadd.f32 0.0, %v1641
  %v1643 = vpop.f32.mrb[0].mxu0
  %v1644 = vadd.f32 0.0, %v1643
  %v1645 = vpop.f32.mrb[0].mxu0
  %v1646 = vadd.f32 0.0, %v1645
  %v1647 = vpop.f32.mrb[0].mxu0
  %v1648 = vadd.f32 0.0, %v1647
  %1649 = vmatprep.mubr.bf16.mxu0 0
  %1650 = vmatmul.mubr.bf16.gmra.mrb[0].mxu0 %v111
  %v1651 = vpop.f32.mrb[0].mxu0
  %v1652 = vadd.f32 0.0, %v1651
  %v1653 = vpop.f32.mrb[0].mxu0
  %v1654 = vadd.f32 0.0, %v1653
  %v1655 = vpop.f32.mrb[0].mxu0
  %v1656 = vadd.f32 0.0, %v1655
  %v1657 = vpop.f32.mrb[0].mxu0
  %v1658 = vadd.f32 0.0, %v1657
  %1659 = vmatprep.mubr.bf16.mxu0 0
  %1660 = vmatmul.mubr.bf16.gmra.mrb[0].mxu0 %v112
  %v1661 = vpop.f32.mrb[0].mxu0
  %v1662 = vadd.f32 0.0, %v1661
  %v1663 = vpop.f32.mrb[0].mxu0
  %v1664 = vadd.f32 0.0, %v1663
  %v1665 = vpop.f32.mrb[0].mxu0
  %v1666 = vadd.f32 0.0, %v1665
  %v1667 = vpop.f32.mrb[0].mxu0
  %v1668 = vadd.f32 0.0, %v1667
  %1669 = vmatprep.mubr.bf16.mxu0 0
  %1670 = vmatmul.mubr.bf16.gmra.mrb[0].mxu0 %v113
  %v1671 = vpop.f32.mrb[0].mxu0
  %v1672 = vadd.f32 0.0, %v1671
  %v1673 = vpop.f32.mrb[0].mxu0
  %v1674 = vadd.f32 0.0, %v1673
  %v1675 = vpop.f32.mrb[0].mxu0
  %v1676 = vadd.f32 0.0, %v1675
  %v1677 = vpop.f32.mrb[0].mxu0
  %v1678 = vadd.f32 0.0, %v1677
  %1679 = vmatprep.mubr.bf16.mxu0 0
  %1680 = vmatmul.mubr.bf16.gmra.mrb[0].mxu0 %v114
  %v1681 = vpop.f32.mrb[0].mxu0
  %v1682 = vadd.f32 0.0, %v1681
  %v1683 = vpop.f32.mrb[0].mxu0
  %v1684 = vadd.f32 0.0, %v1683
  %v1685 = vpop.f32.mrb[0].mxu0
  %v1686 = vadd.f32 0.0, %v1685
  %v1687 = vpop.f32.mrb[0].mxu0
  %v1688 = vadd.f32 0.0, %v1687
  %1689 = vmatprep.mubr.bf16.mxu0 0
  %1690 = vmatmul.mubr.bf16.gmra.mrb[0].mxu0 %v115
  %v1691 = vpop.f32.mrb[0].mxu0
  %v1692 = vadd.f32 0.0, %v1691
  %v1693 = vpop.f32.mrb[0].mxu0
  %v1694 = vadd.f32 0.0, %v1693
  %v1695 = vpop.f32.mrb[0].mxu0
  %v1696 = vadd.f32 0.0, %v1695
  %v1697 = vpop.f32.mrb[0].mxu0
  %v1698 = vadd.f32 0.0, %v1697
  %1699 = vmatprep.mubr.bf16.mxu0 0
  %1700 = vmatmul.mubr.bf16.gmra.mrb[0].mxu0 %v116
  %v1701 = vpop.f32.mrb[0].mxu0
  %v1702 = vadd.f32 0.0, %v1701
  %v1703 = vpop.f32.mrb[0].mxu0
  %v1704 = vadd.f32 0.0, %v1703
  %v1705 = vpop.f32.mrb[0].mxu0
  %v1706 = vadd.f32 0.0, %v1705
  %v1707 = vpop.f32.mrb[0].mxu0
  %v1708 = vadd.f32 0.0, %v1707
  %1709 = vdwg.mxu0
  %v1726 = vunpack.c.l.b16 %v1494
  %v1727 = vunpack.c.h.b16 %v1494
  %v1728 = vunpack.c.l.b16 %v1495
  %v1729 = vunpack.c.h.b16 %v1495
  %v1730 = vunpack.c.l.b16 %v1496
  %v1731 = vunpack.c.h.b16 %v1496
  %v1732 = vunpack.c.l.b16 %v1497
  %v1733 = vunpack.c.h.b16 %v1497
  %v1734 = vunpack.c.l.b16 %v1498
  %v1735 = vunpack.c.h.b16 %v1498
  %v1736 = vunpack.c.l.b16 %v1499
  %v1737 = vunpack.c.h.b16 %v1499
  %v1738 = vunpack.c.l.b16 %v1500
  %v1739 = vunpack.c.h.b16 %v1500
  %v1740 = vunpack.c.l.b16 %v1501
  %v1741 = vunpack.c.h.b16 %v1501
  %v1742 = vunpack.c.l.b16 %v1502
  %v1743 = vunpack.c.h.b16 %v1502
  %v1744 = vunpack.c.l.b16 %v1503
  %v1745 = vunpack.c.h.b16 %v1503
  %v1746 = vunpack.c.l.b16 %v1504
  %v1747 = vunpack.c.h.b16 %v1504
  %v1748 = vunpack.c.l.b16 %v1505
  %v1749 = vunpack.c.h.b16 %v1505
  %v1750 = vunpack.c.l.b16 %v1506
  %v1751 = vunpack.c.h.b16 %v1506
  %v1752 = vunpack.c.l.b16 %v1507
  %v1753 = vunpack.c.h.b16 %v1507
  %v1754 = vunpack.c.l.b16 %v1508
  %v1755 = vunpack.c.h.b16 %v1508
  %v1756 = vunpack.c.l.b16 %v1509
  %v1757 = vunpack.c.h.b16 %v1509
  %v1758 = vpack.c.b16 %v1728, %v1726
  %v1759 = vpack.c.b16 %v1729, %v1727
  %v1760 = vpack.c.b16 %v1732, %v1730
  %v1761 = vpack.c.b16 %v1733, %v1731
  %v1762 = vpack.c.b16 %v1736, %v1734
  %v1763 = vpack.c.b16 %v1737, %v1735
  %v1764 = vpack.c.b16 %v1740, %v1738
  %v1765 = vpack.c.b16 %v1741, %v1739
  %v1766 = vpack.c.b16 %v1744, %v1742
  %v1767 = vpack.c.b16 %v1745, %v1743
  %v1768 = vpack.c.b16 %v1748, %v1746
  %v1769 = vpack.c.b16 %v1749, %v1747
  %v1770 = vpack.c.b16 %v1752, %v1750
  %v1771 = vpack.c.b16 %v1753, %v1751
  %v1772 = vpack.c.b16 %v1756, %v1754
  %v1773 = vpack.c.b16 %v1757, %v1755
  %1790 = vmatprep.subr.bf16.mxu0 %v1759
  %1791 = vmatpush1.bf16.msra.mxu0 %v1758
  %1792 = vmatprep.subr.bf16.mxu0 %v1761
  %1793 = vmatpush1.bf16.msra.mxu0 %v1760
  %1794 = vmatprep.subr.bf16.mxu0 %v1763
  %1795 = vmatpush1.bf16.msra.mxu0 %v1762
  %1796 = vmatprep.subr.bf16.mxu0 %v1765
  %1797 = vmatpush1.bf16.msra.mxu0 %v1764
  %1798 = vmatprep.subr.bf16.mxu0 %v1767
  %1799 = vmatpush1.bf16.msra.mxu0 %v1766
  %1800 = vmatprep.subr.bf16.mxu0 %v1769
  %1801 = vmatpush1.bf16.msra.mxu0 %v1768
  %1802 = vmatprep.subr.bf16.mxu0 %v1771
  %1803 = vmatpush1.bf16.msra.mxu0 %v1770
  %1804 = vmatprep.subr.bf16.mxu0 %v1773
  %1805 = vmatpush1.bf16.msra.mxu0 %v1772
  %1806 = vmatprep.subr.bf16.mxu0 0
  %1807 = vmatpush1.bf16.msra.mxu0 0
  %1808 = vmatprep.subr.bf16.mxu0 0
  %1809 = vmatpush1.bf16.msra.mxu0 0
  %1810 = vmatprep.subr.bf16.mxu0 0
  %1811 = vmatpush1.bf16.msra.mxu0 0
  %1812 = vmatprep.subr.bf16.mxu0 0
  %1813 = vmatpush1.bf16.msra.mxu0 0
  %1814 = vmatprep.subr.bf16.mxu0 0
  %1815 = vmatpush1.bf16.msra.mxu0 0
  %1816 = vmatprep.subr.bf16.mxu0 0
  %1817 = vmatpush1.bf16.msra.mxu0 0
  %1818 = vmatprep.subr.bf16.mxu0 0
  %1819 = vmatpush1.bf16.msra.mxu0 0
  %1820 = vmatprep.subr.bf16.mxu0 0
  %1821 = vmatpush1.bf16.msra.mxu0 0
  %1822 = vmatprep.mubr.bf16.mxu0 0
  %1823 = vmatmul.mubr.bf16.gmra.mrb[0].mxu0 %v311
  %v1824 = vpop.f32.mrb[0].mxu0
  %v1825 = vadd.f32 %v1642, %v1824
  %v1826 = vpop.f32.mrb[0].mxu0
  %v1827 = vadd.f32 %v1644, %v1826
  %v1828 = vpop.f32.mrb[0].mxu0
  %v1829 = vadd.f32 %v1646, %v1828
  %v1830 = vpop.f32.mrb[0].mxu0
  %v1831 = vadd.f32 %v1648, %v1830
  %1832 = vmatprep.mubr.bf16.mxu0 0
  %1833 = vmatmul.mubr.bf16.gmra.mrb[0].mxu0 %v110
  %v1834 = vpop.f32.mrb[0].mxu0
  %v1835 = vadd.f32 %v1652, %v1834
  %v1836 = vpop.f32.mrb[0].mxu0
  %v1837 = vadd.f32 %v1654, %v1836
  %v1838 = vpop.f32.mrb[0].mxu0
  %v1839 = vadd.f32 %v1656, %v1838
  %v1840 = vpop.f32.mrb[0].mxu0
  %v1841 = vadd.f32 %v1658, %v1840
  %1842 = vmatprep.mubr.bf16.mxu0 0
  %1843 = vmatmul.mubr.bf16.gmra.mrb[0].mxu0 %v111
  %v1844 = vpop.f32.mrb[0].mxu0
  %v1845 = vadd.f32 %v1662, %v1844
  %v1846 = vpop.f32.mrb[0].mxu0
  %v1847 = vadd.f32 %v1664, %v1846
  %v1848 = vpop.f32.mrb[0].mxu0
  %v1849 = vadd.f32 %v1666, %v1848
  %v1850 = vpop.f32.mrb[0].mxu0
  %v1851 = vadd.f32 %v1668, %v1850
  %1852 = vmatprep.mubr.bf16.mxu0 0
  %1853 = vmatmul.mubr.bf16.gmra.mrb[0].mxu0 %v112
  %v1854 = vpop.f32.mrb[0].mxu0
  %v1855 = vadd.f32 %v1672, %v1854
  %v1856 = vpop.f32.mrb[0].mxu0
  %v1857 = vadd.f32 %v1674, %v1856
  %v1858 = vpop.f32.mrb[0].mxu0
  %v1859 = vadd.f32 %v1676, %v1858
  %v1860 = vpop.f32.mrb[0].mxu0
  %v1861 = vadd.f32 %v1678, %v1860
  %1862 = vmatprep.mubr.bf16.mxu0 0
  %1863 = vmatmul.mubr.bf16.gmra.mrb[0].mxu0 %v113
  %v1864 = vpop.f32.mrb[0].mxu0
  %v1865 = vadd.f32 %v1682, %v1864
  %v1866 = vpop.f32.mrb[0].mxu0
  %v1867 = vadd.f32 %v1684, %v1866
  %v1868 = vpop.f32.mrb[0].mxu0
  %v1869 = vadd.f32 %v1686, %v1868
  %v1870 = vpop.f32.mrb[0].mxu0
  %v1871 = vadd.f32 %v1688, %v1870
  %1872 = vmatprep.mubr.bf16.mxu0 0
  %1873 = vmatmul.mubr.bf16.gmra.mrb[0].mxu0 %v114
  %v1874 = vpop.f32.mrb[0].mxu0
  %v1875 = vadd.f32 %v1692, %v1874
  %v1876 = vpop.f32.mrb[0].mxu0
  %v1877 = vadd.f32 %v1694, %v1876
  %v1878 = vpop.f32.mrb[0].mxu0
  %v1879 = vadd.f32 %v1696, %v1878
  %v1880 = vpop.f32.mrb[0].mxu0
  %v1881 = vadd.f32 %v1698, %v1880
  %1882 = vmatprep.mubr.bf16.mxu0 0
  %1883 = vmatmul.mubr.bf16.gmra.mrb[0].mxu0 %v115
  %v1884 = vpop.f32.mrb[0].mxu0
  %v1885 = vadd.f32 %v1702, %v1884
  %v1886 = vpop.f32.mrb[0].mxu0
  %v1887 = vadd.f32 %v1704, %v1886
  %v1888 = vpop.f32.mrb[0].mxu0
  %v1889 = vadd.f32 %v1706, %v1888
  %v1890 = vpop.f32.mrb[0].mxu0
  %v1891 = vadd.f32 %v1708, %v1890
  %1892 = vdwg.mxu0
  %v1893 = vmax.f32 %v1425, %v1825
  %v1894 = vmax.f32 %v1427, %v1827
  %v1895 = vmax.f32 %v1429, %v1829
  %v1896 = vmax.f32 %v1431, %v1831
  %v1897 = vmax.f32 %v1435, %v1835
  %v1898 = vmax.f32 %v1437, %v1837
  %v1899 = vmax.f32 %v1439, %v1839
  %v1900 = vmax.f32 %v1441, %v1841
  %v1901 = vmax.f32 %v1445, %v1845
  %v1902 = vmax.f32 %v1447, %v1847
  %v1903 = vmax.f32 %v1449, %v1849
  %v1904 = vmax.f32 %v1451, %v1851
  %v1905 = vmax.f32 %v1455, %v1855
  %v1906 = vmax.f32 %v1457, %v1857
  %v1907 = vmax.f32 %v1459, %v1859
  %v1908 = vmax.f32 %v1461, %v1861
  %v1909 = vmax.f32 %v1465, %v1865
  %v1910 = vmax.f32 %v1467, %v1867
  %v1911 = vmax.f32 %v1469, %v1869
  %v1912 = vmax.f32 %v1471, %v1871
  %v1913 = vmax.f32 %v1475, %v1875
  %v1914 = vmax.f32 %v1477, %v1877
  %v1915 = vmax.f32 %v1479, %v1879
  %v1916 = vmax.f32 %v1481, %v1881
  %v1917 = vmax.f32 %v1485, %v1885
  %v1918 = vmax.f32 %v1487, %v1887
  %v1919 = vmax.f32 %v1489, %v1889
  %v1920 = vmax.f32 %v1491, %v1891
  %1949 = vrot.lane.b32.xlu0 %v1893, 44
  %v1950 = vpop.permute.xlu0 %1949
  %1951 = vrot.lane.b32.xlu0 %v1894, 44
  %v1952 = vpop.permute.xlu0 %1951
  %1953 = vrot.lane.b32.xlu0 %v1895, 44
  %v1954 = vpop.permute.xlu0 %1953
  %1955 = vrot.lane.b32.xlu0 %v1896, 44
  %v1956 = vpop.permute.xlu0 %1955
  %1957 = vrot.lane.b32.xlu0 %v1897, 44
  %v1958 = vpop.permute.xlu0 %1957
  %1959 = vrot.lane.b32.xlu0 %v1898, 44
  %v1960 = vpop.permute.xlu0 %1959
  %1961 = vrot.lane.b32.xlu0 %v1899, 44
  %v1962 = vpop.permute.xlu0 %1961
  %1963 = vrot.lane.b32.xlu0 %v1900, 44
  %v1964 = vpop.permute.xlu0 %1963
  %1965 = vrot.lane.b32.xlu0 %v1901, 44
  %v1966 = vpop.permute.xlu0 %1965
  %1967 = vrot.lane.b32.xlu0 %v1902, 44
  %v1968 = vpop.permute.xlu0 %1967
  %1969 = vrot.lane.b32.xlu0 %v1903, 44
  %v1970 = vpop.permute.xlu0 %1969
  %1971 = vrot.lane.b32.xlu0 %v1904, 44
  %v1972 = vpop.permute.xlu0 %1971
  %1973 = vrot.lane.b32.xlu0 %v1905, 44
  %v1974 = vpop.permute.xlu0 %1973
  %1975 = vrot.lane.b32.xlu0 %v1906, 44
  %v1976 = vpop.permute.xlu0 %1975
  %1977 = vrot.lane.b32.xlu0 %v1907, 44
  %v1978 = vpop.permute.xlu0 %1977
  %1979 = vrot.lane.b32.xlu0 %v1908, 44
  %v1980 = vpop.permute.xlu0 %1979
  %1981 = vrot.lane.b32.xlu0 %v1909, 44
  %v1982 = vpop.permute.xlu0 %1981
  %1983 = vrot.lane.b32.xlu0 %v1910, 44
  %v1984 = vpop.permute.xlu0 %1983
  %1985 = vrot.lane.b32.xlu0 %v1911, 44
  %v1986 = vpop.permute.xlu0 %1985
  %1987 = vrot.lane.b32.xlu0 %v1912, 44
  %v1988 = vpop.permute.xlu0 %1987
  %1989 = vrot.lane.b32.xlu0 %v1913, 44
  %v1990 = vpop.permute.xlu0 %1989
  %1991 = vrot.lane.b32.xlu0 %v1914, 44
  %v1992 = vpop.permute.xlu0 %1991
  %1993 = vrot.lane.b32.xlu0 %v1915, 44
  %v1994 = vpop.permute.xlu0 %1993
  %1995 = vrot.lane.b32.xlu0 %v1916, 44
  %v1996 = vpop.permute.xlu0 %1995
  %1997 = vrot.lane.b32.xlu0 %v1917, 44
  %v1998 = vpop.permute.xlu0 %1997
  %1999 = vrot.lane.b32.xlu0 %v1918, 44
  %v2000 = vpop.permute.xlu0 %1999
  %2001 = vrot.lane.b32.xlu0 %v1919, 44
  %v2002 = vpop.permute.xlu0 %2001
  %2003 = vrot.lane.b32.xlu0 %v1920, 44
  %v2004 = vpop.permute.xlu0 %2003
  %v2005 = vsel %vm1008, %v1950, %v1952
  %v2006 = vsel %vm1008, %v1954, %v1956
  %v2007 = vsel %vm1008, %v1958, %v1960
  %v2008 = vsel %vm1008, %v1962, %v1964
  %v2009 = vsel %vm1008, %v1966, %v1968
  %v2010 = vsel %vm1008, %v1970, %v1972
  %v2011 = vsel %vm1008, %v1974, %v1976
  %v2012 = vsel %vm1008, %v1978, %v1980
  %v2013 = vsel %vm1008, %v1982, %v1984
  %v2014 = vsel %vm1008, %v1986, %v1988
  %v2015 = vsel %vm1008, %v1990, %v1992
  %v2016 = vsel %vm1008, %v1994, %v1996
  %v2017 = vsel %vm1008, %v1998, %v2000
  %v2018 = vsel %vm1008, %v2002, %v2004
  %v2033 = vmax.f32 %v1893, %v2005
  %v2034 = vmax.f32 %v1895, %v2006
  %v2035 = vmax.f32 %v1897, %v2007
  %v2036 = vmax.f32 %v1899, %v2008
  %v2037 = vmax.f32 %v1901, %v2009
  %v2038 = vmax.f32 %v1903, %v2010
  %v2039 = vmax.f32 %v1905, %v2011
  %v2040 = vmax.f32 %v1907, %v2012
  %v2041 = vmax.f32 %v1909, %v2013
  %v2042 = vmax.f32 %v1911, %v2014
  %v2043 = vmax.f32 %v1913, %v2015
  %v2044 = vmax.f32 %v1915, %v2016
  %v2045 = vmax.f32 %v1917, %v2017
  %v2046 = vmax.f32 %v1919, %v2018
  %v2047 = vadd.f32 %v2033, %v1056
  %v2048 = vadd.f32 %v2034, %v1056
  %v2049 = vadd.f32 %v2035, %v1056
  %v2050 = vadd.f32 %v2036, %v1056
  %v2051 = vadd.f32 %v2037, %v1056
  %v2052 = vadd.f32 %v2038, %v1056
  %v2053 = vadd.f32 %v2039, %v1056
  %v2054 = vadd.f32 %v2040, %v1056
  %v2055 = vadd.f32 %v2041, %v1056
  %v2056 = vadd.f32 %v2042, %v1056
  %v2057 = vadd.f32 %v2043, %v1056
  %v2058 = vadd.f32 %v2044, %v1056
  %v2059 = vadd.f32 %v2045, %v1056
  %v2060 = vadd.f32 %v2046, %v1056
  %v2061 = vmax.f32 %v2047, 0.0
  %v2062 = vmax.f32 %v2048, 0.0
  %v2063 = vmax.f32 %v2049, 0.0
  %v2064 = vmax.f32 %v2050, 0.0
  %v2065 = vmax.f32 %v2051, 0.0
  %v2066 = vmax.f32 %v2052, 0.0
  %v2067 = vmax.f32 %v2053, 0.0
  %v2068 = vmax.f32 %v2054, 0.0
  %v2069 = vmax.f32 %v2055, 0.0
  %v2070 = vmax.f32 %v2056, 0.0
  %v2071 = vmax.f32 %v2057, 0.0
  %v2072 = vmax.f32 %v2058, 0.0
  %v2073 = vmax.f32 %v2059, 0.0
  %v2074 = vmax.f32 %v2060, 0.0
  %v2075 = vpack.c.bf16 %v2062, %v2061
  %v2076 = vpack.c.bf16 %v2064, %v2063
  %v2077 = vpack.c.bf16 %v2066, %v2065
  %v2078 = vpack.c.bf16 %v2068, %v2067
  %v2079 = vpack.c.bf16 %v2070, %v2069
  %v2080 = vpack.c.bf16 %v2072, %v2071
  %v2081 = vpack.c.bf16 %v2074, %v2073
  %v2082 = vld [vmem:[%s2] sm:$0xff]
  %v2083 = vld [vmem:[%s2 + $0x8] sm:$0xff]
  %v2084 = vld [vmem:[%s2 + $0x10] sm:$0xff]
  %v2085 = vld [vmem:[%s2 + $0x18] sm:$0xff]
  %v2086 = vld [vmem:[%s2 + $0x20] sm:$0xff]
  %v2087 = vld [vmem:[%s2 + $0x28] sm:$0xff]
  %v2088 = vld [vmem:[%s2 + $0x30] sm:$0xff]
  %v2089 = vld [vmem:[%s2 + $0x38] sm:$0xff]
  %v2090 = vld [vmem:[%s2 + $0x40] sm:$0xff]
  %v2091 = vld [vmem:[%s2 + $0x48] sm:$0xff]
  %v2092 = vld [vmem:[%s2 + $0x50] sm:$0x33]
  %s2093 = scalar_lea.vmem %s2, 88
  %v2094 = vld [vmem:[%s2093] sm:$0xff]
  %v2095 = vld [vmem:[%s2093 + $0x8] sm:$0xff]
  %v2096 = vld [vmem:[%s2093 + $0x10] sm:$0xff]
  %v2097 = vld [vmem:[%s2093 + $0x18] sm:$0xff]
  %v2098 = vld [vmem:[%s2093 + $0x20] sm:$0xff]
  %v2099 = vld [vmem:[%s2093 + $0x28] sm:$0xff]
  %v2100 = vld [vmem:[%s2093 + $0x30] sm:$0xff]
  %v2101 = vld [vmem:[%s2093 + $0x38] sm:$0xff]
  %v2102 = vld [vmem:[%s2093 + $0x40] sm:$0xff]
  %v2103 = vld [vmem:[%s2093 + $0x48] sm:$0xff]
  %v2104 = vld [vmem:[%s2093 + $0x50] sm:$0x33]
  %v2116 = vunpack.c.l.b16 %v2094
  %v2117 = vunpack.c.h.b16 %v2094
  %v2118 = vunpack.c.l.b16 %v2095
  %v2119 = vunpack.c.h.b16 %v2095
  %v2120 = vunpack.c.l.b16 %v2096
  %v2121 = vunpack.c.h.b16 %v2096
  %v2122 = vunpack.c.l.b16 %v2097
  %v2123 = vunpack.c.h.b16 %v2097
  %v2124 = vunpack.c.l.b16 %v2098
  %v2125 = vunpack.c.h.b16 %v2098
  %v2126 = vunpack.c.l.b16 %v2099
  %v2127 = vunpack.c.h.b16 %v2099
  %v2128 = vunpack.c.l.b16 %v2100
  %v2129 = vunpack.c.h.b16 %v2100
  %v2130 = vunpack.c.l.b16 %v2101
  %v2131 = vunpack.c.h.b16 %v2101
  %v2132 = vunpack.c.l.b16 %v2102
  %v2133 = vunpack.c.h.b16 %v2102
  %v2134 = vunpack.c.l.b16 %v2103
  %v2135 = vunpack.c.h.b16 %v2103
  %v2136 = vunpack.c.l.b16 %v2104
  %v2137 = vunpack.c.h.b16 %v2104
  %v2138 = vpack.c.b16 %v2118, %v2116
  %v2139 = vpack.c.b16 %v2119, %v2117
  %v2140 = vpack.c.b16 %v2122, %v2120
  %v2141 = vpack.c.b16 %v2123, %v2121
  %v2142 = vpack.c.b16 %v2126, %v2124
  %v2143 = vpack.c.b16 %v2127, %v2125
  %v2144 = vpack.c.b16 %v2130, %v2128
  %v2145 = vpack.c.b16 %v2131, %v2129
  %v2146 = vpack.c.b16 %v2134, %v2132
  %v2147 = vpack.c.b16 %v2135, %v2133
  %v2148 = vpack.c.b16 %v2136, %v2136
  %v2149 = vpack.c.b16 %v2137, %v2137
  %vm2160 = vcmask 687104
  %v2162 = vsel %vm2160, %v2075, 0
  %v2165 = vsel %vm2160, %v2076, 0
  %v2168 = vsel %vm2160, %v2077, 0
  %v2171 = vsel %vm2160, %v2078, 0
  %v2174 = vsel %vm2160, %v2079, 0
  %vm2176 = vcmask 1041408
  %v2178 = vsel %vm2176, %v2148, 0
  %v2181 = vsel %vm2176, %v2149, 0
  %2183 = vmatprep.subr.bf16.mxu0 %v2139
  %2184 = vmatpush1.bf16.msra.mxu0 %v2138
  %2185 = vmatprep.subr.bf16.mxu0 %v2141
  %2186 = vmatpush1.bf16.msra.mxu0 %v2140
  %2187 = vmatprep.subr.bf16.mxu0 %v2143
  %2188 = vmatpush1.bf16.msra.mxu0 %v2142
  %2189 = vmatprep.subr.bf16.mxu0 %v2145
  %2190 = vmatpush1.bf16.msra.mxu0 %v2144
  %2191 = vmatprep.subr.bf16.mxu0 %v2147
  %2192 = vmatpush1.bf16.msra.mxu0 %v2146
  %2193 = vmatprep.subr.bf16.mxu0 %v2181
  %2194 = vmatpush1.bf16.msra.mxu0 %v2178
  %2195 = vmatprep.subr.bf16.mxu0 0
  %2196 = vmatpush1.bf16.msra.mxu0 0
  %2197 = vmatprep.subr.bf16.mxu0 0
  %2198 = vmatpush1.bf16.msra.mxu0 0
  %2199 = vmatprep.subr.bf16.mxu0 0
  %2200 = vmatpush1.bf16.msra.mxu0 0
  %2201 = vmatprep.subr.bf16.mxu0 0
  %2202 = vmatpush1.bf16.msra.mxu0 0
  %2203 = vmatprep.subr.bf16.mxu0 0
  %2204 = vmatpush1.bf16.msra.mxu0 0
  %2205 = vmatprep.subr.bf16.mxu0 0
  %2206 = vmatpush1.bf16.msra.mxu0 0
  %2207 = vmatprep.subr.bf16.mxu0 0
  %2208 = vmatpush1.bf16.msra.mxu0 0
  %2209 = vmatprep.subr.bf16.mxu0 0
  %2210 = vmatpush1.bf16.msra.mxu0 0
  %2211 = vmatprep.subr.bf16.mxu0 0
  %2212 = vmatpush1.bf16.msra.mxu0 0
  %2213 = vmatprep.subr.bf16.mxu0 0
  %2214 = vmatpush1.bf16.msra.mxu0 0
  %2215 = vmatprep.mubr.bf16.mxu0 0
  %2216 = vmatmul.mubr.bf16.gmra.mrb[0].mxu0 %v2162
  %v2217 = vpop.f32.mrb[0].mxu0
  %v2218 = vadd.f32 0.0, %v2217
  %v2219 = vpop.f32.mrb[0].mxu0
  %v2220 = vadd.f32 0.0, %v2219
  %v2221 = vpop.f32.mrb[0].mxu0
  %v2222 = vadd.f32 0.0, %v2221
  %v2223 = vpop.f32.mrb[0].mxu0
  %v2224 = vadd.f32 0.0, %v2223
  %2225 = vmatprep.mubr.bf16.mxu0 0
  %2226 = vmatmul.mubr.bf16.gmra.mrb[0].mxu0 %v2165
  %v2227 = vpop.f32.mrb[0].mxu0
  %v2228 = vadd.f32 0.0, %v2227
  %v2229 = vpop.f32.mrb[0].mxu0
  %v2230 = vadd.f32 0.0, %v2229
  %v2231 = vpop.f32.mrb[0].mxu0
  %v2232 = vadd.f32 0.0, %v2231
  %v2233 = vpop.f32.mrb[0].mxu0
  %v2234 = vadd.f32 0.0, %v2233
  %2235 = vmatprep.mubr.bf16.mxu0 0
  %2236 = vmatmul.mubr.bf16.gmra.mrb[0].mxu0 %v2168
  %v2237 = vpop.f32.mrb[0].mxu0
  %v2238 = vadd.f32 0.0, %v2237
  %v2239 = vpop.f32.mrb[0].mxu0
  %v2240 = vadd.f32 0.0, %v2239
  %v2241 = vpop.f32.mrb[0].mxu0
  %v2242 = vadd.f32 0.0, %v2241
  %v2243 = vpop.f32.mrb[0].mxu0
  %v2244 = vadd.f32 0.0, %v2243
  %2245 = vmatprep.mubr.bf16.mxu0 0
  %2246 = vmatmul.mubr.bf16.gmra.mrb[0].mxu0 %v2171
  %v2247 = vpop.f32.mrb[0].mxu0
  %v2248 = vadd.f32 0.0, %v2247
  %v2249 = vpop.f32.mrb[0].mxu0
  %v2250 = vadd.f32 0.0, %v2249
  %v2251 = vpop.f32.mrb[0].mxu0
  %v2252 = vadd.f32 0.0, %v2251
  %v2253 = vpop.f32.mrb[0].mxu0
  %v2254 = vadd.f32 0.0, %v2253
  %2255 = vmatprep.mubr.bf16.mxu0 0
  %2256 = vmatmul.mubr.bf16.gmra.mrb[0].mxu0 %v2174
  %v2257 = vpop.f32.mrb[0].mxu0
  %v2258 = vadd.f32 0.0, %v2257
  %v2259 = vpop.f32.mrb[0].mxu0
  %v2260 = vadd.f32 0.0, %v2259
  %v2261 = vpop.f32.mrb[0].mxu0
  %v2262 = vadd.f32 0.0, %v2261
  %v2263 = vpop.f32.mrb[0].mxu0
  %v2264 = vadd.f32 0.0, %v2263
  %2265 = vdwg.mxu0
  %v2277 = vunpack.c.l.b16 %v2082
  %v2278 = vunpack.c.h.b16 %v2082
  %v2279 = vunpack.c.l.b16 %v2083
  %v2280 = vunpack.c.h.b16 %v2083
  %v2281 = vunpack.c.l.b16 %v2084
  %v2282 = vunpack.c.h.b16 %v2084
  %v2283 = vunpack.c.l.b16 %v2085
  %v2284 = vunpack.c.h.b16 %v2085
  %v2285 = vunpack.c.l.b16 %v2086
  %v2286 = vunpack.c.h.b16 %v2086
  %v2287 = vunpack.c.l.b16 %v2087
  %v2288 = vunpack.c.h.b16 %v2087
  %v2289 = vunpack.c.l.b16 %v2088
  %v2290 = vunpack.c.h.b16 %v2088
  %v2291 = vunpack.c.l.b16 %v2089
  %v2292 = vunpack.c.h.b16 %v2089
  %v2293 = vunpack.c.l.b16 %v2090
  %v2294 = vunpack.c.h.b16 %v2090
  %v2295 = vunpack.c.l.b16 %v2091
  %v2296 = vunpack.c.h.b16 %v2091
  %v2297 = vunpack.c.l.b16 %v2092
  %v2298 = vunpack.c.h.b16 %v2092
  %v2299 = vpack.c.b16 %v2279, %v2277
  %v2300 = vpack.c.b16 %v2280, %v2278
  %v2301 = vpack.c.b16 %v2283, %v2281
  %v2302 = vpack.c.b16 %v2284, %v2282
  %v2303 = vpack.c.b16 %v2287, %v2285
  %v2304 = vpack.c.b16 %v2288, %v2286
  %v2305 = vpack.c.b16 %v2291, %v2289
  %v2306 = vpack.c.b16 %v2292, %v2290
  %v2307 = vpack.c.b16 %v2295, %v2293
  %v2308 = vpack.c.b16 %v2296, %v2294
  %v2309 = vpack.c.b16 %v2297, %v2297
  %v2310 = vpack.c.b16 %v2298, %v2298
  %v2322 = vsel %vm2160, %v1086, 0
  %v2325 = vsel %vm2160, %v1087, 0
  %v2328 = vsel %vm2160, %v1088, 0
  %v2331 = vsel %vm2160, %v1089, 0
  %v2334 = vsel %vm2160, %v1090, 0
  %v2337 = vsel %vm2176, %v2309, 0
  %v2340 = vsel %vm2176, %v2310, 0
  %2342 = vmatprep.subr.bf16.mxu0 %v2300
  %2343 = vmatpush1.bf16.msra.mxu0 %v2299
  %2344 = vmatprep.subr.bf16.mxu0 %v2302
  %2345 = vmatpush1.bf16.msra.mxu0 %v2301
  %2346 = vmatprep.subr.bf16.mxu0 %v2304
  %2347 = vmatpush1.bf16.msra.mxu0 %v2303
  %2348 = vmatprep.subr.bf16.mxu0 %v2306
  %2349 = vmatpush1.bf16.msra.mxu0 %v2305
  %2350 = vmatprep.subr.bf16.mxu0 %v2308
  %2351 = vmatpush1.bf16.msra.mxu0 %v2307
  %2352 = vmatprep.subr.bf16.mxu0 %v2340
  %2353 = vmatpush1.bf16.msra.mxu0 %v2337
  %2354 = vmatprep.subr.bf16.mxu0 0
  %2355 = vmatpush1.bf16.msra.mxu0 0
  %2356 = vmatprep.subr.bf16.mxu0 0
  %2357 = vmatpush1.bf16.msra.mxu0 0
  %2358 = vmatprep.subr.bf16.mxu0 0
  %2359 = vmatpush1.bf16.msra.mxu0 0
  %2360 = vmatprep.subr.bf16.mxu0 0
  %2361 = vmatpush1.bf16.msra.mxu0 0
  %2362 = vmatprep.subr.bf16.mxu0 0
  %2363 = vmatpush1.bf16.msra.mxu0 0
  %2364 = vmatprep.subr.bf16.mxu0 0
  %2365 = vmatpush1.bf16.msra.mxu0 0
  %2366 = vmatprep.subr.bf16.mxu0 0
  %2367 = vmatpush1.bf16.msra.mxu0 0
  %2368 = vmatprep.subr.bf16.mxu0 0
  %2369 = vmatpush1.bf16.msra.mxu0 0
  %2370 = vmatprep.subr.bf16.mxu0 0
  %2371 = vmatpush1.bf16.msra.mxu0 0
  %2372 = vmatprep.subr.bf16.mxu0 0
  %2373 = vmatpush1.bf16.msra.mxu0 0
  %2374 = vmatprep.mubr.bf16.mxu0 0
  %2375 = vmatmul.mubr.bf16.gmra.mrb[0].mxu0 %v2322
  %v2376 = vpop.f32.mrb[0].mxu0
  %v2377 = vadd.f32 %v2218, %v2376
  %v2378 = vpop.f32.mrb[0].mxu0
  %v2379 = vadd.f32 %v2220, %v2378
  %v2380 = vpop.f32.mrb[0].mxu0
  %v2381 = vadd.f32 %v2222, %v2380
  %v2382 = vpop.f32.mrb[0].mxu0
  %v2383 = vadd.f32 %v2224, %v2382
  %2384 = vmatprep.mubr.bf16.mxu0 0
  %2385 = vmatmul.mubr.bf16.gmra.mrb[0].mxu0 %v2325
  %v2386 = vpop.f32.mrb[0].mxu0
  %v2387 = vadd.f32 %v2228, %v2386
  %v2388 = vpop.f32.mrb[0].mxu0
  %v2389 = vadd.f32 %v2230, %v2388
  %v2390 = vpop.f32.mrb[0].mxu0
  %v2391 = vadd.f32 %v2232, %v2390
  %v2392 = vpop.f32.mrb[0].mxu0
  %v2393 = vadd.f32 %v2234, %v2392
  %2394 = vmatprep.mubr.bf16.mxu0 0
  %2395 = vmatmul.mubr.bf16.gmra.mrb[0].mxu0 %v2328
  %v2396 = vpop.f32.mrb[0].mxu0
  %v2397 = vadd.f32 %v2238, %v2396
  %v2398 = vpop.f32.mrb[0].mxu0
  %v2399 = vadd.f32 %v2240, %v2398
  %v2400 = vpop.f32.mrb[0].mxu0
  %v2401 = vadd.f32 %v2242, %v2400
  %v2402 = vpop.f32.mrb[0].mxu0
  %v2403 = vadd.f32 %v2244, %v2402
  %2404 = vmatprep.mubr.bf16.mxu0 0
  %2405 = vmatmul.mubr.bf16.gmra.mrb[0].mxu0 %v2331
  %v2406 = vpop.f32.mrb[0].mxu0
  %v2407 = vadd.f32 %v2248, %v2406
  %v2408 = vpop.f32.mrb[0].mxu0
  %v2409 = vadd.f32 %v2250, %v2408
  %v2410 = vpop.f32.mrb[0].mxu0
  %v2411 = vadd.f32 %v2252, %v2410
  %v2412 = vpop.f32.mrb[0].mxu0
  %v2413 = vadd.f32 %v2254, %v2412
  %2414 = vmatprep.mubr.bf16.mxu0 0
  %2415 = vmatmul.mubr.bf16.gmra.mrb[0].mxu0 %v2334
  %v2416 = vpop.f32.mrb[0].mxu0
  %v2417 = vadd.f32 %v2258, %v2416
  %v2418 = vpop.f32.mrb[0].mxu0
  %v2419 = vadd.f32 %v2260, %v2418
  %v2420 = vpop.f32.mrb[0].mxu0
  %v2421 = vadd.f32 %v2262, %v2420
  %v2422 = vpop.f32.mrb[0].mxu0
  %v2423 = vadd.f32 %v2264, %v2422
  %2424 = vdwg.mxu0
  %s2425 = scalar_lea.vmem %s2, 176
  %v2426 = vld [vmem:[%s2425] sm:$0xff]
  %v2427 = vld [vmem:[%s2425 + $0x8] sm:$0xff]
  %v2428 = vld [vmem:[%s2425 + $0x10] sm:$0xff]
  %v2429 = vld [vmem:[%s2425 + $0x18] sm:$0xff]
  %v2430 = vld [vmem:[%s2425 + $0x20] sm:$0xff]
  %v2431 = vld [vmem:[%s2425 + $0x28] sm:$0xff]
  %v2432 = vld [vmem:[%s2425 + $0x30] sm:$0xff]
  %v2433 = vld [vmem:[%s2425 + $0x38] sm:$0xff]
  %v2434 = vld [vmem:[%s2425 + $0x40] sm:$0xff]
  %v2435 = vld [vmem:[%s2425 + $0x48] sm:$0xff]
  %v2436 = vld [vmem:[%s2425 + $0x50] sm:$0x33]
  %v2448 = vunpack.c.l.b16 %v2426
  %v2449 = vunpack.c.h.b16 %v2426
  %v2450 = vunpack.c.l.b16 %v2427
  %v2451 = vunpack.c.h.b16 %v2427
  %v2452 = vunpack.c.l.b16 %v2428
  %v2453 = vunpack.c.h.b16 %v2428
  %v2454 = vunpack.c.l.b16 %v2429
  %v2455 = vunpack.c.h.b16 %v2429
  %v2456 = vunpack.c.l.b16 %v2430
  %v2457 = vunpack.c.h.b16 %v2430
  %v2458 = vunpack.c.l.b16 %v2431
  %v2459 = vunpack.c.h.b16 %v2431
  %v2460 = vunpack.c.l.b16 %v2432
  %v2461 = vunpack.c.h.b16 %v2432
  %v2462 = vunpack.c.l.b16 %v2433
  %v2463 = vunpack.c.h.b16 %v2433
  %v2464 = vunpack.c.l.b16 %v2434
  %v2465 = vunpack.c.h.b16 %v2434
  %v2466 = vunpack.c.l.b16 %v2435
  %v2467 = vunpack.c.h.b16 %v2435
  %v2468 = vunpack.c.l.b16 %v2436
  %v2469 = vunpack.c.h.b16 %v2436
  %v2470 = vpack.c.b16 %v2450, %v2448
  %v2471 = vpack.c.b16 %v2451, %v2449
  %v2472 = vpack.c.b16 %v2454, %v2452
  %v2473 = vpack.c.b16 %v2455, %v2453
  %v2474 = vpack.c.b16 %v2458, %v2456
  %v2475 = vpack.c.b16 %v2459, %v2457
  %v2476 = vpack.c.b16 %v2462, %v2460
  %v2477 = vpack.c.b16 %v2463, %v2461
  %v2478 = vpack.c.b16 %v2466, %v2464
  %v2479 = vpack.c.b16 %v2467, %v2465
  %v2480 = vpack.c.b16 %v2468, %v2468
  %v2481 = vpack.c.b16 %v2469, %v2469
  %v2493 = vsel %vm2160, %v1091, 0
  %v2496 = vsel %vm2176, %v2480, 0
  %v2499 = vsel %vm2176, %v2481, 0
  %2501 = vmatprep.subr.bf16.mxu0 %v2471
  %2502 = vmatpush1.bf16.msra.mxu0 %v2470
  %2503 = vmatprep.subr.bf16.mxu0 %v2473
  %2504 = vmatpush1.bf16.msra.mxu0 %v2472
  %2505 = vmatprep.subr.bf16.mxu0 %v2475
  %2506 = vmatpush1.bf16.msra.mxu0 %v2474
  %2507 = vmatprep.subr.bf16.mxu0 %v2477
  %2508 = vmatpush1.bf16.msra.mxu0 %v2476
  %2509 = vmatprep.subr.bf16.mxu0 %v2479
  %2510 = vmatpush1.bf16.msra.mxu0 %v2478
  %2511 = vmatprep.subr.bf16.mxu0 %v2499
  %2512 = vmatpush1.bf16.msra.mxu0 %v2496
  %2513 = vmatprep.subr.bf16.mxu0 0
  %2514 = vmatpush1.bf16.msra.mxu0 0
  %2515 = vmatprep.subr.bf16.mxu0 0
  %2516 = vmatpush1.bf16.msra.mxu0 0
  %2517 = vmatprep.subr.bf16.mxu0 0
  %2518 = vmatpush1.bf16.msra.mxu0 0
  %2519 = vmatprep.subr.bf16.mxu0 0
  %2520 = vmatpush1.bf16.msra.mxu0 0
  %2521 = vmatprep.subr.bf16.mxu0 0
  %2522 = vmatpush1.bf16.msra.mxu0 0
  %2523 = vmatprep.subr.bf16.mxu0 0
  %2524 = vmatpush1.bf16.msra.mxu0 0
  %2525 = vmatprep.subr.bf16.mxu0 0
  %2526 = vmatpush1.bf16.msra.mxu0 0
  %2527 = vmatprep.subr.bf16.mxu0 0
  %2528 = vmatpush1.bf16.msra.mxu0 0
  %2529 = vmatprep.subr.bf16.mxu0 0
  %2530 = vmatpush1.bf16.msra.mxu0 0
  %2531 = vmatprep.subr.bf16.mxu0 0
  %2532 = vmatpush1.bf16.msra.mxu0 0
  %2533 = vmatprep.mubr.bf16.mxu0 0
  %2534 = vmatmul.mubr.bf16.gmra.mrb[0].mxu0 %v2325
  %v2535 = vpop.f32.mrb[0].mxu0
  %v2536 = vadd.f32 0.0, %v2535
  %v2537 = vpop.f32.mrb[0].mxu0
  %v2538 = vadd.f32 0.0, %v2537
  %v2539 = vpop.f32.mrb[0].mxu0
  %v2540 = vadd.f32 0.0, %v2539
  %v2541 = vpop.f32.mrb[0].mxu0
  %v2542 = vadd.f32 0.0, %v2541
  %2543 = vmatprep.mubr.bf16.mxu0 0
  %2544 = vmatmul.mubr.bf16.gmra.mrb[0].mxu0 %v2328
  %v2545 = vpop.f32.mrb[0].mxu0
  %v2546 = vadd.f32 0.0, %v2545
  %v2547 = vpop.f32.mrb[0].mxu0
  %v2548 = vadd.f32 0.0, %v2547
  %v2549 = vpop.f32.mrb[0].mxu0
  %v2550 = vadd.f32 0.0, %v2549
  %v2551 = vpop.f32.mrb[0].mxu0
  %v2552 = vadd.f32 0.0, %v2551
  %2553 = vmatprep.mubr.bf16.mxu0 0
  %2554 = vmatmul.mubr.bf16.gmra.mrb[0].mxu0 %v2331
  %v2555 = vpop.f32.mrb[0].mxu0
  %v2556 = vadd.f32 0.0, %v2555
  %v2557 = vpop.f32.mrb[0].mxu0
  %v2558 = vadd.f32 0.0, %v2557
  %v2559 = vpop.f32.mrb[0].mxu0
  %v2560 = vadd.f32 0.0, %v2559
  %v2561 = vpop.f32.mrb[0].mxu0
  %v2562 = vadd.f32 0.0, %v2561
  %2563 = vmatprep.mubr.bf16.mxu0 0
  %2564 = vmatmul.mubr.bf16.gmra.mrb[0].mxu0 %v2334
  %v2565 = vpop.f32.mrb[0].mxu0
  %v2566 = vadd.f32 0.0, %v2565
  %v2567 = vpop.f32.mrb[0].mxu0
  %v2568 = vadd.f32 0.0, %v2567
  %v2569 = vpop.f32.mrb[0].mxu0
  %v2570 = vadd.f32 0.0, %v2569
  %v2571 = vpop.f32.mrb[0].mxu0
  %v2572 = vadd.f32 0.0, %v2571
  %2573 = vmatprep.mubr.bf16.mxu0 0
  %2574 = vmatmul.mubr.bf16.gmra.mrb[0].mxu0 %v2493
  %v2575 = vpop.f32.mrb[0].mxu0
  %v2576 = vadd.f32 0.0, %v2575
  %v2577 = vpop.f32.mrb[0].mxu0
  %v2578 = vadd.f32 0.0, %v2577
  %v2579 = vpop.f32.mrb[0].mxu0
  %v2580 = vadd.f32 0.0, %v2579
  %v2581 = vpop.f32.mrb[0].mxu0
  %v2582 = vadd.f32 0.0, %v2581
  %2583 = vdwg.mxu0
  %v2584 = vadd.f32 %v2377, %v2536
  %v2585 = vadd.f32 %v2379, %v2538
  %v2586 = vadd.f32 %v2381, %v2540
  %v2587 = vadd.f32 %v2383, %v2542
  %v2588 = vadd.f32 %v2387, %v2546
  %v2589 = vadd.f32 %v2389, %v2548
  %v2590 = vadd.f32 %v2391, %v2550
  %v2591 = vadd.f32 %v2393, %v2552
  %v2592 = vadd.f32 %v2397, %v2556
  %v2593 = vadd.f32 %v2399, %v2558
  %v2594 = vadd.f32 %v2401, %v2560
  %v2595 = vadd.f32 %v2403, %v2562
  %v2596 = vadd.f32 %v2407, %v2566
  %v2597 = vadd.f32 %v2409, %v2568
  %v2598 = vadd.f32 %v2411, %v2570
  %v2599 = vadd.f32 %v2413, %v2572
  %v2600 = vadd.f32 %v2417, %v2576
  %v2601 = vadd.f32 %v2419, %v2578
  %v2602 = vadd.f32 %v2421, %v2580
  %v2603 = vadd.f32 %v2423, %v2582
  %s2604 = scalar_lea.vmem %s2, 264
  %v2605 = vld [vmem:[%s2604] sm:$0xff]
  %v2606 = vld [vmem:[%s2604 + $0x8] sm:$0xff]
  %v2607 = vld [vmem:[%s2604 + $0x10] sm:$0xff]
  %v2608 = vld [vmem:[%s2604 + $0x18] sm:$0xff]
  %v2609 = vld [vmem:[%s2604 + $0x20] sm:$0xff]
  %v2610 = vld [vmem:[%s2604 + $0x28] sm:$0xff]
  %v2611 = vld [vmem:[%s2604 + $0x30] sm:$0xff]
  %v2612 = vld [vmem:[%s2604 + $0x38] sm:$0xff]
  %v2613 = vld [vmem:[%s2604 + $0x40] sm:$0xff]
  %v2614 = vld [vmem:[%s2604 + $0x48] sm:$0xff]
  %v2615 = vld [vmem:[%s2604 + $0x50] sm:$0x33]
  %v2627 = vunpack.c.l.b16 %v2605
  %v2628 = vunpack.c.h.b16 %v2605
  %v2629 = vunpack.c.l.b16 %v2606
  %v2630 = vunpack.c.h.b16 %v2606
  %v2631 = vunpack.c.l.b16 %v2607
  %v2632 = vunpack.c.h.b16 %v2607
  %v2633 = vunpack.c.l.b16 %v2608
  %v2634 = vunpack.c.h.b16 %v2608
  %v2635 = vunpack.c.l.b16 %v2609
  %v2636 = vunpack.c.h.b16 %v2609
  %v2637 = vunpack.c.l.b16 %v2610
  %v2638 = vunpack.c.h.b16 %v2610
  %v2639 = vunpack.c.l.b16 %v2611
  %v2640 = vunpack.c.h.b16 %v2611
  %v2641 = vunpack.c.l.b16 %v2612
  %v2642 = vunpack.c.h.b16 %v2612
  %v2643 = vunpack.c.l.b16 %v2613
  %v2644 = vunpack.c.h.b16 %v2613
  %v2645 = vunpack.c.l.b16 %v2614
  %v2646 = vunpack.c.h.b16 %v2614
  %v2647 = vunpack.c.l.b16 %v2615
  %v2648 = vunpack.c.h.b16 %v2615
  %v2649 = vpack.c.b16 %v2629, %v2627
  %v2650 = vpack.c.b16 %v2630, %v2628
  %v2651 = vpack.c.b16 %v2633, %v2631
  %v2652 = vpack.c.b16 %v2634, %v2632
  %v2653 = vpack.c.b16 %v2637, %v2635
  %v2654 = vpack.c.b16 %v2638, %v2636
  %v2655 = vpack.c.b16 %v2641, %v2639
  %v2656 = vpack.c.b16 %v2642, %v2640
  %v2657 = vpack.c.b16 %v2645, %v2643
  %v2658 = vpack.c.b16 %v2646, %v2644
  %v2659 = vpack.c.b16 %v2647, %v2647
  %v2660 = vpack.c.b16 %v2648, %v2648
  %v2672 = vsel %vm2160, %v2080, 0
  %v2675 = vsel %vm2176, %v2659, 0
  %v2678 = vsel %vm2176, %v2660, 0
  %2680 = vmatprep.subr.bf16.mxu0 %v2650
  %2681 = vmatpush1.bf16.msra.mxu0 %v2649
  %2682 = vmatprep.subr.bf16.mxu0 %v2652
  %2683 = vmatpush1.bf16.msra.mxu0 %v2651
  %2684 = vmatprep.subr.bf16.mxu0 %v2654
  %2685 = vmatpush1.bf16.msra.mxu0 %v2653
  %2686 = vmatprep.subr.bf16.mxu0 %v2656
  %2687 = vmatpush1.bf16.msra.mxu0 %v2655
  %2688 = vmatprep.subr.bf16.mxu0 %v2658
  %2689 = vmatpush1.bf16.msra.mxu0 %v2657
  %2690 = vmatprep.subr.bf16.mxu0 %v2678
  %2691 = vmatpush1.bf16.msra.mxu0 %v2675
  %2692 = vmatprep.subr.bf16.mxu0 0
  %2693 = vmatpush1.bf16.msra.mxu0 0
  %2694 = vmatprep.subr.bf16.mxu0 0
  %2695 = vmatpush1.bf16.msra.mxu0 0
  %2696 = vmatprep.subr.bf16.mxu0 0
  %2697 = vmatpush1.bf16.msra.mxu0 0
  %2698 = vmatprep.subr.bf16.mxu0 0
  %2699 = vmatpush1.bf16.msra.mxu0 0
  %2700 = vmatprep.subr.bf16.mxu0 0
  %2701 = vmatpush1.bf16.msra.mxu0 0
  %2702 = vmatprep.subr.bf16.mxu0 0
  %2703 = vmatpush1.bf16.msra.mxu0 0
  %2704 = vmatprep.subr.bf16.mxu0 0
  %2705 = vmatpush1.bf16.msra.mxu0 0
  %2706 = vmatprep.subr.bf16.mxu0 0
  %2707 = vmatpush1.bf16.msra.mxu0 0
  %2708 = vmatprep.subr.bf16.mxu0 0
  %2709 = vmatpush1.bf16.msra.mxu0 0
  %2710 = vmatprep.subr.bf16.mxu0 0
  %2711 = vmatpush1.bf16.msra.mxu0 0
  %2712 = vmatprep.mubr.bf16.mxu0 0
  %2713 = vmatmul.mubr.bf16.gmra.mrb[0].mxu0 %v2165
  %v2714 = vpop.f32.mrb[0].mxu0
  %v2715 = vadd.f32 0.0, %v2714
  %v2716 = vpop.f32.mrb[0].mxu0
  %v2717 = vadd.f32 0.0, %v2716
  %v2718 = vpop.f32.mrb[0].mxu0
  %v2719 = vadd.f32 0.0, %v2718
  %v2720 = vpop.f32.mrb[0].mxu0
  %v2721 = vadd.f32 0.0, %v2720
  %2722 = vmatprep.mubr.bf16.mxu0 0
  %2723 = vmatmul.mubr.bf16.gmra.mrb[0].mxu0 %v2168
  %v2724 = vpop.f32.mrb[0].mxu0
  %v2725 = vadd.f32 0.0, %v2724
  %v2726 = vpop.f32.mrb[0].mxu0
  %v2727 = vadd.f32 0.0, %v2726
  %v2728 = vpop.f32.mrb[0].mxu0
  %v2729 = vadd.f32 0.0, %v2728
  %v2730 = vpop.f32.mrb[0].mxu0
  %v2731 = vadd.f32 0.0, %v2730
  %2732 = vmatprep.mubr.bf16.mxu0 0
  %2733 = vmatmul.mubr.bf16.gmra.mrb[0].mxu0 %v2171
  %v2734 = vpop.f32.mrb[0].mxu0
  %v2735 = vadd.f32 0.0, %v2734
  %v2736 = vpop.f32.mrb[0].mxu0
  %v2737 = vadd.f32 0.0, %v2736
  %v2738 = vpop.f32.mrb[0].mxu0
  %v2739 = vadd.f32 0.0, %v2738
  %v2740 = vpop.f32.mrb[0].mxu0
  %v2741 = vadd.f32 0.0, %v2740
  %2742 = vmatprep.mubr.bf16.mxu0 0
  %2743 = vmatmul.mubr.bf16.gmra.mrb[0].mxu0 %v2174
  %v2744 = vpop.f32.mrb[0].mxu0
  %v2745 = vadd.f32 0.0, %v2744
  %v2746 = vpop.f32.mrb[0].mxu0
  %v2747 = vadd.f32 0.0, %v2746
  %v2748 = vpop.f32.mrb[0].mxu0
  %v2749 = vadd.f32 0.0, %v2748
  %v2750 = vpop.f32.mrb[0].mxu0
  %v2751 = vadd.f32 0.0, %v2750
  %2752 = vmatprep.mubr.bf16.mxu0 0
  %2753 = vmatmul.mubr.bf16.gmra.mrb[0].mxu0 %v2672
  %v2754 = vpop.f32.mrb[0].mxu0
  %v2755 = vadd.f32 0.0, %v2754
  %v2756 = vpop.f32.mrb[0].mxu0
  %v2757 = vadd.f32 0.0, %v2756
  %v2758 = vpop.f32.mrb[0].mxu0
  %v2759 = vadd.f32 0.0, %v2758
  %v2760 = vpop.f32.mrb[0].mxu0
  %v2761 = vadd.f32 0.0, %v2760
  %2762 = vdwg.mxu0
  %v2763 = vadd.f32 %v2584, %v2715
  %v2764 = vadd.f32 %v2585, %v2717
  %v2765 = vadd.f32 %v2586, %v2719
  %v2766 = vadd.f32 %v2587, %v2721
  %v2767 = vadd.f32 %v2588, %v2725
  %v2768 = vadd.f32 %v2589, %v2727
  %v2769 = vadd.f32 %v2590, %v2729
  %v2770 = vadd.f32 %v2591, %v2731
  %v2771 = vadd.f32 %v2592, %v2735
  %v2772 = vadd.f32 %v2593, %v2737
  %v2773 = vadd.f32 %v2594, %v2739
  %v2774 = vadd.f32 %v2595, %v2741
  %v2775 = vadd.f32 %v2596, %v2745
  %v2776 = vadd.f32 %v2597, %v2747
  %v2777 = vadd.f32 %v2598, %v2749
  %v2778 = vadd.f32 %v2599, %v2751
  %v2779 = vadd.f32 %v2600, %v2755
  %v2780 = vadd.f32 %v2601, %v2757
  %v2781 = vadd.f32 %v2602, %v2759
  %v2782 = vadd.f32 %v2603, %v2761
  %s2783 = scalar_lea.vmem %s2, 352
  %v2784 = vld [vmem:[%s2783] sm:$0xff]
  %v2785 = vld [vmem:[%s2783 + $0x8] sm:$0xff]
  %v2786 = vld [vmem:[%s2783 + $0x10] sm:$0xff]
  %v2787 = vld [vmem:[%s2783 + $0x18] sm:$0xff]
  %v2788 = vld [vmem:[%s2783 + $0x20] sm:$0xff]
  %v2789 = vld [vmem:[%s2783 + $0x28] sm:$0xff]
  %v2790 = vld [vmem:[%s2783 + $0x30] sm:$0xff]
  %v2791 = vld [vmem:[%s2783 + $0x38] sm:$0xff]
  %v2792 = vld [vmem:[%s2783 + $0x40] sm:$0xff]
  %v2793 = vld [vmem:[%s2783 + $0x48] sm:$0xff]
  %v2794 = vld [vmem:[%s2783 + $0x50] sm:$0x33]
  %v2806 = vunpack.c.l.b16 %v2784
  %v2807 = vunpack.c.h.b16 %v2784
  %v2808 = vunpack.c.l.b16 %v2785
  %v2809 = vunpack.c.h.b16 %v2785
  %v2810 = vunpack.c.l.b16 %v2786
  %v2811 = vunpack.c.h.b16 %v2786
  %v2812 = vunpack.c.l.b16 %v2787
  %v2813 = vunpack.c.h.b16 %v2787
  %v2814 = vunpack.c.l.b16 %v2788
  %v2815 = vunpack.c.h.b16 %v2788
  %v2816 = vunpack.c.l.b16 %v2789
  %v2817 = vunpack.c.h.b16 %v2789
  %v2818 = vunpack.c.l.b16 %v2790
  %v2819 = vunpack.c.h.b16 %v2790
  %v2820 = vunpack.c.l.b16 %v2791
  %v2821 = vunpack.c.h.b16 %v2791
  %v2822 = vunpack.c.l.b16 %v2792
  %v2823 = vunpack.c.h.b16 %v2792
  %v2824 = vunpack.c.l.b16 %v2793
  %v2825 = vunpack.c.h.b16 %v2793
  %v2826 = vunpack.c.l.b16 %v2794
  %v2827 = vunpack.c.h.b16 %v2794
  %v2828 = vpack.c.b16 %v2808, %v2806
  %v2829 = vpack.c.b16 %v2809, %v2807
  %v2830 = vpack.c.b16 %v2812, %v2810
  %v2831 = vpack.c.b16 %v2813, %v2811
  %v2832 = vpack.c.b16 %v2816, %v2814
  %v2833 = vpack.c.b16 %v2817, %v2815
  %v2834 = vpack.c.b16 %v2820, %v2818
  %v2835 = vpack.c.b16 %v2821, %v2819
  %v2836 = vpack.c.b16 %v2824, %v2822
  %v2837 = vpack.c.b16 %v2825, %v2823
  %v2838 = vpack.c.b16 %v2826, %v2826
  %v2839 = vpack.c.b16 %v2827, %v2827
  %v2851 = vsel %vm2160, %v1092, 0
  %v2854 = vsel %vm2176, %v2838, 0
  %v2857 = vsel %vm2176, %v2839, 0
  %2859 = vmatprep.subr.bf16.mxu0 %v2829
  %2860 = vmatpush1.bf16.msra.mxu0 %v2828
  %2861 = vmatprep.subr.bf16.mxu0 %v2831
  %2862 = vmatpush1.bf16.msra.mxu0 %v2830
  %2863 = vmatprep.subr.bf16.mxu0 %v2833
  %2864 = vmatpush1.bf16.msra.mxu0 %v2832
  %2865 = vmatprep.subr.bf16.mxu0 %v2835
  %2866 = vmatpush1.bf16.msra.mxu0 %v2834
  %2867 = vmatprep.subr.bf16.mxu0 %v2837
  %2868 = vmatpush1.bf16.msra.mxu0 %v2836
  %2869 = vmatprep.subr.bf16.mxu0 %v2857
  %2870 = vmatpush1.bf16.msra.mxu0 %v2854
  %2871 = vmatprep.subr.bf16.mxu0 0
  %2872 = vmatpush1.bf16.msra.mxu0 0
  %2873 = vmatprep.subr.bf16.mxu0 0
  %2874 = vmatpush1.bf16.msra.mxu0 0
  %2875 = vmatprep.subr.bf16.mxu0 0
  %2876 = vmatpush1.bf16.msra.mxu0 0
  %2877 = vmatprep.subr.bf16.mxu0 0
  %2878 = vmatpush1.bf16.msra.mxu0 0
  %2879 = vmatprep.subr.bf16.mxu0 0
  %2880 = vmatpush1.bf16.msra.mxu0 0
  %2881 = vmatprep.subr.bf16.mxu0 0
  %2882 = vmatpush1.bf16.msra.mxu0 0
  %2883 = vmatprep.subr.bf16.mxu0 0
  %2884 = vmatpush1.bf16.msra.mxu0 0
  %2885 = vmatprep.subr.bf16.mxu0 0
  %2886 = vmatpush1.bf16.msra.mxu0 0
  %2887 = vmatprep.subr.bf16.mxu0 0
  %2888 = vmatpush1.bf16.msra.mxu0 0
  %2889 = vmatprep.subr.bf16.mxu0 0
  %2890 = vmatpush1.bf16.msra.mxu0 0
  %2891 = vmatprep.mubr.bf16.mxu0 0
  %2892 = vmatmul.mubr.bf16.gmra.mrb[0].mxu0 %v2328
  %v2893 = vpop.f32.mrb[0].mxu0
  %v2894 = vadd.f32 0.0, %v2893
  %v2895 = vpop.f32.mrb[0].mxu0
  %v2896 = vadd.f32 0.0, %v2895
  %v2897 = vpop.f32.mrb[0].mxu0
  %v2898 = vadd.f32 0.0, %v2897
  %v2899 = vpop.f32.mrb[0].mxu0
  %v2900 = vadd.f32 0.0, %v2899
  %2901 = vmatprep.mubr.bf16.mxu0 0
  %2902 = vmatmul.mubr.bf16.gmra.mrb[0].mxu0 %v2331
  %v2903 = vpop.f32.mrb[0].mxu0
  %v2904 = vadd.f32 0.0, %v2903
  %v2905 = vpop.f32.mrb[0].mxu0
  %v2906 = vadd.f32 0.0, %v2905
  %v2907 = vpop.f32.mrb[0].mxu0
  %v2908 = vadd.f32 0.0, %v2907
  %v2909 = vpop.f32.mrb[0].mxu0
  %v2910 = vadd.f32 0.0, %v2909
  %2911 = vmatprep.mubr.bf16.mxu0 0
  %2912 = vmatmul.mubr.bf16.gmra.mrb[0].mxu0 %v2334
  %v2913 = vpop.f32.mrb[0].mxu0
  %v2914 = vadd.f32 0.0, %v2913
  %v2915 = vpop.f32.mrb[0].mxu0
  %v2916 = vadd.f32 0.0, %v2915
  %v2917 = vpop.f32.mrb[0].mxu0
  %v2918 = vadd.f32 0.0, %v2917
  %v2919 = vpop.f32.mrb[0].mxu0
  %v2920 = vadd.f32 0.0, %v2919
  %2921 = vmatprep.mubr.bf16.mxu0 0
  %2922 = vmatmul.mubr.bf16.gmra.mrb[0].mxu0 %v2493
  %v2923 = vpop.f32.mrb[0].mxu0
  %v2924 = vadd.f32 0.0, %v2923
  %v2925 = vpop.f32.mrb[0].mxu0
  %v2926 = vadd.f32 0.0, %v2925
  %v2927 = vpop.f32.mrb[0].mxu0
  %v2928 = vadd.f32 0.0, %v2927
  %v2929 = vpop.f32.mrb[0].mxu0
  %v2930 = vadd.f32 0.0, %v2929
  %2931 = vmatprep.mubr.bf16.mxu0 0
  %2932 = vmatmul.mubr.bf16.gmra.mrb[0].mxu0 %v2851
  %v2933 = vpop.f32.mrb[0].mxu0
  %v2934 = vadd.f32 0.0, %v2933
  %v2935 = vpop.f32.mrb[0].mxu0
  %v2936 = vadd.f32 0.0, %v2935
  %v2937 = vpop.f32.mrb[0].mxu0
  %v2938 = vadd.f32 0.0, %v2937
  %v2939 = vpop.f32.mrb[0].mxu0
  %v2940 = vadd.f32 0.0, %v2939
  %2941 = vdwg.mxu0
  %v2942 = vadd.f32 %v2763, %v2894
  %v2943 = vadd.f32 %v2764, %v2896
  %v2944 = vadd.f32 %v2765, %v2898
  %v2945 = vadd.f32 %v2766, %v2900
  %v2946 = vadd.f32 %v2767, %v2904
  %v2947 = vadd.f32 %v2768, %v2906
  %v2948 = vadd.f32 %v2769, %v2908
  %v2949 = vadd.f32 %v2770, %v2910
  %v2950 = vadd.f32 %v2771, %v2914
  %v2951 = vadd.f32 %v2772, %v2916
  %v2952 = vadd.f32 %v2773, %v2918
  %v2953 = vadd.f32 %v2774, %v2920
  %v2954 = vadd.f32 %v2775, %v2924
  %v2955 = vadd.f32 %v2776, %v2926
  %v2956 = vadd.f32 %v2777, %v2928
  %v2957 = vadd.f32 %v2778, %v2930
  %v2958 = vadd.f32 %v2779, %v2934
  %v2959 = vadd.f32 %v2780, %v2936
  %v2960 = vadd.f32 %v2781, %v2938
  %v2961 = vadd.f32 %v2782, %v2940
  %2962 = vmatprep.subr.bf16.mxu0 %v2139
  %2963 = vmatpush1.bf16.msra.mxu0 %v2138
  %2964 = vmatprep.subr.bf16.mxu0 %v2141
  %2965 = vmatpush1.bf16.msra.mxu0 %v2140
  %2966 = vmatprep.subr.bf16.mxu0 %v2143
  %2967 = vmatpush1.bf16.msra.mxu0 %v2142
  %2968 = vmatprep.subr.bf16.mxu0 %v2145
  %2969 = vmatpush1.bf16.msra.mxu0 %v2144
  %2970 = vmatprep.subr.bf16.mxu0 %v2147
  %2971 = vmatpush1.bf16.msra.mxu0 %v2146
  %2972 = vmatprep.subr.bf16.mxu0 %v2181
  %2973 = vmatpush1.bf16.msra.mxu0 %v2178
  %2974 = vmatprep.subr.bf16.mxu0 0
  %2975 = vmatpush1.bf16.msra.mxu0 0
  %2976 = vmatprep.subr.bf16.mxu0 0
  %2977 = vmatpush1.bf16.msra.mxu0 0
  %2978 = vmatprep.subr.bf16.mxu0 0
  %2979 = vmatpush1.bf16.msra.mxu0 0
  %2980 = vmatprep.subr.bf16.mxu0 0
  %2981 = vmatpush1.bf16.msra.mxu0 0
  %2982 = vmatprep.subr.bf16.mxu0 0
  %2983 = vmatpush1.bf16.msra.mxu0 0
  %2984 = vmatprep.subr.bf16.mxu0 0
  %2985 = vmatpush1.bf16.msra.mxu0 0
  %2986 = vmatprep.subr.bf16.mxu0 0
  %2987 = vmatpush1.bf16.msra.mxu0 0
  %2988 = vmatprep.subr.bf16.mxu0 0
  %2989 = vmatpush1.bf16.msra.mxu0 0
  %2990 = vmatprep.subr.bf16.mxu0 0
  %2991 = vmatpush1.bf16.msra.mxu0 0
  %2992 = vmatprep.subr.bf16.mxu0 0
  %2993 = vmatpush1.bf16.msra.mxu0 0
  %2994 = vmatprep.mubr.bf16.mxu0 0
  %2995 = vmatmul.mubr.bf16.gmra.mrb[0].mxu0 %v2325
  %v2996 = vpop.f32.mrb[0].mxu0
  %v2997 = vadd.f32 0.0, %v2996
  %v2998 = vpop.f32.mrb[0].mxu0
  %v2999 = vadd.f32 0.0, %v2998
  %v3000 = vpop.f32.mrb[0].mxu0
  %v3001 = vadd.f32 0.0, %v3000
  %v3002 = vpop.f32.mrb[0].mxu0
  %v3003 = vadd.f32 0.0, %v3002
  %3004 = vmatprep.mubr.bf16.mxu0 0
  %3005 = vmatmul.mubr.bf16.gmra.mrb[0].mxu0 %v2328
  %v3006 = vpop.f32.mrb[0].mxu0
  %v3007 = vadd.f32 0.0, %v3006
  %v3008 = vpop.f32.mrb[0].mxu0
  %v3009 = vadd.f32 0.0, %v3008
  %v3010 = vpop.f32.mrb[0].mxu0
  %v3011 = vadd.f32 0.0, %v3010
  %v3012 = vpop.f32.mrb[0].mxu0
  %v3013 = vadd.f32 0.0, %v3012
  %3014 = vmatprep.mubr.bf16.mxu0 0
  %3015 = vmatmul.mubr.bf16.gmra.mrb[0].mxu0 %v2331
  %v3016 = vpop.f32.mrb[0].mxu0
  %v3017 = vadd.f32 0.0, %v3016
  %v3018 = vpop.f32.mrb[0].mxu0
  %v3019 = vadd.f32 0.0, %v3018
  %v3020 = vpop.f32.mrb[0].mxu0
  %v3021 = vadd.f32 0.0, %v3020
  %v3022 = vpop.f32.mrb[0].mxu0
  %v3023 = vadd.f32 0.0, %v3022
  %3024 = vmatprep.mubr.bf16.mxu0 0
  %3025 = vmatmul.mubr.bf16.gmra.mrb[0].mxu0 %v2334
  %v3026 = vpop.f32.mrb[0].mxu0
  %v3027 = vadd.f32 0.0, %v3026
  %v3028 = vpop.f32.mrb[0].mxu0
  %v3029 = vadd.f32 0.0, %v3028
  %v3030 = vpop.f32.mrb[0].mxu0
  %v3031 = vadd.f32 0.0, %v3030
  %v3032 = vpop.f32.mrb[0].mxu0
  %v3033 = vadd.f32 0.0, %v3032
  %3034 = vmatprep.mubr.bf16.mxu0 0
  %3035 = vmatmul.mubr.bf16.gmra.mrb[0].mxu0 %v2493
  %v3036 = vpop.f32.mrb[0].mxu0
  %v3037 = vadd.f32 0.0, %v3036
  %v3038 = vpop.f32.mrb[0].mxu0
  %v3039 = vadd.f32 0.0, %v3038
  %v3040 = vpop.f32.mrb[0].mxu0
  %v3041 = vadd.f32 0.0, %v3040
  %v3042 = vpop.f32.mrb[0].mxu0
  %v3043 = vadd.f32 0.0, %v3042
  %3044 = vdwg.mxu0
  %3045 = vmatprep.subr.bf16.mxu0 %v2300
  %3046 = vmatpush1.bf16.msra.mxu0 %v2299
  %3047 = vmatprep.subr.bf16.mxu0 %v2302
  %3048 = vmatpush1.bf16.msra.mxu0 %v2301
  %3049 = vmatprep.subr.bf16.mxu0 %v2304
  %3050 = vmatpush1.bf16.msra.mxu0 %v2303
  %3051 = vmatprep.subr.bf16.mxu0 %v2306
  %3052 = vmatpush1.bf16.msra.mxu0 %v2305
  %3053 = vmatprep.subr.bf16.mxu0 %v2308
  %3054 = vmatpush1.bf16.msra.mxu0 %v2307
  %3055 = vmatprep.subr.bf16.mxu0 %v2340
  %3056 = vmatpush1.bf16.msra.mxu0 %v2337
  %3057 = vmatprep.subr.bf16.mxu0 0
  %3058 = vmatpush1.bf16.msra.mxu0 0
  %3059 = vmatprep.subr.bf16.mxu0 0
  %3060 = vmatpush1.bf16.msra.mxu0 0
  %3061 = vmatprep.subr.bf16.mxu0 0
  %3062 = vmatpush1.bf16.msra.mxu0 0
  %3063 = vmatprep.subr.bf16.mxu0 0
  %3064 = vmatpush1.bf16.msra.mxu0 0
  %3065 = vmatprep.subr.bf16.mxu0 0
  %3066 = vmatpush1.bf16.msra.mxu0 0
  %3067 = vmatprep.subr.bf16.mxu0 0
  %3068 = vmatpush1.bf16.msra.mxu0 0
  %3069 = vmatprep.subr.bf16.mxu0 0
  %3070 = vmatpush1.bf16.msra.mxu0 0
  %3071 = vmatprep.subr.bf16.mxu0 0
  %3072 = vmatpush1.bf16.msra.mxu0 0
  %3073 = vmatprep.subr.bf16.mxu0 0
  %3074 = vmatpush1.bf16.msra.mxu0 0
  %3075 = vmatprep.subr.bf16.mxu0 0
  %3076 = vmatpush1.bf16.msra.mxu0 0
  %3077 = vmatprep.mubr.bf16.mxu0 0
  %3078 = vmatmul.mubr.bf16.gmra.mrb[0].mxu0 %v2162
  %v3079 = vpop.f32.mrb[0].mxu0
  %v3080 = vadd.f32 %v2997, %v3079
  %v3081 = vpop.f32.mrb[0].mxu0
  %v3082 = vadd.f32 %v2999, %v3081
  %v3083 = vpop.f32.mrb[0].mxu0
  %v3084 = vadd.f32 %v3001, %v3083
  %v3085 = vpop.f32.mrb[0].mxu0
  %v3086 = vadd.f32 %v3003, %v3085
  %3087 = vmatprep.mubr.bf16.mxu0 0
  %3088 = vmatmul.mubr.bf16.gmra.mrb[0].mxu0 %v2165
  %v3089 = vpop.f32.mrb[0].mxu0
  %v3090 = vadd.f32 %v3007, %v3089
  %v3091 = vpop.f32.mrb[0].mxu0
  %v3092 = vadd.f32 %v3009, %v3091
  %v3093 = vpop.f32.mrb[0].mxu0
  %v3094 = vadd.f32 %v3011, %v3093
  %v3095 = vpop.f32.mrb[0].mxu0
  %v3096 = vadd.f32 %v3013, %v3095
  %3097 = vmatprep.mubr.bf16.mxu0 0
  %3098 = vmatmul.mubr.bf16.gmra.mrb[0].mxu0 %v2168
  %v3099 = vpop.f32.mrb[0].mxu0
  %v3100 = vadd.f32 %v3017, %v3099
  %v3101 = vpop.f32.mrb[0].mxu0
  %v3102 = vadd.f32 %v3019, %v3101
  %v3103 = vpop.f32.mrb[0].mxu0
  %v3104 = vadd.f32 %v3021, %v3103
  %v3105 = vpop.f32.mrb[0].mxu0
  %v3106 = vadd.f32 %v3023, %v3105
  %3107 = vmatprep.mubr.bf16.mxu0 0
  %3108 = vmatmul.mubr.bf16.gmra.mrb[0].mxu0 %v2171
  %v3109 = vpop.f32.mrb[0].mxu0
  %v3110 = vadd.f32 %v3027, %v3109
  %v3111 = vpop.f32.mrb[0].mxu0
  %v3112 = vadd.f32 %v3029, %v3111
  %v3113 = vpop.f32.mrb[0].mxu0
  %v3114 = vadd.f32 %v3031, %v3113
  %v3115 = vpop.f32.mrb[0].mxu0
  %v3116 = vadd.f32 %v3033, %v3115
  %3117 = vmatprep.mubr.bf16.mxu0 0
  %3118 = vmatmul.mubr.bf16.gmra.mrb[0].mxu0 %v2174
  %v3119 = vpop.f32.mrb[0].mxu0
  %v3120 = vadd.f32 %v3037, %v3119
  %v3121 = vpop.f32.mrb[0].mxu0
  %v3122 = vadd.f32 %v3039, %v3121
  %v3123 = vpop.f32.mrb[0].mxu0
  %v3124 = vadd.f32 %v3041, %v3123
  %v3125 = vpop.f32.mrb[0].mxu0
  %v3126 = vadd.f32 %v3043, %v3125
  %3127 = vdwg.mxu0
  %3128 = vmatprep.subr.bf16.mxu0 %v2471
  %3129 = vmatpush1.bf16.msra.mxu0 %v2470
  %3130 = vmatprep.subr.bf16.mxu0 %v2473
  %3131 = vmatpush1.bf16.msra.mxu0 %v2472
  %3132 = vmatprep.subr.bf16.mxu0 %v2475
  %3133 = vmatpush1.bf16.msra.mxu0 %v2474
  %3134 = vmatprep.subr.bf16.mxu0 %v2477
  %3135 = vmatpush1.bf16.msra.mxu0 %v2476
  %3136 = vmatprep.subr.bf16.mxu0 %v2479
  %3137 = vmatpush1.bf16.msra.mxu0 %v2478
  %3138 = vmatprep.subr.bf16.mxu0 %v2499
  %3139 = vmatpush1.bf16.msra.mxu0 %v2496
  %3140 = vmatprep.subr.bf16.mxu0 0
  %3141 = vmatpush1.bf16.msra.mxu0 0
  %3142 = vmatprep.subr.bf16.mxu0 0
  %3143 = vmatpush1.bf16.msra.mxu0 0
  %3144 = vmatprep.subr.bf16.mxu0 0
  %3145 = vmatpush1.bf16.msra.mxu0 0
  %3146 = vmatprep.subr.bf16.mxu0 0
  %3147 = vmatpush1.bf16.msra.mxu0 0
  %3148 = vmatprep.subr.bf16.mxu0 0
  %3149 = vmatpush1.bf16.msra.mxu0 0
  %3150 = vmatprep.subr.bf16.mxu0 0
  %3151 = vmatpush1.bf16.msra.mxu0 0
  %3152 = vmatprep.subr.bf16.mxu0 0
  %3153 = vmatpush1.bf16.msra.mxu0 0
  %3154 = vmatprep.subr.bf16.mxu0 0
  %3155 = vmatpush1.bf16.msra.mxu0 0
  %3156 = vmatprep.subr.bf16.mxu0 0
  %3157 = vmatpush1.bf16.msra.mxu0 0
  %3158 = vmatprep.subr.bf16.mxu0 0
  %3159 = vmatpush1.bf16.msra.mxu0 0
  %3160 = vmatprep.mubr.bf16.mxu0 0
  %3161 = vmatmul.mubr.bf16.gmra.mrb[0].mxu0 %v2165
  %v3162 = vpop.f32.mrb[0].mxu0
  %v3163 = vadd.f32 0.0, %v3162
  %v3164 = vpop.f32.mrb[0].mxu0
  %v3165 = vadd.f32 0.0, %v3164
  %v3166 = vpop.f32.mrb[0].mxu0
  %v3167 = vadd.f32 0.0, %v3166
  %v3168 = vpop.f32.mrb[0].mxu0
  %v3169 = vadd.f32 0.0, %v3168
  %3170 = vmatprep.mubr.bf16.mxu0 0
  %3171 = vmatmul.mubr.bf16.gmra.mrb[0].mxu0 %v2168
  %v3172 = vpop.f32.mrb[0].mxu0
  %v3173 = vadd.f32 0.0, %v3172
  %v3174 = vpop.f32.mrb[0].mxu0
  %v3175 = vadd.f32 0.0, %v3174
  %v3176 = vpop.f32.mrb[0].mxu0
  %v3177 = vadd.f32 0.0, %v3176
  %v3178 = vpop.f32.mrb[0].mxu0
  %v3179 = vadd.f32 0.0, %v3178
  %3180 = vmatprep.mubr.bf16.mxu0 0
  %3181 = vmatmul.mubr.bf16.gmra.mrb[0].mxu0 %v2171
  %v3182 = vpop.f32.mrb[0].mxu0
  %v3183 = vadd.f32 0.0, %v3182
  %v3184 = vpop.f32.mrb[0].mxu0
  %v3185 = vadd.f32 0.0, %v3184
  %v3186 = vpop.f32.mrb[0].mxu0
  %v3187 = vadd.f32 0.0, %v3186
  %v3188 = vpop.f32.mrb[0].mxu0
  %v3189 = vadd.f32 0.0, %v3188
  %3190 = vmatprep.mubr.bf16.mxu0 0
  %3191 = vmatmul.mubr.bf16.gmra.mrb[0].mxu0 %v2174
  %v3192 = vpop.f32.mrb[0].mxu0
  %v3193 = vadd.f32 0.0, %v3192
  %v3194 = vpop.f32.mrb[0].mxu0
  %v3195 = vadd.f32 0.0, %v3194
  %v3196 = vpop.f32.mrb[0].mxu0
  %v3197 = vadd.f32 0.0, %v3196
  %v3198 = vpop.f32.mrb[0].mxu0
  %v3199 = vadd.f32 0.0, %v3198
  %3200 = vmatprep.mubr.bf16.mxu0 0
  %3201 = vmatmul.mubr.bf16.gmra.mrb[0].mxu0 %v2672
  %v3202 = vpop.f32.mrb[0].mxu0
  %v3203 = vadd.f32 0.0, %v3202
  %v3204 = vpop.f32.mrb[0].mxu0
  %v3205 = vadd.f32 0.0, %v3204
  %v3206 = vpop.f32.mrb[0].mxu0
  %v3207 = vadd.f32 0.0, %v3206
  %v3208 = vpop.f32.mrb[0].mxu0
  %v3209 = vadd.f32 0.0, %v3208
  %3210 = vdwg.mxu0
  %v3211 = vadd.f32 %v3080, %v3163
  %v3212 = vadd.f32 %v3082, %v3165
  %v3213 = vadd.f32 %v3084, %v3167
  %v3214 = vadd.f32 %v3086, %v3169
  %v3215 = vadd.f32 %v3090, %v3173
  %v3216 = vadd.f32 %v3092, %v3175
  %v3217 = vadd.f32 %v3094, %v3177
  %v3218 = vadd.f32 %v3096, %v3179
  %v3219 = vadd.f32 %v3100, %v3183
  %v3220 = vadd.f32 %v3102, %v3185
  %v3221 = vadd.f32 %v3104, %v3187
  %v3222 = vadd.f32 %v3106, %v3189
  %v3223 = vadd.f32 %v3110, %v3193
  %v3224 = vadd.f32 %v3112, %v3195
  %v3225 = vadd.f32 %v3114, %v3197
  %v3226 = vadd.f32 %v3116, %v3199
  %v3227 = vadd.f32 %v3120, %v3203
  %v3228 = vadd.f32 %v3122, %v3205
  %v3229 = vadd.f32 %v3124, %v3207
  %v3230 = vadd.f32 %v3126, %v3209
  %3231 = vmatprep.subr.bf16.mxu0 %v2650
  %3232 = vmatpush1.bf16.msra.mxu0 %v2649
  %3233 = vmatprep.subr.bf16.mxu0 %v2652
  %3234 = vmatpush1.bf16.msra.mxu0 %v2651
  %3235 = vmatprep.subr.bf16.mxu0 %v2654
  %3236 = vmatpush1.bf16.msra.mxu0 %v2653
  %3237 = vmatprep.subr.bf16.mxu0 %v2656
  %3238 = vmatpush1.bf16.msra.mxu0 %v2655
  %3239 = vmatprep.subr.bf16.mxu0 %v2658
  %3240 = vmatpush1.bf16.msra.mxu0 %v2657
  %3241 = vmatprep.subr.bf16.mxu0 %v2678
  %3242 = vmatpush1.bf16.msra.mxu0 %v2675
  %3243 = vmatprep.subr.bf16.mxu0 0
  %3244 = vmatpush1.bf16.msra.mxu0 0
  %3245 = vmatprep.subr.bf16.mxu0 0
  %3246 = vmatpush1.bf16.msra.mxu0 0
  %3247 = vmatprep.subr.bf16.mxu0 0
  %3248 = vmatpush1.bf16.msra.mxu0 0
  %3249 = vmatprep.subr.bf16.mxu0 0
  %3250 = vmatpush1.bf16.msra.mxu0 0
  %3251 = vmatprep.subr.bf16.mxu0 0
  %3252 = vmatpush1.bf16.msra.mxu0 0
  %3253 = vmatprep.subr.bf16.mxu0 0
  %3254 = vmatpush1.bf16.msra.mxu0 0
  %3255 = vmatprep.subr.bf16.mxu0 0
  %3256 = vmatpush1.bf16.msra.mxu0 0
  %3257 = vmatprep.subr.bf16.mxu0 0
  %3258 = vmatpush1.bf16.msra.mxu0 0
  %3259 = vmatprep.subr.bf16.mxu0 0
  %3260 = vmatpush1.bf16.msra.mxu0 0
  %3261 = vmatprep.subr.bf16.mxu0 0
  %3262 = vmatpush1.bf16.msra.mxu0 0
  %3263 = vmatprep.mubr.bf16.mxu0 0
  %3264 = vmatmul.mubr.bf16.gmra.mrb[0].mxu0 %v2328
  %v3265 = vpop.f32.mrb[0].mxu0
  %v3266 = vadd.f32 0.0, %v3265
  %v3267 = vpop.f32.mrb[0].mxu0
  %v3268 = vadd.f32 0.0, %v3267
  %v3269 = vpop.f32.mrb[0].mxu0
  %v3270 = vadd.f32 0.0, %v3269
  %v3271 = vpop.f32.mrb[0].mxu0
  %v3272 = vadd.f32 0.0, %v3271
  %3273 = vmatprep.mubr.bf16.mxu0 0
  %3274 = vmatmul.mubr.bf16.gmra.mrb[0].mxu0 %v2331
  %v3275 = vpop.f32.mrb[0].mxu0
  %v3276 = vadd.f32 0.0, %v3275
  %v3277 = vpop.f32.mrb[0].mxu0
  %v3278 = vadd.f32 0.0, %v3277
  %v3279 = vpop.f32.mrb[0].mxu0
  %v3280 = vadd.f32 0.0, %v3279
  %v3281 = vpop.f32.mrb[0].mxu0
  %v3282 = vadd.f32 0.0, %v3281
  %3283 = vmatprep.mubr.bf16.mxu0 0
  %3284 = vmatmul.mubr.bf16.gmra.mrb[0].mxu0 %v2334
  %v3285 = vpop.f32.mrb[0].mxu0
  %v3286 = vadd.f32 0.0, %v3285
  %v3287 = vpop.f32.mrb[0].mxu0
  %v3288 = vadd.f32 0.0, %v3287
  %v3289 = vpop.f32.mrb[0].mxu0
  %v3290 = vadd.f32 0.0, %v3289
  %v3291 = vpop.f32.mrb[0].mxu0
  %v3292 = vadd.f32 0.0, %v3291
  %3293 = vmatprep.mubr.bf16.mxu0 0
  %3294 = vmatmul.mubr.bf16.gmra.mrb[0].mxu0 %v2493
  %v3295 = vpop.f32.mrb[0].mxu0
  %v3296 = vadd.f32 0.0, %v3295
  %v3297 = vpop.f32.mrb[0].mxu0
  %v3298 = vadd.f32 0.0, %v3297
  %v3299 = vpop.f32.mrb[0].mxu0
  %v3300 = vadd.f32 0.0, %v3299
  %v3301 = vpop.f32.mrb[0].mxu0
  %v3302 = vadd.f32 0.0, %v3301
  %3303 = vmatprep.mubr.bf16.mxu0 0
  %3304 = vmatmul.mubr.bf16.gmra.mrb[0].mxu0 %v2851
  %v3305 = vpop.f32.mrb[0].mxu0
  %v3306 = vadd.f32 0.0, %v3305
  %v3307 = vpop.f32.mrb[0].mxu0
  %v3308 = vadd.f32 0.0, %v3307
  %v3309 = vpop.f32.mrb[0].mxu0
  %v3310 = vadd.f32 0.0, %v3309
  %v3311 = vpop.f32.mrb[0].mxu0
  %v3312 = vadd.f32 0.0, %v3311
  %3313 = vdwg.mxu0
  %v3314 = vadd.f32 %v3211, %v3266
  %v3315 = vadd.f32 %v3212, %v3268
  %v3316 = vadd.f32 %v3213, %v3270
  %v3317 = vadd.f32 %v3214, %v3272
  %v3318 = vadd.f32 %v3215, %v3276
  %v3319 = vadd.f32 %v3216, %v3278
  %v3320 = vadd.f32 %v3217, %v3280
  %v3321 = vadd.f32 %v3218, %v3282
  %v3322 = vadd.f32 %v3219, %v3286
  %v3323 = vadd.f32 %v3220, %v3288
  %v3324 = vadd.f32 %v3221, %v3290
  %v3325 = vadd.f32 %v3222, %v3292
  %v3326 = vadd.f32 %v3223, %v3296
  %v3327 = vadd.f32 %v3224, %v3298
  %v3328 = vadd.f32 %v3225, %v3300
  %v3329 = vadd.f32 %v3226, %v3302
  %v3330 = vadd.f32 %v3227, %v3306
  %v3331 = vadd.f32 %v3228, %v3308
  %v3332 = vadd.f32 %v3229, %v3310
  %v3333 = vadd.f32 %v3230, %v3312
  %v3335 = vsel %vm2160, %v2081, 0
  %3337 = vmatprep.subr.bf16.mxu0 %v2829
  %3338 = vmatpush1.bf16.msra.mxu0 %v2828
  %3339 = vmatprep.subr.bf16.mxu0 %v2831
  %3340 = vmatpush1.bf16.msra.mxu0 %v2830
  %3341 = vmatprep.subr.bf16.mxu0 %v2833
  %3342 = vmatpush1.bf16.msra.mxu0 %v2832
  %3343 = vmatprep.subr.bf16.mxu0 %v2835
  %3344 = vmatpush1.bf16.msra.mxu0 %v2834
  %3345 = vmatprep.subr.bf16.mxu0 %v2837
  %3346 = vmatpush1.bf16.msra.mxu0 %v2836
  %3347 = vmatprep.subr.bf16.mxu0 %v2857
  %3348 = vmatpush1.bf16.msra.mxu0 %v2854
  %3349 = vmatprep.subr.bf16.mxu0 0
  %3350 = vmatpush1.bf16.msra.mxu0 0
  %3351 = vmatprep.subr.bf16.mxu0 0
  %3352 = vmatpush1.bf16.msra.mxu0 0
  %3353 = vmatprep.subr.bf16.mxu0 0
  %3354 = vmatpush1.bf16.msra.mxu0 0
  %3355 = vmatprep.subr.bf16.mxu0 0
  %3356 = vmatpush1.bf16.msra.mxu0 0
  %3357 = vmatprep.subr.bf16.mxu0 0
  %3358 = vmatpush1.bf16.msra.mxu0 0
  %3359 = vmatprep.subr.bf16.mxu0 0
  %3360 = vmatpush1.bf16.msra.mxu0 0
  %3361 = vmatprep.subr.bf16.mxu0 0
  %3362 = vmatpush1.bf16.msra.mxu0 0
  %3363 = vmatprep.subr.bf16.mxu0 0
  %3364 = vmatpush1.bf16.msra.mxu0 0
  %3365 = vmatprep.subr.bf16.mxu0 0
  %3366 = vmatpush1.bf16.msra.mxu0 0
  %3367 = vmatprep.subr.bf16.mxu0 0
  %3368 = vmatpush1.bf16.msra.mxu0 0
  %3369 = vmatprep.mubr.bf16.mxu0 0
  %3370 = vmatmul.mubr.bf16.gmra.mrb[0].mxu0 %v2168
  %v3371 = vpop.f32.mrb[0].mxu0
  %v3372 = vadd.f32 0.0, %v3371
  %v3373 = vpop.f32.mrb[0].mxu0
  %v3374 = vadd.f32 0.0, %v3373
  %v3375 = vpop.f32.mrb[0].mxu0
  %v3376 = vadd.f32 0.0, %v3375
  %v3377 = vpop.f32.mrb[0].mxu0
  %v3378 = vadd.f32 0.0, %v3377
  %3379 = vmatprep.mubr.bf16.mxu0 0
  %3380 = vmatmul.mubr.bf16.gmra.mrb[0].mxu0 %v2171
  %v3381 = vpop.f32.mrb[0].mxu0
  %v3382 = vadd.f32 0.0, %v3381
  %v3383 = vpop.f32.mrb[0].mxu0
  %v3384 = vadd.f32 0.0, %v3383
  %v3385 = vpop.f32.mrb[0].mxu0
  %v3386 = vadd.f32 0.0, %v3385
  %v3387 = vpop.f32.mrb[0].mxu0
  %v3388 = vadd.f32 0.0, %v3387
  %3389 = vmatprep.mubr.bf16.mxu0 0
  %3390 = vmatmul.mubr.bf16.gmra.mrb[0].mxu0 %v2174
  %v3391 = vpop.f32.mrb[0].mxu0
  %v3392 = vadd.f32 0.0, %v3391
  %v3393 = vpop.f32.mrb[0].mxu0
  %v3394 = vadd.f32 0.0, %v3393
  %v3395 = vpop.f32.mrb[0].mxu0
  %v3396 = vadd.f32 0.0, %v3395
  %v3397 = vpop.f32.mrb[0].mxu0
  %v3398 = vadd.f32 0.0, %v3397
  %3399 = vmatprep.mubr.bf16.mxu0 0
  %3400 = vmatmul.mubr.bf16.gmra.mrb[0].mxu0 %v2672
  %v3401 = vpop.f32.mrb[0].mxu0
  %v3402 = vadd.f32 0.0, %v3401
  %v3403 = vpop.f32.mrb[0].mxu0
  %v3404 = vadd.f32 0.0, %v3403
  %v3405 = vpop.f32.mrb[0].mxu0
  %v3406 = vadd.f32 0.0, %v3405
  %v3407 = vpop.f32.mrb[0].mxu0
  %v3408 = vadd.f32 0.0, %v3407
  %3409 = vmatprep.mubr.bf16.mxu0 0
  %3410 = vmatmul.mubr.bf16.gmra.mrb[0].mxu0 %v3335
  %v3411 = vpop.f32.mrb[0].mxu0
  %v3412 = vadd.f32 0.0, %v3411
  %v3413 = vpop.f32.mrb[0].mxu0
  %v3414 = vadd.f32 0.0, %v3413
  %v3415 = vpop.f32.mrb[0].mxu0
  %v3416 = vadd.f32 0.0, %v3415
  %v3417 = vpop.f32.mrb[0].mxu0
  %v3418 = vadd.f32 0.0, %v3417
  %3419 = vdwg.mxu0
  %v3420 = vadd.f32 %v3314, %v3372
  %v3421 = vadd.f32 %v3315, %v3374
  %v3422 = vadd.f32 %v3316, %v3376
  %v3423 = vadd.f32 %v3317, %v3378
  %v3424 = vadd.f32 %v3318, %v3382
  %v3425 = vadd.f32 %v3319, %v3384
  %v3426 = vadd.f32 %v3320, %v3386
  %v3427 = vadd.f32 %v3321, %v3388
  %v3428 = vadd.f32 %v3322, %v3392
  %v3429 = vadd.f32 %v3323, %v3394
  %v3430 = vadd.f32 %v3324, %v3396
  %v3431 = vadd.f32 %v3325, %v3398
  %v3432 = vadd.f32 %v3326, %v3402
  %v3433 = vadd.f32 %v3327, %v3404
  %v3434 = vadd.f32 %v3328, %v3406
  %v3435 = vadd.f32 %v3329, %v3408
  %v3436 = vadd.f32 %v3330, %v3412
  %v3437 = vadd.f32 %v3331, %v3414
  %v3438 = vadd.f32 %v3332, %v3416
  %v3439 = vadd.f32 %v3333, %v3418
  %v3440 = vmax.f32 %v2942, %v3420
  %v3441 = vmax.f32 %v2943, %v3421
  %v3442 = vmax.f32 %v2944, %v3422
  %v3443 = vmax.f32 %v2945, %v3423
  %v3444 = vmax.f32 %v2946, %v3424
  %v3445 = vmax.f32 %v2947, %v3425
  %v3446 = vmax.f32 %v2948, %v3426
  %v3447 = vmax.f32 %v2949, %v3427
  %v3448 = vmax.f32 %v2950, %v3428
  %v3449 = vmax.f32 %v2951, %v3429
  %v3450 = vmax.f32 %v2952, %v3430
  %v3451 = vmax.f32 %v2953, %v3431
  %v3452 = vmax.f32 %v2954, %v3432
  %v3453 = vmax.f32 %v2955, %v3433
  %v3454 = vmax.f32 %v2956, %v3434
  %v3455 = vmax.f32 %v2957, %v3435
  %v3456 = vmax.f32 %v2958, %v3436
  %v3457 = vmax.f32 %v2959, %v3437
  %v3458 = vmax.f32 %v2960, %v3438
  %v3459 = vmax.f32 %v2961, %v3439
  %3480 = vrot.lane.b32.xlu0 %v3440, 48
  %v3481 = vpop.permute.xlu0 %3480
  %3482 = vrot.lane.b32.xlu0 %v3441, 48
  %v3483 = vpop.permute.xlu0 %3482
  %3484 = vrot.lane.b32.xlu0 %v3442, 48
  %v3485 = vpop.permute.xlu0 %3484
  %3486 = vrot.lane.b32.xlu0 %v3443, 48
  %v3487 = vpop.permute.xlu0 %3486
  %3488 = vrot.lane.b32.xlu0 %v3444, 48
  %v3489 = vpop.permute.xlu0 %3488
  %3490 = vrot.lane.b32.xlu0 %v3445, 48
  %v3491 = vpop.permute.xlu0 %3490
  %3492 = vrot.lane.b32.xlu0 %v3446, 48
  %v3493 = vpop.permute.xlu0 %3492
  %3494 = vrot.lane.b32.xlu0 %v3447, 48
  %v3495 = vpop.permute.xlu0 %3494
  %3496 = vrot.lane.b32.xlu0 %v3448, 48
  %v3497 = vpop.permute.xlu0 %3496
  %3498 = vrot.lane.b32.xlu0 %v3449, 48
  %v3499 = vpop.permute.xlu0 %3498
  %3500 = vrot.lane.b32.xlu0 %v3450, 48
  %v3501 = vpop.permute.xlu0 %3500
  %3502 = vrot.lane.b32.xlu0 %v3451, 48
  %v3503 = vpop.permute.xlu0 %3502
  %3504 = vrot.lane.b32.xlu0 %v3452, 48
  %v3505 = vpop.permute.xlu0 %3504
  %3506 = vrot.lane.b32.xlu0 %v3453, 48
  %v3507 = vpop.permute.xlu0 %3506
  %3508 = vrot.lane.b32.xlu0 %v3454, 48
  %v3509 = vpop.permute.xlu0 %3508
  %3510 = vrot.lane.b32.xlu0 %v3455, 48
  %v3511 = vpop.permute.xlu0 %3510
  %3512 = vrot.lane.b32.xlu0 %v3456, 48
  %v3513 = vpop.permute.xlu0 %3512
  %3514 = vrot.lane.b32.xlu0 %v3457, 48
  %v3515 = vpop.permute.xlu0 %3514
  %3516 = vrot.lane.b32.xlu0 %v3458, 48
  %v3517 = vpop.permute.xlu0 %3516
  %3518 = vrot.lane.b32.xlu0 %v3459, 48
  %v3519 = vpop.permute.xlu0 %3518
  %vm3520 = vcmask 392192
  %v3521 = vsel %vm3520, %v3481, %v3483
  %v3522 = vsel %vm3520, %v3485, %v3487
  %v3523 = vsel %vm3520, %v3489, %v3491
  %v3524 = vsel %vm3520, %v3493, %v3495
  %v3525 = vsel %vm3520, %v3497, %v3499
  %v3526 = vsel %vm3520, %v3501, %v3503
  %v3527 = vsel %vm3520, %v3505, %v3507
  %v3528 = vsel %vm3520, %v3509, %v3511
  %v3529 = vsel %vm3520, %v3513, %v3515
  %v3530 = vsel %vm3520, %v3517, %v3519
  %v3541 = vmax.f32 %v3440, %v3521
  %v3542 = vmax.f32 %v3442, %v3522
  %v3543 = vmax.f32 %v3444, %v3523
  %v3544 = vmax.f32 %v3446, %v3524
  %v3545 = vmax.f32 %v3448, %v3525
  %v3546 = vmax.f32 %v3450, %v3526
  %v3547 = vmax.f32 %v3452, %v3527
  %v3548 = vmax.f32 %v3454, %v3528
  %v3549 = vmax.f32 %v3456, %v3529
  %v3550 = vmax.f32 %v3458, %v3530
  %v3551 = vld [vmem:[%s6] sm:$0x1]
  %v3553 = vlaneseq
  %v3554 = vshrl.u32 %v3553, 7
  %v3555 = vsub.s32 0, %v3554
  %v3556 = vrot.slane %v3551, %v3555
  %v3558 = vadd.f32 %v3541, %v3556
  %v3559 = vadd.f32 %v3542, %v3556
  %v3560 = vadd.f32 %v3543, %v3556
  %v3561 = vadd.f32 %v3544, %v3556
  %v3562 = vadd.f32 %v3545, %v3556
  %v3563 = vadd.f32 %v3546, %v3556
  %v3564 = vadd.f32 %v3547, %v3556
  %v3565 = vadd.f32 %v3548, %v3556
  %v3566 = vadd.f32 %v3549, %v3556
  %v3567 = vadd.f32 %v3550, %v3556
  %v3568 = vmax.f32 %v3558, 0.0
  %v3569 = vmax.f32 %v3559, 0.0
  %v3570 = vmax.f32 %v3560, 0.0
  %v3571 = vmax.f32 %v3561, 0.0
  %v3572 = vmax.f32 %v3562, 0.0
  %v3573 = vmax.f32 %v3563, 0.0
  %v3574 = vmax.f32 %v3564, 0.0
  %v3575 = vmax.f32 %v3565, 0.0
  %v3576 = vmax.f32 %v3566, 0.0
  %v3577 = vmax.f32 %v3567, 0.0
  %v3578 = vpack.c.bf16 %v3569, %v3568
  %v3579 = vpack.c.bf16 %v3571, %v3570
  %v3580 = vpack.c.bf16 %v3573, %v3572
  %v3581 = vpack.c.bf16 %v3575, %v3574
  %v3582 = vpack.c.bf16 %v3577, %v3576
  %v3583 = vld [vmem:[%s3] sm:$0xf]
  %v3584 = vld [vmem:[%s3 + $0x4] sm:$0xf]
  %v3585 = vld [vmem:[%s3 + $0x8] sm:$0xf]
  %v3586 = vld [vmem:[%s3 + $0xc] sm:$0xf]
  %v3587 = vld [vmem:[%s3 + $0x10] sm:$0xf]
  %v3588 = vld [vmem:[%s3 + $0x14] sm:$0xf]
  %v3589 = vld [vmem:[%s3 + $0x18] sm:$0xf]
  %v3590 = vld [vmem:[%s3 + $0x1c] sm:$0xf]
  %v3591 = vld [vmem:[%s3 + $0x20] sm:$0xf]
  %v3592 = vld [vmem:[%s3 + $0x24] sm:$0xf]
  %s3593 = scalar_lea.vmem %s3, 40
  %v3594 = vld [vmem:[%s3593] sm:$0xf]
  %v3595 = vld [vmem:[%s3593 + $0x4] sm:$0xf]
  %v3596 = vld [vmem:[%s3593 + $0x8] sm:$0xf]
  %v3597 = vld [vmem:[%s3593 + $0xc] sm:$0xf]
  %v3598 = vld [vmem:[%s3593 + $0x10] sm:$0xf]
  %v3599 = vld [vmem:[%s3593 + $0x14] sm:$0xf]
  %v3600 = vld [vmem:[%s3593 + $0x18] sm:$0xf]
  %v3601 = vld [vmem:[%s3593 + $0x1c] sm:$0xf]
  %v3602 = vld [vmem:[%s3593 + $0x20] sm:$0xf]
  %v3603 = vld [vmem:[%s3593 + $0x24] sm:$0xf]
  %v3614 = vunpack.c.l.b16 %v3594
  %v3615 = vunpack.c.l.b16 %v3595
  %v3616 = vunpack.c.l.b16 %v3596
  %v3617 = vunpack.c.l.b16 %v3597
  %v3618 = vunpack.c.l.b16 %v3598
  %v3619 = vunpack.c.l.b16 %v3599
  %v3620 = vunpack.c.l.b16 %v3600
  %v3621 = vunpack.c.l.b16 %v3601
  %v3622 = vunpack.c.l.b16 %v3602
  %v3623 = vunpack.c.l.b16 %v3603
  %v3624 = vpack.c.b16 %v3615, %v3614
  %v3625 = vpack.c.b16 %v3617, %v3616
  %v3626 = vpack.c.b16 %v3619, %v3618
  %v3627 = vpack.c.b16 %v3621, %v3620
  %v3628 = vpack.c.b16 %v3623, %v3622
  %vm3634 = vcmask 654336
  %v3636 = vsel %vm3634, %v3579, 0
  %3638 = vmatprep.subr.bf16.mxu0 0
  %3639 = vmatpush1.bf16.msra.mxu0 %v3624
  %3640 = vmatprep.subr.bf16.mxu0 0
  %3641 = vmatpush1.bf16.msra.mxu0 %v3625
  %3642 = vmatprep.subr.bf16.mxu0 0
  %3643 = vmatpush1.bf16.msra.mxu0 %v3626
  %3644 = vmatprep.subr.bf16.mxu0 0
  %3645 = vmatpush1.bf16.msra.mxu0 %v3627
  %3646 = vmatprep.subr.bf16.mxu0 0
  %3647 = vmatpush1.bf16.msra.mxu0 %v3628
  %3648 = vmatprep.subr.bf16.mxu0 0
  %3649 = vmatpush1.bf16.msra.mxu0 0
  %3650 = vmatprep.subr.bf16.mxu0 0
  %3651 = vmatpush1.bf16.msra.mxu0 0
  %3652 = vmatprep.subr.bf16.mxu0 0
  %3653 = vmatpush1.bf16.msra.mxu0 0
  %3654 = vmatprep.subr.bf16.mxu0 0
  %3655 = vmatpush1.bf16.msra.mxu0 0
  %3656 = vmatprep.subr.bf16.mxu0 0
  %3657 = vmatpush1.bf16.msra.mxu0 0
  %3658 = vmatprep.subr.bf16.mxu0 0
  %3659 = vmatpush1.bf16.msra.mxu0 0
  %3660 = vmatprep.subr.bf16.mxu0 0
  %3661 = vmatpush1.bf16.msra.mxu0 0
  %3662 = vmatprep.subr.bf16.mxu0 0
  %3663 = vmatpush1.bf16.msra.mxu0 0
  %3664 = vmatprep.subr.bf16.mxu0 0
  %3665 = vmatpush1.bf16.msra.mxu0 0
  %3666 = vmatprep.subr.bf16.mxu0 0
  %3667 = vmatpush1.bf16.msra.mxu0 0
  %3668 = vmatprep.subr.bf16.mxu0 0
  %3669 = vmatpush1.bf16.msra.mxu0 0
  %3670 = vmatprep.mubr.bf16.mxu0 0
  %3671 = vmatmul.mubr.bf16.gmra.mrb[0].mxu0 %v3636
  %v3672 = vpop.f32.mrb[0].mxu0
  %v3673 = vadd.f32 0.0, %v3672
  %v3674 = vpop.f32.mrb[0].mxu0
  %v3675 = vpop.f32.mrb[0].mxu0
  %v3676 = vadd.f32 0.0, %v3675
  %v3677 = vpop.f32.mrb[0].mxu0
  %3678 = vdwg.mxu0
  %v3689 = vunpack.c.l.b16 %v3583
  %v3690 = vunpack.c.l.b16 %v3584
  %v3691 = vunpack.c.l.b16 %v3585
  %v3692 = vunpack.c.l.b16 %v3586
  %v3693 = vunpack.c.l.b16 %v3587
  %v3694 = vunpack.c.l.b16 %v3588
  %v3695 = vunpack.c.l.b16 %v3589
  %v3696 = vunpack.c.l.b16 %v3590
  %v3697 = vunpack.c.l.b16 %v3591
  %v3698 = vunpack.c.l.b16 %v3592
  %v3699 = vpack.c.b16 %v3690, %v3689
  %v3700 = vpack.c.b16 %v3692, %v3691
  %v3701 = vpack.c.b16 %v3694, %v3693
  %v3702 = vpack.c.b16 %v3696, %v3695
  %v3703 = vpack.c.b16 %v3698, %v3697
  %v3710 = vsel %vm3634, %v3578, 0
  %3712 = vmatprep.subr.bf16.mxu0 0
  %3713 = vmatpush1.bf16.msra.mxu0 %v3699
  %3714 = vmatprep.subr.bf16.mxu0 0
  %3715 = vmatpush1.bf16.msra.mxu0 %v3700
  %3716 = vmatprep.subr.bf16.mxu0 0
  %3717 = vmatpush1.bf16.msra.mxu0 %v3701
  %3718 = vmatprep.subr.bf16.mxu0 0
  %3719 = vmatpush1.bf16.msra.mxu0 %v3702
  %3720 = vmatprep.subr.bf16.mxu0 0
  %3721 = vmatpush1.bf16.msra.mxu0 %v3703
  %3722 = vmatprep.subr.bf16.mxu0 0
  %3723 = vmatpush1.bf16.msra.mxu0 0
  %3724 = vmatprep.subr.bf16.mxu0 0
  %3725 = vmatpush1.bf16.msra.mxu0 0
  %3726 = vmatprep.subr.bf16.mxu0 0
  %3727 = vmatpush1.bf16.msra.mxu0 0
  %3728 = vmatprep.subr.bf16.mxu0 0
  %3729 = vmatpush1.bf16.msra.mxu0 0
  %3730 = vmatprep.subr.bf16.mxu0 0
  %3731 = vmatpush1.bf16.msra.mxu0 0
  %3732 = vmatprep.subr.bf16.mxu0 0
  %3733 = vmatpush1.bf16.msra.mxu0 0
  %3734 = vmatprep.subr.bf16.mxu0 0
  %3735 = vmatpush1.bf16.msra.mxu0 0
  %3736 = vmatprep.subr.bf16.mxu0 0
  %3737 = vmatpush1.bf16.msra.mxu0 0
  %3738 = vmatprep.subr.bf16.mxu0 0
  %3739 = vmatpush1.bf16.msra.mxu0 0
  %3740 = vmatprep.subr.bf16.mxu0 0
  %3741 = vmatpush1.bf16.msra.mxu0 0
  %3742 = vmatprep.subr.bf16.mxu0 0
  %3743 = vmatpush1.bf16.msra.mxu0 0
  %3744 = vmatprep.mubr.bf16.mxu0 0
  %3745 = vmatmul.mubr.bf16.gmra.mrb[0].mxu0 %v3710
  %v3746 = vpop.f32.mrb[0].mxu0
  %v3747 = vadd.f32 %v3673, %v3746
  %v3748 = vpop.f32.mrb[0].mxu0
  %v3749 = vpop.f32.mrb[0].mxu0
  %v3750 = vadd.f32 %v3676, %v3749
  %v3751 = vpop.f32.mrb[0].mxu0
  %3752 = vdwg.mxu0
  %s3753 = scalar_lea.vmem %s3, 80
  %v3754 = vld [vmem:[%s3753] sm:$0xf]
  %v3755 = vld [vmem:[%s3753 + $0x4] sm:$0xf]
  %v3756 = vld [vmem:[%s3753 + $0x8] sm:$0xf]
  %v3757 = vld [vmem:[%s3753 + $0xc] sm:$0xf]
  %v3758 = vld [vmem:[%s3753 + $0x10] sm:$0xf]
  %v3759 = vld [vmem:[%s3753 + $0x14] sm:$0xf]
  %v3760 = vld [vmem:[%s3753 + $0x18] sm:$0xf]
  %v3761 = vld [vmem:[%s3753 + $0x1c] sm:$0xf]
  %v3762 = vld [vmem:[%s3753 + $0x20] sm:$0xf]
  %v3763 = vld [vmem:[%s3753 + $0x24] sm:$0xf]
  %v3774 = vunpack.c.l.b16 %v3754
  %v3775 = vunpack.c.l.b16 %v3755
  %v3776 = vunpack.c.l.b16 %v3756
  %v3777 = vunpack.c.l.b16 %v3757
  %v3778 = vunpack.c.l.b16 %v3758
  %v3779 = vunpack.c.l.b16 %v3759
  %v3780 = vunpack.c.l.b16 %v3760
  %v3781 = vunpack.c.l.b16 %v3761
  %v3782 = vunpack.c.l.b16 %v3762
  %v3783 = vunpack.c.l.b16 %v3763
  %v3784 = vpack.c.b16 %v3775, %v3774
  %v3785 = vpack.c.b16 %v3777, %v3776
  %v3786 = vpack.c.b16 %v3779, %v3778
  %v3787 = vpack.c.b16 %v3781, %v3780
  %v3788 = vpack.c.b16 %v3783, %v3782
  %v3795 = vsel %vm3634, %v3580, 0
  %3797 = vmatprep.subr.bf16.mxu0 0
  %3798 = vmatpush1.bf16.msra.mxu0 %v3784
  %3799 = vmatprep.subr.bf16.mxu0 0
  %3800 = vmatpush1.bf16.msra.mxu0 %v3785
  %3801 = vmatprep.subr.bf16.mxu0 0
  %3802 = vmatpush1.bf16.msra.mxu0 %v3786
  %3803 = vmatprep.subr.bf16.mxu0 0
  %3804 = vmatpush1.bf16.msra.mxu0 %v3787
  %3805 = vmatprep.subr.bf16.mxu0 0
  %3806 = vmatpush1.bf16.msra.mxu0 %v3788
  %3807 = vmatprep.subr.bf16.mxu0 0
  %3808 = vmatpush1.bf16.msra.mxu0 0
  %3809 = vmatprep.subr.bf16.mxu0 0
  %3810 = vmatpush1.bf16.msra.mxu0 0
  %3811 = vmatprep.subr.bf16.mxu0 0
  %3812 = vmatpush1.bf16.msra.mxu0 0
  %3813 = vmatprep.subr.bf16.mxu0 0
  %3814 = vmatpush1.bf16.msra.mxu0 0
  %3815 = vmatprep.subr.bf16.mxu0 0
  %3816 = vmatpush1.bf16.msra.mxu0 0
  %3817 = vmatprep.subr.bf16.mxu0 0
  %3818 = vmatpush1.bf16.msra.mxu0 0
  %3819 = vmatprep.subr.bf16.mxu0 0
  %3820 = vmatpush1.bf16.msra.mxu0 0
  %3821 = vmatprep.subr.bf16.mxu0 0
  %3822 = vmatpush1.bf16.msra.mxu0 0
  %3823 = vmatprep.subr.bf16.mxu0 0
  %3824 = vmatpush1.bf16.msra.mxu0 0
  %3825 = vmatprep.subr.bf16.mxu0 0
  %3826 = vmatpush1.bf16.msra.mxu0 0
  %3827 = vmatprep.subr.bf16.mxu0 0
  %3828 = vmatpush1.bf16.msra.mxu0 0
  %3829 = vmatprep.mubr.bf16.mxu0 0
  %3830 = vmatmul.mubr.bf16.gmra.mrb[0].mxu0 %v3795
  %v3831 = vpop.f32.mrb[0].mxu0
  %v3832 = vadd.f32 0.0, %v3831
  %v3833 = vpop.f32.mrb[0].mxu0
  %v3834 = vpop.f32.mrb[0].mxu0
  %v3835 = vadd.f32 0.0, %v3834
  %v3836 = vpop.f32.mrb[0].mxu0
  %3837 = vdwg.mxu0
  %v3838 = vadd.f32 %v3747, %v3832
  %v3839 = vadd.f32 %v3750, %v3835
  %s3840 = scalar_lea.vmem %s3, 120
  %v3841 = vld [vmem:[%s3840] sm:$0xf]
  %v3842 = vld [vmem:[%s3840 + $0x4] sm:$0xf]
  %v3843 = vld [vmem:[%s3840 + $0x8] sm:$0xf]
  %v3844 = vld [vmem:[%s3840 + $0xc] sm:$0xf]
  %v3845 = vld [vmem:[%s3840 + $0x10] sm:$0xf]
  %v3846 = vld [vmem:[%s3840 + $0x14] sm:$0xf]
  %v3847 = vld [vmem:[%s3840 + $0x18] sm:$0xf]
  %v3848 = vld [vmem:[%s3840 + $0x1c] sm:$0xf]
  %v3849 = vld [vmem:[%s3840 + $0x20] sm:$0xf]
  %v3850 = vld [vmem:[%s3840 + $0x24] sm:$0xf]
  %v3861 = vunpack.c.l.b16 %v3841
  %v3862 = vunpack.c.l.b16 %v3842
  %v3863 = vunpack.c.l.b16 %v3843
  %v3864 = vunpack.c.l.b16 %v3844
  %v3865 = vunpack.c.l.b16 %v3845
  %v3866 = vunpack.c.l.b16 %v3846
  %v3867 = vunpack.c.l.b16 %v3847
  %v3868 = vunpack.c.l.b16 %v3848
  %v3869 = vunpack.c.l.b16 %v3849
  %v3870 = vunpack.c.l.b16 %v3850
  %v3871 = vpack.c.b16 %v3862, %v3861
  %v3872 = vpack.c.b16 %v3864, %v3863
  %v3873 = vpack.c.b16 %v3866, %v3865
  %v3874 = vpack.c.b16 %v3868, %v3867
  %v3875 = vpack.c.b16 %v3870, %v3869
  %v3882 = vsel %vm3634, %v3581, 0
  %3884 = vmatprep.subr.bf16.mxu0 0
  %3885 = vmatpush1.bf16.msra.mxu0 %v3871
  %3886 = vmatprep.subr.bf16.mxu0 0
  %3887 = vmatpush1.bf16.msra.mxu0 %v3872
  %3888 = vmatprep.subr.bf16.mxu0 0
  %3889 = vmatpush1.bf16.msra.mxu0 %v3873
  %3890 = vmatprep.subr.bf16.mxu0 0
  %3891 = vmatpush1.bf16.msra.mxu0 %v3874
  %3892 = vmatprep.subr.bf16.mxu0 0
  %3893 = vmatpush1.bf16.msra.mxu0 %v3875
  %3894 = vmatprep.subr.bf16.mxu0 0
  %3895 = vmatpush1.bf16.msra.mxu0 0
  %3896 = vmatprep.subr.bf16.mxu0 0
  %3897 = vmatpush1.bf16.msra.mxu0 0
  %3898 = vmatprep.subr.bf16.mxu0 0
  %3899 = vmatpush1.bf16.msra.mxu0 0
  %3900 = vmatprep.subr.bf16.mxu0 0
  %3901 = vmatpush1.bf16.msra.mxu0 0
  %3902 = vmatprep.subr.bf16.mxu0 0
  %3903 = vmatpush1.bf16.msra.mxu0 0
  %3904 = vmatprep.subr.bf16.mxu0 0
  %3905 = vmatpush1.bf16.msra.mxu0 0
  %3906 = vmatprep.subr.bf16.mxu0 0
  %3907 = vmatpush1.bf16.msra.mxu0 0
  %3908 = vmatprep.subr.bf16.mxu0 0
  %3909 = vmatpush1.bf16.msra.mxu0 0
  %3910 = vmatprep.subr.bf16.mxu0 0
  %3911 = vmatpush1.bf16.msra.mxu0 0
  %3912 = vmatprep.subr.bf16.mxu0 0
  %3913 = vmatpush1.bf16.msra.mxu0 0
  %3914 = vmatprep.subr.bf16.mxu0 0
  %3915 = vmatpush1.bf16.msra.mxu0 0
  %3916 = vmatprep.mubr.bf16.mxu0 0
  %3917 = vmatmul.mubr.bf16.gmra.mrb[0].mxu0 %v3882
  %v3918 = vpop.f32.mrb[0].mxu0
  %v3919 = vadd.f32 0.0, %v3918
  %v3920 = vpop.f32.mrb[0].mxu0
  %v3921 = vpop.f32.mrb[0].mxu0
  %v3922 = vadd.f32 0.0, %v3921
  %v3923 = vpop.f32.mrb[0].mxu0
  %3924 = vdwg.mxu0
  %v3925 = vadd.f32 %v3838, %v3919
  %v3926 = vadd.f32 %v3839, %v3922
  %s3927 = scalar_lea.vmem %s3, 160
  %v3928 = vld [vmem:[%s3927] sm:$0xf]
  %v3929 = vld [vmem:[%s3927 + $0x4] sm:$0xf]
  %v3930 = vld [vmem:[%s3927 + $0x8] sm:$0xf]
  %v3931 = vld [vmem:[%s3927 + $0xc] sm:$0xf]
  %v3932 = vld [vmem:[%s3927 + $0x10] sm:$0xf]
  %v3933 = vld [vmem:[%s3927 + $0x14] sm:$0xf]
  %v3934 = vld [vmem:[%s3927 + $0x18] sm:$0xf]
  %v3935 = vld [vmem:[%s3927 + $0x1c] sm:$0xf]
  %v3936 = vld [vmem:[%s3927 + $0x20] sm:$0xf]
  %v3937 = vld [vmem:[%s3927 + $0x24] sm:$0xf]
  %v3948 = vunpack.c.l.b16 %v3928
  %v3949 = vunpack.c.l.b16 %v3929
  %v3950 = vunpack.c.l.b16 %v3930
  %v3951 = vunpack.c.l.b16 %v3931
  %v3952 = vunpack.c.l.b16 %v3932
  %v3953 = vunpack.c.l.b16 %v3933
  %v3954 = vunpack.c.l.b16 %v3934
  %v3955 = vunpack.c.l.b16 %v3935
  %v3956 = vunpack.c.l.b16 %v3936
  %v3957 = vunpack.c.l.b16 %v3937
  %v3958 = vpack.c.b16 %v3949, %v3948
  %v3959 = vpack.c.b16 %v3951, %v3950
  %v3960 = vpack.c.b16 %v3953, %v3952
  %v3961 = vpack.c.b16 %v3955, %v3954
  %v3962 = vpack.c.b16 %v3957, %v3956
  %v3969 = vsel %vm3634, %v3582, 0
  %3971 = vmatprep.subr.bf16.mxu0 0
  %3972 = vmatpush1.bf16.msra.mxu0 %v3958
  %3973 = vmatprep.subr.bf16.mxu0 0
  %3974 = vmatpush1.bf16.msra.mxu0 %v3959
  %3975 = vmatprep.subr.bf16.mxu0 0
  %3976 = vmatpush1.bf16.msra.mxu0 %v3960
  %3977 = vmatprep.subr.bf16.mxu0 0
  %3978 = vmatpush1.bf16.msra.mxu0 %v3961
  %3979 = vmatprep.subr.bf16.mxu0 0
  %3980 = vmatpush1.bf16.msra.mxu0 %v3962
  %3981 = vmatprep.subr.bf16.mxu0 0
  %3982 = vmatpush1.bf16.msra.mxu0 0
  %3983 = vmatprep.subr.bf16.mxu0 0
  %3984 = vmatpush1.bf16.msra.mxu0 0
  %3985 = vmatprep.subr.bf16.mxu0 0
  %3986 = vmatpush1.bf16.msra.mxu0 0
  %3987 = vmatprep.subr.bf16.mxu0 0
  %3988 = vmatpush1.bf16.msra.mxu0 0
  %3989 = vmatprep.subr.bf16.mxu0 0
  %3990 = vmatpush1.bf16.msra.mxu0 0
  %3991 = vmatprep.subr.bf16.mxu0 0
  %3992 = vmatpush1.bf16.msra.mxu0 0
  %3993 = vmatprep.subr.bf16.mxu0 0
  %3994 = vmatpush1.bf16.msra.mxu0 0
  %3995 = vmatprep.subr.bf16.mxu0 0
  %3996 = vmatpush1.bf16.msra.mxu0 0
  %3997 = vmatprep.subr.bf16.mxu0 0
  %3998 = vmatpush1.bf16.msra.mxu0 0
  %3999 = vmatprep.subr.bf16.mxu0 0
  %4000 = vmatpush1.bf16.msra.mxu0 0
  %4001 = vmatprep.subr.bf16.mxu0 0
  %4002 = vmatpush1.bf16.msra.mxu0 0
  %4003 = vmatprep.mubr.bf16.mxu0 0
  %4004 = vmatmul.mubr.bf16.gmra.mrb[0].mxu0 %v3969
  %v4005 = vpop.f32.mrb[0].mxu0
  %v4006 = vadd.f32 0.0, %v4005
  %v4007 = vpop.f32.mrb[0].mxu0
  %v4008 = vpop.f32.mrb[0].mxu0
  %v4009 = vadd.f32 0.0, %v4008
  %v4010 = vpop.f32.mrb[0].mxu0
  %4011 = vdwg.mxu0
  %v4012 = vadd.f32 %v3925, %v4006
  %v4013 = vadd.f32 %v3926, %v4009
  %v4014 = vld [vmem:[%s7] sm:$0x1]
  %v4016 = vlaneseq
  %v4017 = vshrl.u32 %v4016, 7
  %v4018 = vsub.s32 0, %v4017
  %v4019 = vrot.slane %v4014, %v4018
  %v4021 = vadd.f32 %v4012, %v4019
  %v4022 = vadd.f32 %v4013, %v4019
  %v4023 = vmax.f32 %v4021, 0.0
  %v4024 = vmax.f32 %v4022, 0.0
  %v4025 = vpack.c.bf16 %v4024, %v4023
  %v4026 = vld [vmem:[%s4] sm:$0xf]
  %v4027 = vld [vmem:[%s4 + $0x4] sm:$0xf]
  %v4028 = vld [vmem:[%s4 + $0x8] sm:$0xf]
  %v4029 = vld [vmem:[%s4 + $0xc] sm:$0xf]
  %v4030 = vld [vmem:[%s4 + $0x10] sm:$0xf]
  %v4031 = vld [vmem:[%s4 + $0x14] sm:$0xf]
  %v4032 = vld [vmem:[%s4 + $0x18] sm:$0xf]
  %v4033 = vld [vmem:[%s4 + $0x1c] sm:$0xf]
  %v4034 = vld [vmem:[%s4 + $0x20] sm:$0xf]
  %v4035 = vld [vmem:[%s4 + $0x24] sm:$0xf]
  %v4036 = vld [vmem:[%s4 + $0x28] sm:$0xf]
  %v4037 = vld [vmem:[%s4 + $0x2c] sm:$0xf]
  %v4038 = vld [vmem:[%s4 + $0x30] sm:$0xf]
  %v4039 = vld [vmem:[%s4 + $0x34] sm:$0xf]
  %v4040 = vld [vmem:[%s4 + $0x38] sm:$0xf]
  %v4041 = vld [vmem:[%s8] sm:$0x1]
  %v4043 = vlaneseq
  %v4044 = vshrl.u32 %v4043, 7
  %v4045 = vsub.s32 0, %v4044
  %v4046 = vrot.slane %v4041, %v4045
  %v4063 = vunpack.c.l.b16 %v4026
  %v4064 = vunpack.c.l.b16 %v4027
  %v4065 = vunpack.c.l.b16 %v4028
  %v4066 = vunpack.c.l.b16 %v4029
  %v4067 = vunpack.c.l.b16 %v4030
  %v4068 = vunpack.c.l.b16 %v4031
  %v4069 = vunpack.c.l.b16 %v4032
  %v4070 = vunpack.c.l.b16 %v4033
  %v4071 = vunpack.c.l.b16 %v4034
  %v4072 = vunpack.c.l.b16 %v4035
  %v4073 = vunpack.c.l.b16 %v4036
  %v4074 = vunpack.c.l.b16 %v4037
  %v4075 = vunpack.c.l.b16 %v4038
  %v4076 = vunpack.c.l.b16 %v4039
  %v4077 = vunpack.c.l.b16 %v4040
  %v4078 = vpack.c.b16 %v4064, %v4063
  %v4079 = vpack.c.b16 %v4066, %v4065
  %v4080 = vpack.c.b16 %v4068, %v4067
  %v4081 = vpack.c.b16 %v4070, %v4069
  %v4082 = vpack.c.b16 %v4072, %v4071
  %v4083 = vpack.c.b16 %v4074, %v4073
  %v4084 = vpack.c.b16 %v4076, %v4075
  %v4085 = vpack.c.b16 %v4077, %v4077
  %vm4093 = vcmask 982016
  %v4095 = vsel %vm4093, %v4025, 0
  %vm4097 = vcmask 1043456
  %v4099 = vsel %vm4097, %v4085, 0
  %4101 = vmatprep.subr.bf16.mxu0 0
  %4102 = vmatpush1.bf16.msra.mxu0 %v4078
  %4103 = vmatprep.subr.bf16.mxu0 0
  %4104 = vmatpush1.bf16.msra.mxu0 %v4079
  %4105 = vmatprep.subr.bf16.mxu0 0
  %4106 = vmatpush1.bf16.msra.mxu0 %v4080
  %4107 = vmatprep.subr.bf16.mxu0 0
  %4108 = vmatpush1.bf16.msra.mxu0 %v4081
  %4109 = vmatprep.subr.bf16.mxu0 0
  %4110 = vmatpush1.bf16.msra.mxu0 %v4082
  %4111 = vmatprep.subr.bf16.mxu0 0
  %4112 = vmatpush1.bf16.msra.mxu0 %v4083
  %4113 = vmatprep.subr.bf16.mxu0 0
  %4114 = vmatpush1.bf16.msra.mxu0 %v4084
  %4115 = vmatprep.subr.bf16.mxu0 0
  %4116 = vmatpush1.bf16.msra.mxu0 %v4099
  %4117 = vmatprep.subr.bf16.mxu0 0
  %4118 = vmatpush1.bf16.msra.mxu0 0
  %4119 = vmatprep.subr.bf16.mxu0 0
  %4120 = vmatpush1.bf16.msra.mxu0 0
  %4121 = vmatprep.subr.bf16.mxu0 0
  %4122 = vmatpush1.bf16.msra.mxu0 0
  %4123 = vmatprep.subr.bf16.mxu0 0
  %4124 = vmatpush1.bf16.msra.mxu0 0
  %4125 = vmatprep.subr.bf16.mxu0 0
  %4126 = vmatpush1.bf16.msra.mxu0 0
  %4127 = vmatprep.subr.bf16.mxu0 0
  %4128 = vmatpush1.bf16.msra.mxu0 0
  %4129 = vmatprep.subr.bf16.mxu0 0
  %4130 = vmatpush1.bf16.msra.mxu0 0
  %4131 = vmatprep.subr.bf16.mxu0 0
  %4132 = vmatpush1.bf16.msra.mxu0 0
  %4133 = vmatprep.mubr.bf16.mxu0 0
  %4134 = vmatmul.mubr.bf16.gmra.mrb[0].mxu0 %v4095
  %v4135 = vpop.f32.mrb[0].mxu0
  %v4136 = vadd.f32 %v4046, %v4135
  %v4137 = vpop.f32.mrb[0].mxu0
  %v4138 = vpop.f32.mrb[0].mxu0
  %v4139 = vadd.f32 %v4046, %v4138
  %v4140 = vpop.f32.mrb[0].mxu0
  %4141 = vdwg.mxu0
  %vm4142 = vcmask 80896
  %v4143 = vsel %vm4142, %v4136, -inf
  %4144 = vmax.xlane.f32.xlu0 %v4143
  %v4145 = vpop.xlane.xlu0 %4144
  %v4146 = vsel %vm4142, %v4139, -inf
  %4147 = vmax.xlane.f32.xlu0 %v4146
  %v4148 = vpop.xlane.xlu0 %4147
  %v4149 = vsub.f32 %v4136, %v4145
  %v4150 = vsub.f32 %v4139, %v4148
  %v4151 = vmul.f32 %v4149, 1.442695
  %v4152 = vpow.pop %v4151
  %v4153 = vmul.f32 %v4150, 1.442695
  %v4154 = vpow.pop %v4153
  %v4155 = vsel %vm4142, %v4152, 0.0
  %4156 = vadd.xlane.f32.xlu0 %v4155
  %v4157 = vpop.xlane.xlu0 %4156
  %v4158 = vsel %vm4142, %v4154, 0.0
  %4159 = vadd.xlane.f32.xlu0 %v4158
  %v4160 = vpop.xlane.xlu0 %4159
  %v4161 = vrcp.pop %v4157
  %v4162 = vrcp.pop %v4160
  %v4163 = vmul.f32 %v4152, %v4161
  %v4164 = vmul.f32 %v4154, %v4162
  %4165 = vst.msk [vmem:[%s9] sm:$0xff] %vm4142, %v4163
  %4166 = vst.msk [vmem:[%s9 + $0x8] sm:$0xff] %vm4142, %v4164
  // Predicated region
  $region38: #{lenet5_forward.1} parent=0 // pred_check
    _
  $region39: #{lenet5_forward.1} parent=0 // pred_check_branch
    %4168 = sbr.rel (0) target = $region41
  $region40: #{lenet5_forward.1} parent=0 // pred_region
    _
  $region41: #{lenet5_forward.1} parent=0 // pred_fallthru
    _
  // Predicated region
  $region42: #{lenet5_forward.1} parent=0 // pred_check
    _
  $region43: #{lenet5_forward.1} parent=0 // pred_check_branch
    %4170 = sbr.rel (0) target = $region45
  $region44: #{lenet5_forward.1} parent=0 // pred_region
    _
  $region45: #{lenet5_forward.1} parent=0 // pred_fallthru
    _

</llo_original>
